<compile_context>
chip_gen: v7x
topology: tpu7x:2x2x1
jax: 0.10.0
libtpu: 0.0.40
codegen_flags: <defaults>
</compile_context>

<pallas_src>
import functools

import jax
import jax.numpy as jnp
from jax import lax
from jax.experimental import pallas as pl


# ------------------------------ Fused kernel -------------------------------- #

def _fused_attn_kernel(x_ref, wq_ref, bq_ref, wk_ref, bk_ref, wv_ref, bv_ref,
                       wo_ref, bo_ref, o_ref, *, num_heads):
    """Whole batch resident in VMEM, single invocation.

    x_ref:            (N, B, C) f32   native pix2seq layout (seq, batch, dim)
    wq/wk/wv_ref:     (C, C)    bf16  projection weights (softmax scale folded into wq)
    bq/bk/bv_ref:     (1, C)    f32
    wo_ref:           (H, hd, C) bf16 out_proj weight pre-split per head
    bo_ref:           (1, C)    f32
    o_ref:            (N, B, C) f32
    """
    N, B, C = x_ref.shape
    hd = C // num_heads

    x_all = x_ref[...]                                   # (N, B, C) f32
    wq = wq_ref[...]
    wk = wk_ref[...]
    wv = wv_ref[...]

    for b in range(B):                                   # B is tiny & static -> unrolled
        xb = x_all[:, b, :].astype(jnp.bfloat16)         # (N, C)

        # Full-C projection matmuls (bf16 MXU inputs, f32 accumulation); the
        # softmax scale is already folded into wq/bq at parameter-prep time,
        # so there is no per-call scale multiply and no 3C-wide lane slicing.
        q = (jnp.dot(xb, wq, preferred_element_type=jnp.float32)
             + bq_ref[...]).astype(jnp.bfloat16)         # (N, C)
        k = (jnp.dot(xb, wk, preferred_element_type=jnp.float32)
             + bk_ref[...]).astype(jnp.bfloat16)
        v = (jnp.dot(xb, wv, preferred_element_type=jnp.float32)
             + bv_ref[...]).astype(jnp.bfloat16)

        acc = jnp.zeros((N, C), jnp.float32)             # out-proj accumulator (vregs)
        # TODO(synk): for long sequences replace this dense (N, N) path with
        # flash-style KV tiling (online softmax over an "arbitrary" KV axis).
        for h in range(num_heads):                       # static unroll over heads
            sl = slice(h * hd, (h + 1) * hd)
            qh, kh, vh = q[:, sl], k[:, sl], v[:, sl]    # (N, hd) bf16

            # q @ k^T: contract last dims, no explicit transpose.
            s = lax.dot_general(qh, kh, (((1,), (1,)), ((), ())),
                                preferred_element_type=jnp.float32)   # (N, N) f32
            s = s - jnp.max(s, axis=-1, keepdims=True)
            p = jnp.exp(s)
            p = p * pl.reciprocal(jnp.sum(p, axis=-1, keepdims=True))  # exact recip
            oh = jnp.dot(p.astype(jnp.bfloat16), vh,
                         preferred_element_type=jnp.float32)           # (N, hd)

            # Fused out-projection accumulation: no o_acc scratch, no masked
            # 8-of-128-lane scratch writes.
            acc = acc + jnp.dot(oh.astype(jnp.bfloat16), wo_ref[h],
                                preferred_element_type=jnp.float32)    # (N, C)

        o_ref[:, b, :] = (acc + bo_ref[...]).astype(o_ref.dtype)


# --------------------------- Parameter preparation --------------------------- #

def prepare_params(params, num_heads):
    """One-time, parameter-prep-time transform of the torch-style parameters.

    params["qkv_w"]: (C, 3C) == torch qkv.weight.T ;  params["qkv_b"]: (3C,)
    params["out_w"]: (C, C)  == torch out_proj.weight.T ; params["out_b"]: (C,)
    """
    C = params["out_w"].shape[0]
    hd = C // num_heads
    scale = hd ** (-0.5)
    qkv_w = params["qkv_w"]
    qkv_b = params["qkv_b"]
    return {
        "wq": (qkv_w[:, 0:C] * scale).astype(jnp.bfloat16),
        "wk": qkv_w[:, C:2 * C].astype(jnp.bfloat16),
        "wv": qkv_w[:, 2 * C:3 * C].astype(jnp.bfloat16),
        "bq": (qkv_b[0:C] * scale).reshape(1, C).astype(jnp.float32),
        "bk": qkv_b[C:2 * C].reshape(1, C).astype(jnp.float32),
        "bv": qkv_b[2 * C:3 * C].reshape(1, C).astype(jnp.float32),
        "wo": params["out_w"].reshape(num_heads, hd, C).astype(jnp.bfloat16),
        "bo": params["out_b"].reshape(1, C).astype(jnp.float32),
    }


# ------------------------------ Forward pass -------------------------------- #

def attention_forward(x, prepared, num_heads, pre_kv=None, attn_mask=None):
    """Mirrors Attention.forward in training mode. x: (N, B, C) f32."""
    if pre_kv is not None or attn_mask is not None:
        # TODO(synk): eval-mode KV-cache concat (pre_kv) and attn_mask masking
        # are not on the training-mode path; fail loudly instead of silently
        # computing the wrong result.
        raise NotImplementedError("pre_kv / attn_mask paths are not implemented")

    N, B, C = x.shape
    kernel = functools.partial(_fused_attn_kernel, num_heads=num_heads)

    # No grid: single invocation, every operand is a full-array VMEM block
    # (last two dims equal the array dims, so the (8,128) rule is satisfied).
    # No wrapper transposes and no pipelining machinery.
    out = pl.pallas_call(
        kernel,
        out_shape=jax.ShapeDtypeStruct((N, B, C), x.dtype),
    )(x,
      prepared["wq"], prepared["bq"],
      prepared["wk"], prepared["bk"],
      prepared["wv"], prepared["bv"],
      prepared["wo"], prepared["bo"])

    return out, pre_kv


# ------------------------------ Reference (JAX) ------------------------------ #

def attention_reference(x, params, num_heads):
    N, B, C = x.shape
    hd = C // num_heads
    scale = hd ** (-0.5)
    qkv = x.reshape(N * B, C) @ params["qkv_w"] + params["qkv_b"]
    qkv = jnp.transpose(qkv.reshape(N, B, 3, num_heads, hd), (2, 1, 3, 0, 4))
    q, k, v = qkv[0], qkv[1], qkv[2]
    attn = jnp.einsum("bhnd,bhmd->bhnm", q, k) * scale
    attn = jax.nn.softmax(attn, axis=-1)
    o = jnp.einsum("bhnm,bhmd->bhnd", attn, v)
    o = jnp.transpose(o, (2, 0, 1, 3)).reshape(N * B, C)
    out = o @ params["out_w"] + params["out_b"]
    return out.reshape(N, B, C)


# ----------------------------------- Main ------------------------------------ #

if __name__ == "__main__":
    N, B, C, H = 8, 2, 64, 8  # seq, batch, dim, num_heads (head_dim = 8)

    key = jax.random.PRNGKey(0)
    kx, kw1, kb1, kw2, kb2 = jax.random.split(key, 5)

    x = jax.random.normal(kx, (N, B, C), dtype=jnp.float32)
    # Weights stored as (Cin, Cout), i.e. torch_weight.T; semantics identical.
    params = {
        "qkv_w": 0.02 * jax.random.normal(kw1, (C, 3 * C), dtype=jnp.float32),
        "qkv_b": 0.02 * jax.random.normal(kb1, (3 * C,), dtype=jnp.float32),
        "out_w": 0.02 * jax.random.normal(kw2, (C, C), dtype=jnp.float32),
        "out_b": 0.02 * jax.random.normal(kb2, (C,), dtype=jnp.float32),
    }

    prepared = prepare_params(params, H)
    out, pre_kv = attention_forward(x, prepared, H)
    out = jax.block_until_ready(out)

    ref = attention_reference(x, params, H)
    assert out.shape == (N, B, C)
    max_err = float(jnp.max(jnp.abs(out - ref)))
    # bf16 MXU inputs => compare with a bf16-level tolerance.
    assert jnp.allclose(out, ref, atol=2e-2, rtol=2e-2), \
        f"mismatch vs reference (max abs err = {max_err})"
    assert pre_kv is None

    print("KERNEL_OK")
</pallas_src>

<mosaic_0001>
module attributes {stable_mosaic.version = 11 : i64} {
  func.func @_fused_attn_kernel(%arg0: memref<8x2x64xf32, #tpu.memory_space<vmem>>, %arg1: memref<64x64xbf16, #tpu.memory_space<vmem>>, %arg2: memref<1x64xf32, #tpu.memory_space<vmem>>, %arg3: memref<64x64xbf16, #tpu.memory_space<vmem>>, %arg4: memref<1x64xf32, #tpu.memory_space<vmem>>, %arg5: memref<64x64xbf16, #tpu.memory_space<vmem>>, %arg6: memref<1x64xf32, #tpu.memory_space<vmem>>, %arg7: memref<8x8x64xbf16, #tpu.memory_space<vmem>>, %arg8: memref<1x64xf32, #tpu.memory_space<vmem>>, %arg9: memref<8x2x64xf32, #tpu.memory_space<vmem>>) attributes {dimension_semantics = [], scalar_prefetch = 0 : i64, scratch_operands = 0 : i64, tpu.core_type = #tpu.core_type<tc>} {
    %c0 = arith.constant 0 : index
    %c0_0 = arith.constant 0 : index
    %c0_1 = arith.constant 0 : index
    %0 = vector.load %arg0[%c0, %c0_0, %c0_1] : memref<8x2x64xf32, #tpu.memory_space<vmem>>, vector<8x2x64xf32>
    %c0_2 = arith.constant 0 : index
    %c0_3 = arith.constant 0 : index
    %1 = vector.load %arg1[%c0_2, %c0_3] : memref<64x64xbf16, #tpu.memory_space<vmem>>, vector<64x64xbf16>
    %c0_4 = arith.constant 0 : index
    %c0_5 = arith.constant 0 : index
    %2 = vector.load %arg3[%c0_4, %c0_5] : memref<64x64xbf16, #tpu.memory_space<vmem>>, vector<64x64xbf16>
    %c0_6 = arith.constant 0 : index
    %c0_7 = arith.constant 0 : index
    %3 = vector.load %arg5[%c0_6, %c0_7] : memref<64x64xbf16, #tpu.memory_space<vmem>>, vector<64x64xbf16>
    %4 = vector.extract_strided_slice %0 {offsets = [0, 0, 0], sizes = [8, 1, 64], strides = [1, 1, 1]} : vector<8x2x64xf32> to vector<8x1x64xf32>
    %5 = vector.shape_cast %4 : vector<8x1x64xf32> to vector<8x64xf32>
    %6 = arith.truncf %5 : vector<8x64xf32> to vector<8x64xbf16>
    %cst = arith.constant dense<0.000000e+00> : vector<8x64xf32>
    %7 = tpu.matmul %6, %1, %cst {dimension_numbers = #tpu.dot_dimension_numbers<[1], [0], [0], [1], [0, 0, 1, 1], [], []>} : vector<8x64xbf16>, vector<64x64xbf16>, vector<8x64xf32> -> vector<8x64xf32>
    %c0_8 = arith.constant 0 : index
    %c0_9 = arith.constant 0 : index
    %8 = vector.load %arg2[%c0_8, %c0_9] : memref<1x64xf32, #tpu.memory_space<vmem>>, vector<1x64xf32>
    %9 = vector.broadcast %8 : vector<1x64xf32> to vector<8x64xf32>
    %10 = arith.addf %7, %9 : vector<8x64xf32>
    %11 = arith.truncf %10 : vector<8x64xf32> to vector<8x64xbf16>
    %cst_10 = arith.constant dense<0.000000e+00> : vector<8x64xf32>
    %12 = tpu.matmul %6, %2, %cst_10 {dimension_numbers = #tpu.dot_dimension_numbers<[1], [0], [0], [1], [0, 0, 1, 1], [], []>} : vector<8x64xbf16>, vector<64x64xbf16>, vector<8x64xf32> -> vector<8x64xf32>
    %c0_11 = arith.constant 0 : index
    %c0_12 = arith.constant 0 : index
    %13 = vector.load %arg4[%c0_11, %c0_12] : memref<1x64xf32, #tpu.memory_space<vmem>>, vector<1x64xf32>
    %14 = vector.broadcast %13 : vector<1x64xf32> to vector<8x64xf32>
    %15 = arith.addf %12, %14 : vector<8x64xf32>
    %16 = arith.truncf %15 : vector<8x64xf32> to vector<8x64xbf16>
    %cst_13 = arith.constant dense<0.000000e+00> : vector<8x64xf32>
    %17 = tpu.matmul %6, %3, %cst_13 {dimension_numbers = #tpu.dot_dimension_numbers<[1], [0], [0], [1], [0, 0, 1, 1], [], []>} : vector<8x64xbf16>, vector<64x64xbf16>, vector<8x64xf32> -> vector<8x64xf32>
    %c0_14 = arith.constant 0 : index
    %c0_15 = arith.constant 0 : index
    %18 = vector.load %arg6[%c0_14, %c0_15] : memref<1x64xf32, #tpu.memory_space<vmem>>, vector<1x64xf32>
    %19 = vector.broadcast %18 : vector<1x64xf32> to vector<8x64xf32>
    %20 = arith.addf %17, %19 : vector<8x64xf32>
    %21 = arith.truncf %20 : vector<8x64xf32> to vector<8x64xbf16>
    %cst_16 = arith.constant 0.000000e+00 : f32
    %22 = vector.broadcast %cst_16 : f32 to vector<8x64xf32>
    %23 = vector.extract_strided_slice %11 {offsets = [0, 0], sizes = [8, 8], strides = [1, 1]} : vector<8x64xbf16> to vector<8x8xbf16>
    %24 = vector.extract_strided_slice %16 {offsets = [0, 0], sizes = [8, 8], strides = [1, 1]} : vector<8x64xbf16> to vector<8x8xbf16>
    %25 = vector.extract_strided_slice %21 {offsets = [0, 0], sizes = [8, 8], strides = [1, 1]} : vector<8x64xbf16> to vector<8x8xbf16>
    %cst_17 = arith.constant dense<0.000000e+00> : vector<8x8xf32>
    %26 = tpu.matmul %23, %24, %cst_17 {dimension_numbers = #tpu.dot_dimension_numbers<[1], [1], [0], [0], [0, 0, 1, 0], [], []>} : vector<8x8xbf16>, vector<8x8xbf16>, vector<8x8xf32> -> vector<8x8xf32>
    %cst_18 = arith.constant dense<0xFF800000> : vector<8xf32>
    %27 = vector.multi_reduction <maximumf>, %26, %cst_18 [1] : vector<8x8xf32> to vector<8xf32>
    %28 = vector.shape_cast %27 : vector<8xf32> to vector<8x1xf32>
    %29 = vector.broadcast %28 : vector<8x1xf32> to vector<8x8xf32>
    %30 = arith.subf %26, %29 : vector<8x8xf32>
    %31 = math.exp %30 : vector<8x8xf32>
    %cst_19 = arith.constant dense<0.000000e+00> : vector<8xf32>
    %32 = vector.multi_reduction <add>, %31, %cst_19 [1] : vector<8x8xf32> to vector<8xf32>
    %33 = vector.shape_cast %32 : vector<8xf32> to vector<8x1xf32>
    %34 = tpu.reciprocal %33 : vector<8x1xf32> -> vector<8x1xf32>
    %35 = vector.broadcast %34 : vector<8x1xf32> to vector<8x8xf32>
    %36 = arith.mulf %31, %35 : vector<8x8xf32>
    %37 = arith.truncf %36 : vector<8x8xf32> to vector<8x8xbf16>
    %cst_20 = arith.constant dense<0.000000e+00> : vector<8x8xf32>
    %38 = tpu.matmul %37, %25, %cst_20 {dimension_numbers = #tpu.dot_dimension_numbers<[1], [0], [0], [1], [0, 0, 1, 1], [], []>} : vector<8x8xbf16>, vector<8x8xbf16>, vector<8x8xf32> -> vector<8x8xf32>
    %39 = arith.truncf %38 : vector<8x8xf32> to vector<8x8xbf16>
    %c0_21 = arith.constant 0 : index
    %c0_22 = arith.constant 0 : index
    %c0_23 = arith.constant 0 : index
    %40 = vector.load %arg7[%c0_21, %c0_22, %c0_23] : memref<8x8x64xbf16, #tpu.memory_space<vmem>>, vector<1x8x64xbf16>
    %41 = vector.shape_cast %40 : vector<1x8x64xbf16> to vector<8x64xbf16>
    %cst_24 = arith.constant dense<0.000000e+00> : vector<8x64xf32>
    %42 = tpu.matmul %39, %41, %cst_24 {dimension_numbers = #tpu.dot_dimension_numbers<[1], [0], [0], [1], [0, 0, 1, 1], [], []>} : vector<8x8xbf16>, vector<8x64xbf16>, vector<8x64xf32> -> vector<8x64xf32>
    %43 = arith.addf %22, %42 : vector<8x64xf32>
    %44 = vector.extract_strided_slice %11 {offsets = [0, 8], sizes = [8, 8], strides = [1, 1]} : vector<8x64xbf16> to vector<8x8xbf16>
    %45 = vector.extract_strided_slice %16 {offsets = [0, 8], sizes = [8, 8], strides = [1, 1]} : vector<8x64xbf16> to vector<8x8xbf16>
    %46 = vector.extract_strided_slice %21 {offsets = [0, 8], sizes = [8, 8], strides = [1, 1]} : vector<8x64xbf16> to vector<8x8xbf16>
    %cst_25 = arith.constant dense<0.000000e+00> : vector<8x8xf32>
    %47 = tpu.matmul %44, %45, %cst_25 {dimension_numbers = #tpu.dot_dimension_numbers<[1], [1], [0], [0], [0, 0, 1, 0], [], []>} : vector<8x8xbf16>, vector<8x8xbf16>, vector<8x8xf32> -> vector<8x8xf32>
    %cst_26 = arith.constant dense<0xFF800000> : vector<8xf32>
    %48 = vector.multi_reduction <maximumf>, %47, %cst_26 [1] : vector<8x8xf32> to vector<8xf32>
    %49 = vector.shape_cast %48 : vector<8xf32> to vector<8x1xf32>
    %50 = vector.broadcast %49 : vector<8x1xf32> to vector<8x8xf32>
    %51 = arith.subf %47, %50 : vector<8x8xf32>
    %52 = math.exp %51 : vector<8x8xf32>
    %cst_27 = arith.constant dense<0.000000e+00> : vector<8xf32>
    %53 = vector.multi_reduction <add>, %52, %cst_27 [1] : vector<8x8xf32> to vector<8xf32>
    %54 = vector.shape_cast %53 : vector<8xf32> to vector<8x1xf32>
    %55 = tpu.reciprocal %54 : vector<8x1xf32> -> vector<8x1xf32>
    %56 = vector.broadcast %55 : vector<8x1xf32> to vector<8x8xf32>
    %57 = arith.mulf %52, %56 : vector<8x8xf32>
    %58 = arith.truncf %57 : vector<8x8xf32> to vector<8x8xbf16>
    %cst_28 = arith.constant dense<0.000000e+00> : vector<8x8xf32>
    %59 = tpu.matmul %58, %46, %cst_28 {dimension_numbers = #tpu.dot_dimension_numbers<[1], [0], [0], [1], [0, 0, 1, 1], [], []>} : vector<8x8xbf16>, vector<8x8xbf16>, vector<8x8xf32> -> vector<8x8xf32>
    %60 = arith.truncf %59 : vector<8x8xf32> to vector<8x8xbf16>
    %c1 = arith.constant 1 : index
    %c0_29 = arith.constant 0 : index
    %c0_30 = arith.constant 0 : index
    %61 = vector.load %arg7[%c1, %c0_29, %c0_30] : memref<8x8x64xbf16, #tpu.memory_space<vmem>>, vector<1x8x64xbf16>
    %62 = vector.shape_cast %61 : vector<1x8x64xbf16> to vector<8x64xbf16>
    %cst_31 = arith.constant dense<0.000000e+00> : vector<8x64xf32>
    %63 = tpu.matmul %60, %62, %cst_31 {dimension_numbers = #tpu.dot_dimension_numbers<[1], [0], [0], [1], [0, 0, 1, 1], [], []>} : vector<8x8xbf16>, vector<8x64xbf16>, vector<8x64xf32> -> vector<8x64xf32>
    %64 = arith.addf %43, %63 : vector<8x64xf32>
    %65 = vector.extract_strided_slice %11 {offsets = [0, 16], sizes = [8, 8], strides = [1, 1]} : vector<8x64xbf16> to vector<8x8xbf16>
    %66 = vector.extract_strided_slice %16 {offsets = [0, 16], sizes = [8, 8], strides = [1, 1]} : vector<8x64xbf16> to vector<8x8xbf16>
    %67 = vector.extract_strided_slice %21 {offsets = [0, 16], sizes = [8, 8], strides = [1, 1]} : vector<8x64xbf16> to vector<8x8xbf16>
    %cst_32 = arith.constant dense<0.000000e+00> : vector<8x8xf32>
    %68 = tpu.matmul %65, %66, %cst_32 {dimension_numbers = #tpu.dot_dimension_numbers<[1], [1], [0], [0], [0, 0, 1, 0], [], []>} : vector<8x8xbf16>, vector<8x8xbf16>, vector<8x8xf32> -> vector<8x8xf32>
    %cst_33 = arith.constant dense<0xFF800000> : vector<8xf32>
    %69 = vector.multi_reduction <maximumf>, %68, %cst_33 [1] : vector<8x8xf32> to vector<8xf32>
    %70 = vector.shape_cast %69 : vector<8xf32> to vector<8x1xf32>
    %71 = vector.broadcast %70 : vector<8x1xf32> to vector<8x8xf32>
    %72 = arith.subf %68, %71 : vector<8x8xf32>
    %73 = math.exp %72 : vector<8x8xf32>
    %cst_34 = arith.constant dense<0.000000e+00> : vector<8xf32>
    %74 = vector.multi_reduction <add>, %73, %cst_34 [1] : vector<8x8xf32> to vector<8xf32>
    %75 = vector.shape_cast %74 : vector<8xf32> to vector<8x1xf32>
    %76 = tpu.reciprocal %75 : vector<8x1xf32> -> vector<8x1xf32>
    %77 = vector.broadcast %76 : vector<8x1xf32> to vector<8x8xf32>
    %78 = arith.mulf %73, %77 : vector<8x8xf32>
    %79 = arith.truncf %78 : vector<8x8xf32> to vector<8x8xbf16>
    %cst_35 = arith.constant dense<0.000000e+00> : vector<8x8xf32>
    %80 = tpu.matmul %79, %67, %cst_35 {dimension_numbers = #tpu.dot_dimension_numbers<[1], [0], [0], [1], [0, 0, 1, 1], [], []>} : vector<8x8xbf16>, vector<8x8xbf16>, vector<8x8xf32> -> vector<8x8xf32>
    %81 = arith.truncf %80 : vector<8x8xf32> to vector<8x8xbf16>
    %c2 = arith.constant 2 : index
    %c0_36 = arith.constant 0 : index
    %c0_37 = arith.constant 0 : index
    %82 = vector.load %arg7[%c2, %c0_36, %c0_37] : memref<8x8x64xbf16, #tpu.memory_space<vmem>>, vector<1x8x64xbf16>
    %83 = vector.shape_cast %82 : vector<1x8x64xbf16> to vector<8x64xbf16>
    %cst_38 = arith.constant dense<0.000000e+00> : vector<8x64xf32>
    %84 = tpu.matmul %81, %83, %cst_38 {dimension_numbers = #tpu.dot_dimension_numbers<[1], [0], [0], [1], [0, 0, 1, 1], [], []>} : vector<8x8xbf16>, vector<8x64xbf16>, vector<8x64xf32> -> vector<8x64xf32>
    %85 = arith.addf %64, %84 : vector<8x64xf32>
    %86 = vector.extract_strided_slice %11 {offsets = [0, 24], sizes = [8, 8], strides = [1, 1]} : vector<8x64xbf16> to vector<8x8xbf16>
    %87 = vector.extract_strided_slice %16 {offsets = [0, 24], sizes = [8, 8], strides = [1, 1]} : vector<8x64xbf16> to vector<8x8xbf16>
    %88 = vector.extract_strided_slice %21 {offsets = [0, 24], sizes = [8, 8], strides = [1, 1]} : vector<8x64xbf16> to vector<8x8xbf16>
    %cst_39 = arith.constant dense<0.000000e+00> : vector<8x8xf32>
    %89 = tpu.matmul %86, %87, %cst_39 {dimension_numbers = #tpu.dot_dimension_numbers<[1], [1], [0], [0], [0, 0, 1, 0], [], []>} : vector<8x8xbf16>, vector<8x8xbf16>, vector<8x8xf32> -> vector<8x8xf32>
    %cst_40 = arith.constant dense<0xFF800000> : vector<8xf32>
    %90 = vector.multi_reduction <maximumf>, %89, %cst_40 [1] : vector<8x8xf32> to vector<8xf32>
    %91 = vector.shape_cast %90 : vector<8xf32> to vector<8x1xf32>
    %92 = vector.broadcast %91 : vector<8x1xf32> to vector<8x8xf32>
    %93 = arith.subf %89, %92 : vector<8x8xf32>
    %94 = math.exp %93 : vector<8x8xf32>
    %cst_41 = arith.constant dense<0.000000e+00> : vector<8xf32>
    %95 = vector.multi_reduction <add>, %94, %cst_41 [1] : vector<8x8xf32> to vector<8xf32>
    %96 = vector.shape_cast %95 : vector<8xf32> to vector<8x1xf32>
    %97 = tpu.reciprocal %96 : vector<8x1xf32> -> vector<8x1xf32>
    %98 = vector.broadcast %97 : vector<8x1xf32> to vector<8x8xf32>
    %99 = arith.mulf %94, %98 : vector<8x8xf32>
    %100 = arith.truncf %99 : vector<8x8xf32> to vector<8x8xbf16>
    %cst_42 = arith.constant dense<0.000000e+00> : vector<8x8xf32>
    %101 = tpu.matmul %100, %88, %cst_42 {dimension_numbers = #tpu.dot_dimension_numbers<[1], [0], [0], [1], [0, 0, 1, 1], [], []>} : vector<8x8xbf16>, vector<8x8xbf16>, vector<8x8xf32> -> vector<8x8xf32>
    %102 = arith.truncf %101 : vector<8x8xf32> to vector<8x8xbf16>
    %c3 = arith.constant 3 : index
    %c0_43 = arith.constant 0 : index
    %c0_44 = arith.constant 0 : index
    %103 = vector.load %arg7[%c3, %c0_43, %c0_44] : memref<8x8x64xbf16, #tpu.memory_space<vmem>>, vector<1x8x64xbf16>
    %104 = vector.shape_cast %103 : vector<1x8x64xbf16> to vector<8x64xbf16>
    %cst_45 = arith.constant dense<0.000000e+00> : vector<8x64xf32>
    %105 = tpu.matmul %102, %104, %cst_45 {dimension_numbers = #tpu.dot_dimension_numbers<[1], [0], [0], [1], [0, 0, 1, 1], [], []>} : vector<8x8xbf16>, vector<8x64xbf16>, vector<8x64xf32> -> vector<8x64xf32>
    %106 = arith.addf %85, %105 : vector<8x64xf32>
    %107 = vector.extract_strided_slice %11 {offsets = [0, 32], sizes = [8, 8], strides = [1, 1]} : vector<8x64xbf16> to vector<8x8xbf16>
    %108 = vector.extract_strided_slice %16 {offsets = [0, 32], sizes = [8, 8], strides = [1, 1]} : vector<8x64xbf16> to vector<8x8xbf16>
    %109 = vector.extract_strided_slice %21 {offsets = [0, 32], sizes = [8, 8], strides = [1, 1]} : vector<8x64xbf16> to vector<8x8xbf16>
    %cst_46 = arith.constant dense<0.000000e+00> : vector<8x8xf32>
    %110 = tpu.matmul %107, %108, %cst_46 {dimension_numbers = #tpu.dot_dimension_numbers<[1], [1], [0], [0], [0, 0, 1, 0], [], []>} : vector<8x8xbf16>, vector<8x8xbf16>, vector<8x8xf32> -> vector<8x8xf32>
    %cst_47 = arith.constant dense<0xFF800000> : vector<8xf32>
    %111 = vector.multi_reduction <maximumf>, %110, %cst_47 [1] : vector<8x8xf32> to vector<8xf32>
    %112 = vector.shape_cast %111 : vector<8xf32> to vector<8x1xf32>
    %113 = vector.broadcast %112 : vector<8x1xf32> to vector<8x8xf32>
    %114 = arith.subf %110, %113 : vector<8x8xf32>
    %115 = math.exp %114 : vector<8x8xf32>
    %cst_48 = arith.constant dense<0.000000e+00> : vector<8xf32>
    %116 = vector.multi_reduction <add>, %115, %cst_48 [1] : vector<8x8xf32> to vector<8xf32>
    %117 = vector.shape_cast %116 : vector<8xf32> to vector<8x1xf32>
    %118 = tpu.reciprocal %117 : vector<8x1xf32> -> vector<8x1xf32>
    %119 = vector.broadcast %118 : vector<8x1xf32> to vector<8x8xf32>
    %120 = arith.mulf %115, %119 : vector<8x8xf32>
    %121 = arith.truncf %120 : vector<8x8xf32> to vector<8x8xbf16>
    %cst_49 = arith.constant dense<0.000000e+00> : vector<8x8xf32>
    %122 = tpu.matmul %121, %109, %cst_49 {dimension_numbers = #tpu.dot_dimension_numbers<[1], [0], [0], [1], [0, 0, 1, 1], [], []>} : vector<8x8xbf16>, vector<8x8xbf16>, vector<8x8xf32> -> vector<8x8xf32>
    %123 = arith.truncf %122 : vector<8x8xf32> to vector<8x8xbf16>
    %c4 = arith.constant 4 : index
    %c0_50 = arith.constant 0 : index
    %c0_51 = arith.constant 0 : index
    %124 = vector.load %arg7[%c4, %c0_50, %c0_51] : memref<8x8x64xbf16, #tpu.memory_space<vmem>>, vector<1x8x64xbf16>
    %125 = vector.shape_cast %124 : vector<1x8x64xbf16> to vector<8x64xbf16>
    %cst_52 = arith.constant dense<0.000000e+00> : vector<8x64xf32>
    %126 = tpu.matmul %123, %125, %cst_52 {dimension_numbers = #tpu.dot_dimension_numbers<[1], [0], [0], [1], [0, 0, 1, 1], [], []>} : vector<8x8xbf16>, vector<8x64xbf16>, vector<8x64xf32> -> vector<8x64xf32>
    %127 = arith.addf %106, %126 : vector<8x64xf32>
    %128 = vector.extract_strided_slice %11 {offsets = [0, 40], sizes = [8, 8], strides = [1, 1]} : vector<8x64xbf16> to vector<8x8xbf16>
    %129 = vector.extract_strided_slice %16 {offsets = [0, 40], sizes = [8, 8], strides = [1, 1]} : vector<8x64xbf16> to vector<8x8xbf16>
    %130 = vector.extract_strided_slice %21 {offsets = [0, 40], sizes = [8, 8], strides = [1, 1]} : vector<8x64xbf16> to vector<8x8xbf16>
    %cst_53 = arith.constant dense<0.000000e+00> : vector<8x8xf32>
    %131 = tpu.matmul %128, %129, %cst_53 {dimension_numbers = #tpu.dot_dimension_numbers<[1], [1], [0], [0], [0, 0, 1, 0], [], []>} : vector<8x8xbf16>, vector<8x8xbf16>, vector<8x8xf32> -> vector<8x8xf32>
    %cst_54 = arith.constant dense<0xFF800000> : vector<8xf32>
    %132 = vector.multi_reduction <maximumf>, %131, %cst_54 [1] : vector<8x8xf32> to vector<8xf32>
    %133 = vector.shape_cast %132 : vector<8xf32> to vector<8x1xf32>
    %134 = vector.broadcast %133 : vector<8x1xf32> to vector<8x8xf32>
    %135 = arith.subf %131, %134 : vector<8x8xf32>
    %136 = math.exp %135 : vector<8x8xf32>
    %cst_55 = arith.constant dense<0.000000e+00> : vector<8xf32>
    %137 = vector.multi_reduction <add>, %136, %cst_55 [1] : vector<8x8xf32> to vector<8xf32>
    %138 = vector.shape_cast %137 : vector<8xf32> to vector<8x1xf32>
    %139 = tpu.reciprocal %138 : vector<8x1xf32> -> vector<8x1xf32>
    %140 = vector.broadcast %139 : vector<8x1xf32> to vector<8x8xf32>
    %141 = arith.mulf %136, %140 : vector<8x8xf32>
    %142 = arith.truncf %141 : vector<8x8xf32> to vector<8x8xbf16>
    %cst_56 = arith.constant dense<0.000000e+00> : vector<8x8xf32>
    %143 = tpu.matmul %142, %130, %cst_56 {dimension_numbers = #tpu.dot_dimension_numbers<[1], [0], [0], [1], [0, 0, 1, 1], [], []>} : vector<8x8xbf16>, vector<8x8xbf16>, vector<8x8xf32> -> vector<8x8xf32>
    %144 = arith.truncf %143 : vector<8x8xf32> to vector<8x8xbf16>
    %c5 = arith.constant 5 : index
    %c0_57 = arith.constant 0 : index
    %c0_58 = arith.constant 0 : index
    %145 = vector.load %arg7[%c5, %c0_57, %c0_58] : memref<8x8x64xbf16, #tpu.memory_space<vmem>>, vector<1x8x64xbf16>
    %146 = vector.shape_cast %145 : vector<1x8x64xbf16> to vector<8x64xbf16>
    %cst_59 = arith.constant dense<0.000000e+00> : vector<8x64xf32>
    %147 = tpu.matmul %144, %146, %cst_59 {dimension_numbers = #tpu.dot_dimension_numbers<[1], [0], [0], [1], [0, 0, 1, 1], [], []>} : vector<8x8xbf16>, vector<8x64xbf16>, vector<8x64xf32> -> vector<8x64xf32>
    %148 = arith.addf %127, %147 : vector<8x64xf32>
    %149 = vector.extract_strided_slice %11 {offsets = [0, 48], sizes = [8, 8], strides = [1, 1]} : vector<8x64xbf16> to vector<8x8xbf16>
    %150 = vector.extract_strided_slice %16 {offsets = [0, 48], sizes = [8, 8], strides = [1, 1]} : vector<8x64xbf16> to vector<8x8xbf16>
    %151 = vector.extract_strided_slice %21 {offsets = [0, 48], sizes = [8, 8], strides = [1, 1]} : vector<8x64xbf16> to vector<8x8xbf16>
    %cst_60 = arith.constant dense<0.000000e+00> : vector<8x8xf32>
    %152 = tpu.matmul %149, %150, %cst_60 {dimension_numbers = #tpu.dot_dimension_numbers<[1], [1], [0], [0], [0, 0, 1, 0], [], []>} : vector<8x8xbf16>, vector<8x8xbf16>, vector<8x8xf32> -> vector<8x8xf32>
    %cst_61 = arith.constant dense<0xFF800000> : vector<8xf32>
    %153 = vector.multi_reduction <maximumf>, %152, %cst_61 [1] : vector<8x8xf32> to vector<8xf32>
    %154 = vector.shape_cast %153 : vector<8xf32> to vector<8x1xf32>
    %155 = vector.broadcast %154 : vector<8x1xf32> to vector<8x8xf32>
    %156 = arith.subf %152, %155 : vector<8x8xf32>
    %157 = math.exp %156 : vector<8x8xf32>
    %cst_62 = arith.constant dense<0.000000e+00> : vector<8xf32>
    %158 = vector.multi_reduction <add>, %157, %cst_62 [1] : vector<8x8xf32> to vector<8xf32>
    %159 = vector.shape_cast %158 : vector<8xf32> to vector<8x1xf32>
    %160 = tpu.reciprocal %159 : vector<8x1xf32> -> vector<8x1xf32>
    %161 = vector.broadcast %160 : vector<8x1xf32> to vector<8x8xf32>
    %162 = arith.mulf %157, %161 : vector<8x8xf32>
    %163 = arith.truncf %162 : vector<8x8xf32> to vector<8x8xbf16>
    %cst_63 = arith.constant dense<0.000000e+00> : vector<8x8xf32>
    %164 = tpu.matmul %163, %151, %cst_63 {dimension_numbers = #tpu.dot_dimension_numbers<[1], [0], [0], [1], [0, 0, 1, 1], [], []>} : vector<8x8xbf16>, vector<8x8xbf16>, vector<8x8xf32> -> vector<8x8xf32>
    %165 = arith.truncf %164 : vector<8x8xf32> to vector<8x8xbf16>
    %c6 = arith.constant 6 : index
    %c0_64 = arith.constant 0 : index
    %c0_65 = arith.constant 0 : index
    %166 = vector.load %arg7[%c6, %c0_64, %c0_65] : memref<8x8x64xbf16, #tpu.memory_space<vmem>>, vector<1x8x64xbf16>
    %167 = vector.shape_cast %166 : vector<1x8x64xbf16> to vector<8x64xbf16>
    %cst_66 = arith.constant dense<0.000000e+00> : vector<8x64xf32>
    %168 = tpu.matmul %165, %167, %cst_66 {dimension_numbers = #tpu.dot_dimension_numbers<[1], [0], [0], [1], [0, 0, 1, 1], [], []>} : vector<8x8xbf16>, vector<8x64xbf16>, vector<8x64xf32> -> vector<8x64xf32>
    %169 = arith.addf %148, %168 : vector<8x64xf32>
    %170 = vector.extract_strided_slice %11 {offsets = [0, 56], sizes = [8, 8], strides = [1, 1]} : vector<8x64xbf16> to vector<8x8xbf16>
    %171 = vector.extract_strided_slice %16 {offsets = [0, 56], sizes = [8, 8], strides = [1, 1]} : vector<8x64xbf16> to vector<8x8xbf16>
    %172 = vector.extract_strided_slice %21 {offsets = [0, 56], sizes = [8, 8], strides = [1, 1]} : vector<8x64xbf16> to vector<8x8xbf16>
    %cst_67 = arith.constant dense<0.000000e+00> : vector<8x8xf32>
    %173 = tpu.matmul %170, %171, %cst_67 {dimension_numbers = #tpu.dot_dimension_numbers<[1], [1], [0], [0], [0, 0, 1, 0], [], []>} : vector<8x8xbf16>, vector<8x8xbf16>, vector<8x8xf32> -> vector<8x8xf32>
    %cst_68 = arith.constant dense<0xFF800000> : vector<8xf32>
    %174 = vector.multi_reduction <maximumf>, %173, %cst_68 [1] : vector<8x8xf32> to vector<8xf32>
    %175 = vector.shape_cast %174 : vector<8xf32> to vector<8x1xf32>
    %176 = vector.broadcast %175 : vector<8x1xf32> to vector<8x8xf32>
    %177 = arith.subf %173, %176 : vector<8x8xf32>
    %178 = math.exp %177 : vector<8x8xf32>
    %cst_69 = arith.constant dense<0.000000e+00> : vector<8xf32>
    %179 = vector.multi_reduction <add>, %178, %cst_69 [1] : vector<8x8xf32> to vector<8xf32>
    %180 = vector.shape_cast %179 : vector<8xf32> to vector<8x1xf32>
    %181 = tpu.reciprocal %180 : vector<8x1xf32> -> vector<8x1xf32>
    %182 = vector.broadcast %181 : vector<8x1xf32> to vector<8x8xf32>
    %183 = arith.mulf %178, %182 : vector<8x8xf32>
    %184 = arith.truncf %183 : vector<8x8xf32> to vector<8x8xbf16>
    %cst_70 = arith.constant dense<0.000000e+00> : vector<8x8xf32>
    %185 = tpu.matmul %184, %172, %cst_70 {dimension_numbers = #tpu.dot_dimension_numbers<[1], [0], [0], [1], [0, 0, 1, 1], [], []>} : vector<8x8xbf16>, vector<8x8xbf16>, vector<8x8xf32> -> vector<8x8xf32>
    %186 = arith.truncf %185 : vector<8x8xf32> to vector<8x8xbf16>
    %c7 = arith.constant 7 : index
    %c0_71 = arith.constant 0 : index
    %c0_72 = arith.constant 0 : index
    %187 = vector.load %arg7[%c7, %c0_71, %c0_72] : memref<8x8x64xbf16, #tpu.memory_space<vmem>>, vector<1x8x64xbf16>
    %188 = vector.shape_cast %187 : vector<1x8x64xbf16> to vector<8x64xbf16>
    %cst_73 = arith.constant dense<0.000000e+00> : vector<8x64xf32>
    %189 = tpu.matmul %186, %188, %cst_73 {dimension_numbers = #tpu.dot_dimension_numbers<[1], [0], [0], [1], [0, 0, 1, 1], [], []>} : vector<8x8xbf16>, vector<8x64xbf16>, vector<8x64xf32> -> vector<8x64xf32>
    %190 = arith.addf %169, %189 : vector<8x64xf32>
    %c0_74 = arith.constant 0 : index
    %c0_75 = arith.constant 0 : index
    %191 = vector.load %arg8[%c0_74, %c0_75] : memref<1x64xf32, #tpu.memory_space<vmem>>, vector<1x64xf32>
    %192 = vector.broadcast %191 : vector<1x64xf32> to vector<8x64xf32>
    %193 = arith.addf %190, %192 : vector<8x64xf32>
    %c0_76 = arith.constant 0 : index
    %c0_77 = arith.constant 0 : index
    %c0_78 = arith.constant 0 : index
    %194 = vector.load %arg9[%c0_76, %c0_77, %c0_78] : memref<8x2x64xf32, #tpu.memory_space<vmem>>, vector<8x1x64xf32>
    %195 = vector.shape_cast %194 : vector<8x1x64xf32> to vector<8x64xf32>
    %196 = vector.shape_cast %193 : vector<8x64xf32> to vector<8x1x64xf32>
    tpu.vector_store %arg9[%c0_76, %c0_77, %c0_78], %196 {strides = array<i32>} : memref<8x2x64xf32, #tpu.memory_space<vmem>>, vector<8x1x64xf32>,
    %197 = vector.extract_strided_slice %0 {offsets = [0, 1, 0], sizes = [8, 1, 64], strides = [1, 1, 1]} : vector<8x2x64xf32> to vector<8x1x64xf32>
    %198 = vector.shape_cast %197 : vector<8x1x64xf32> to vector<8x64xf32>
    %199 = arith.truncf %198 : vector<8x64xf32> to vector<8x64xbf16>
    %cst_79 = arith.constant dense<0.000000e+00> : vector<8x64xf32>
    %200 = tpu.matmul %199, %1, %cst_79 {dimension_numbers = #tpu.dot_dimension_numbers<[1], [0], [0], [1], [0, 0, 1, 1], [], []>} : vector<8x64xbf16>, vector<64x64xbf16>, vector<8x64xf32> -> vector<8x64xf32>
    %c0_80 = arith.constant 0 : index
    %c0_81 = arith.constant 0 : index
    %201 = vector.load %arg2[%c0_80, %c0_81] : memref<1x64xf32, #tpu.memory_space<vmem>>, vector<1x64xf32>
    %202 = vector.broadcast %201 : vector<1x64xf32> to vector<8x64xf32>
    %203 = arith.addf %200, %202 : vector<8x64xf32>
    %204 = arith.truncf %203 : vector<8x64xf32> to vector<8x64xbf16>
    %cst_82 = arith.constant dense<0.000000e+00> : vector<8x64xf32>
    %205 = tpu.matmul %199, %2, %cst_82 {dimension_numbers = #tpu.dot_dimension_numbers<[1], [0], [0], [1], [0, 0, 1, 1], [], []>} : vector<8x64xbf16>, vector<64x64xbf16>, vector<8x64xf32> -> vector<8x64xf32>
    %c0_83 = arith.constant 0 : index
    %c0_84 = arith.constant 0 : index
    %206 = vector.load %arg4[%c0_83, %c0_84] : memref<1x64xf32, #tpu.memory_space<vmem>>, vector<1x64xf32>
    %207 = vector.broadcast %206 : vector<1x64xf32> to vector<8x64xf32>
    %208 = arith.addf %205, %207 : vector<8x64xf32>
    %209 = arith.truncf %208 : vector<8x64xf32> to vector<8x64xbf16>
    %cst_85 = arith.constant dense<0.000000e+00> : vector<8x64xf32>
    %210 = tpu.matmul %199, %3, %cst_85 {dimension_numbers = #tpu.dot_dimension_numbers<[1], [0], [0], [1], [0, 0, 1, 1], [], []>} : vector<8x64xbf16>, vector<64x64xbf16>, vector<8x64xf32> -> vector<8x64xf32>
    %c0_86 = arith.constant 0 : index
    %c0_87 = arith.constant 0 : index
    %211 = vector.load %arg6[%c0_86, %c0_87] : memref<1x64xf32, #tpu.memory_space<vmem>>, vector<1x64xf32>
    %212 = vector.broadcast %211 : vector<1x64xf32> to vector<8x64xf32>
    %213 = arith.addf %210, %212 : vector<8x64xf32>
    %214 = arith.truncf %213 : vector<8x64xf32> to vector<8x64xbf16>
    %cst_88 = arith.constant 0.000000e+00 : f32
    %215 = vector.broadcast %cst_88 : f32 to vector<8x64xf32>
    %216 = vector.extract_strided_slice %204 {offsets = [0, 0], sizes = [8, 8], strides = [1, 1]} : vector<8x64xbf16> to vector<8x8xbf16>
    %217 = vector.extract_strided_slice %209 {offsets = [0, 0], sizes = [8, 8], strides = [1, 1]} : vector<8x64xbf16> to vector<8x8xbf16>
    %218 = vector.extract_strided_slice %214 {offsets = [0, 0], sizes = [8, 8], strides = [1, 1]} : vector<8x64xbf16> to vector<8x8xbf16>
    %cst_89 = arith.constant dense<0.000000e+00> : vector<8x8xf32>
    %219 = tpu.matmul %216, %217, %cst_89 {dimension_numbers = #tpu.dot_dimension_numbers<[1], [1], [0], [0], [0, 0, 1, 0], [], []>} : vector<8x8xbf16>, vector<8x8xbf16>, vector<8x8xf32> -> vector<8x8xf32>
    %cst_90 = arith.constant dense<0xFF800000> : vector<8xf32>
    %220 = vector.multi_reduction <maximumf>, %219, %cst_90 [1] : vector<8x8xf32> to vector<8xf32>
    %221 = vector.shape_cast %220 : vector<8xf32> to vector<8x1xf32>
    %222 = vector.broadcast %221 : vector<8x1xf32> to vector<8x8xf32>
    %223 = arith.subf %219, %222 : vector<8x8xf32>
    %224 = math.exp %223 : vector<8x8xf32>
    %cst_91 = arith.constant dense<0.000000e+00> : vector<8xf32>
    %225 = vector.multi_reduction <add>, %224, %cst_91 [1] : vector<8x8xf32> to vector<8xf32>
    %226 = vector.shape_cast %225 : vector<8xf32> to vector<8x1xf32>
    %227 = tpu.reciprocal %226 : vector<8x1xf32> -> vector<8x1xf32>
    %228 = vector.broadcast %227 : vector<8x1xf32> to vector<8x8xf32>
    %229 = arith.mulf %224, %228 : vector<8x8xf32>
    %230 = arith.truncf %229 : vector<8x8xf32> to vector<8x8xbf16>
    %cst_92 = arith.constant dense<0.000000e+00> : vector<8x8xf32>
    %231 = tpu.matmul %230, %218, %cst_92 {dimension_numbers = #tpu.dot_dimension_numbers<[1], [0], [0], [1], [0, 0, 1, 1], [], []>} : vector<8x8xbf16>, vector<8x8xbf16>, vector<8x8xf32> -> vector<8x8xf32>
    %232 = arith.truncf %231 : vector<8x8xf32> to vector<8x8xbf16>
    %c0_93 = arith.constant 0 : index
    %c0_94 = arith.constant 0 : index
    %c0_95 = arith.constant 0 : index
    %233 = vector.load %arg7[%c0_93, %c0_94, %c0_95] : memref<8x8x64xbf16, #tpu.memory_space<vmem>>, vector<1x8x64xbf16>
    %234 = vector.shape_cast %233 : vector<1x8x64xbf16> to vector<8x64xbf16>
    %cst_96 = arith.constant dense<0.000000e+00> : vector<8x64xf32>
    %235 = tpu.matmul %232, %234, %cst_96 {dimension_numbers = #tpu.dot_dimension_numbers<[1], [0], [0], [1], [0, 0, 1, 1], [], []>} : vector<8x8xbf16>, vector<8x64xbf16>, vector<8x64xf32> -> vector<8x64xf32>
    %236 = arith.addf %215, %235 : vector<8x64xf32>
    %237 = vector.extract_strided_slice %204 {offsets = [0, 8], sizes = [8, 8], strides = [1, 1]} : vector<8x64xbf16> to vector<8x8xbf16>
    %238 = vector.extract_strided_slice %209 {offsets = [0, 8], sizes = [8, 8], strides = [1, 1]} : vector<8x64xbf16> to vector<8x8xbf16>
    %239 = vector.extract_strided_slice %214 {offsets = [0, 8], sizes = [8, 8], strides = [1, 1]} : vector<8x64xbf16> to vector<8x8xbf16>
    %cst_97 = arith.constant dense<0.000000e+00> : vector<8x8xf32>
    %240 = tpu.matmul %237, %238, %cst_97 {dimension_numbers = #tpu.dot_dimension_numbers<[1], [1], [0], [0], [0, 0, 1, 0], [], []>} : vector<8x8xbf16>, vector<8x8xbf16>, vector<8x8xf32> -> vector<8x8xf32>
    %cst_98 = arith.constant dense<0xFF800000> : vector<8xf32>
    %241 = vector.multi_reduction <maximumf>, %240, %cst_98 [1] : vector<8x8xf32> to vector<8xf32>
    %242 = vector.shape_cast %241 : vector<8xf32> to vector<8x1xf32>
    %243 = vector.broadcast %242 : vector<8x1xf32> to vector<8x8xf32>
    %244 = arith.subf %240, %243 : vector<8x8xf32>
    %245 = math.exp %244 : vector<8x8xf32>
    %cst_99 = arith.constant dense<0.000000e+00> : vector<8xf32>
    %246 = vector.multi_reduction <add>, %245, %cst_99 [1] : vector<8x8xf32> to vector<8xf32>
    %247 = vector.shape_cast %246 : vector<8xf32> to vector<8x1xf32>
    %248 = tpu.reciprocal %247 : vector<8x1xf32> -> vector<8x1xf32>
    %249 = vector.broadcast %248 : vector<8x1xf32> to vector<8x8xf32>
    %250 = arith.mulf %245, %249 : vector<8x8xf32>
    %251 = arith.truncf %250 : vector<8x8xf32> to vector<8x8xbf16>
    %cst_100 = arith.constant dense<0.000000e+00> : vector<8x8xf32>
    %252 = tpu.matmul %251, %239, %cst_100 {dimension_numbers = #tpu.dot_dimension_numbers<[1], [0], [0], [1], [0, 0, 1, 1], [], []>} : vector<8x8xbf16>, vector<8x8xbf16>, vector<8x8xf32> -> vector<8x8xf32>
    %253 = arith.truncf %252 : vector<8x8xf32> to vector<8x8xbf16>
    %c1_101 = arith.constant 1 : index
    %c0_102 = arith.constant 0 : index
    %c0_103 = arith.constant 0 : index
    %254 = vector.load %arg7[%c1_101, %c0_102, %c0_103] : memref<8x8x64xbf16, #tpu.memory_space<vmem>>, vector<1x8x64xbf16>
    %255 = vector.shape_cast %254 : vector<1x8x64xbf16> to vector<8x64xbf16>
    %cst_104 = arith.constant dense<0.000000e+00> : vector<8x64xf32>
    %256 = tpu.matmul %253, %255, %cst_104 {dimension_numbers = #tpu.dot_dimension_numbers<[1], [0], [0], [1], [0, 0, 1, 1], [], []>} : vector<8x8xbf16>, vector<8x64xbf16>, vector<8x64xf32> -> vector<8x64xf32>
    %257 = arith.addf %236, %256 : vector<8x64xf32>
    %258 = vector.extract_strided_slice %204 {offsets = [0, 16], sizes = [8, 8], strides = [1, 1]} : vector<8x64xbf16> to vector<8x8xbf16>
    %259 = vector.extract_strided_slice %209 {offsets = [0, 16], sizes = [8, 8], strides = [1, 1]} : vector<8x64xbf16> to vector<8x8xbf16>
    %260 = vector.extract_strided_slice %214 {offsets = [0, 16], sizes = [8, 8], strides = [1, 1]} : vector<8x64xbf16> to vector<8x8xbf16>
    %cst_105 = arith.constant dense<0.000000e+00> : vector<8x8xf32>
    %261 = tpu.matmul %258, %259, %cst_105 {dimension_numbers = #tpu.dot_dimension_numbers<[1], [1], [0], [0], [0, 0, 1, 0], [], []>} : vector<8x8xbf16>, vector<8x8xbf16>, vector<8x8xf32> -> vector<8x8xf32>
    %cst_106 = arith.constant dense<0xFF800000> : vector<8xf32>
    %262 = vector.multi_reduction <maximumf>, %261, %cst_106 [1] : vector<8x8xf32> to vector<8xf32>
    %263 = vector.shape_cast %262 : vector<8xf32> to vector<8x1xf32>
    %264 = vector.broadcast %263 : vector<8x1xf32> to vector<8x8xf32>
    %265 = arith.subf %261, %264 : vector<8x8xf32>
    %266 = math.exp %265 : vector<8x8xf32>
    %cst_107 = arith.constant dense<0.000000e+00> : vector<8xf32>
    %267 = vector.multi_reduction <add>, %266, %cst_107 [1] : vector<8x8xf32> to vector<8xf32>
    %268 = vector.shape_cast %267 : vector<8xf32> to vector<8x1xf32>
    %269 = tpu.reciprocal %268 : vector<8x1xf32> -> vector<8x1xf32>
    %270 = vector.broadcast %269 : vector<8x1xf32> to vector<8x8xf32>
    %271 = arith.mulf %266, %270 : vector<8x8xf32>
    %272 = arith.truncf %271 : vector<8x8xf32> to vector<8x8xbf16>
    %cst_108 = arith.constant dense<0.000000e+00> : vector<8x8xf32>
    %273 = tpu.matmul %272, %260, %cst_108 {dimension_numbers = #tpu.dot_dimension_numbers<[1], [0], [0], [1], [0, 0, 1, 1], [], []>} : vector<8x8xbf16>, vector<8x8xbf16>, vector<8x8xf32> -> vector<8x8xf32>
    %274 = arith.truncf %273 : vector<8x8xf32> to vector<8x8xbf16>
    %c2_109 = arith.constant 2 : index
    %c0_110 = arith.constant 0 : index
    %c0_111 = arith.constant 0 : index
    %275 = vector.load %arg7[%c2_109, %c0_110, %c0_111] : memref<8x8x64xbf16, #tpu.memory_space<vmem>>, vector<1x8x64xbf16>
    %276 = vector.shape_cast %275 : vector<1x8x64xbf16> to vector<8x64xbf16>
    %cst_112 = arith.constant dense<0.000000e+00> : vector<8x64xf32>
    %277 = tpu.matmul %274, %276, %cst_112 {dimension_numbers = #tpu.dot_dimension_numbers<[1], [0], [0], [1], [0, 0, 1, 1], [], []>} : vector<8x8xbf16>, vector<8x64xbf16>, vector<8x64xf32> -> vector<8x64xf32>
    %278 = arith.addf %257, %277 : vector<8x64xf32>
    %279 = vector.extract_strided_slice %204 {offsets = [0, 24], sizes = [8, 8], strides = [1, 1]} : vector<8x64xbf16> to vector<8x8xbf16>
    %280 = vector.extract_strided_slice %209 {offsets = [0, 24], sizes = [8, 8], strides = [1, 1]} : vector<8x64xbf16> to vector<8x8xbf16>
    %281 = vector.extract_strided_slice %214 {offsets = [0, 24], sizes = [8, 8], strides = [1, 1]} : vector<8x64xbf16> to vector<8x8xbf16>
    %cst_113 = arith.constant dense<0.000000e+00> : vector<8x8xf32>
    %282 = tpu.matmul %279, %280, %cst_113 {dimension_numbers = #tpu.dot_dimension_numbers<[1], [1], [0], [0], [0, 0, 1, 0], [], []>} : vector<8x8xbf16>, vector<8x8xbf16>, vector<8x8xf32> -> vector<8x8xf32>
    %cst_114 = arith.constant dense<0xFF800000> : vector<8xf32>
    %283 = vector.multi_reduction <maximumf>, %282, %cst_114 [1] : vector<8x8xf32> to vector<8xf32>
    %284 = vector.shape_cast %283 : vector<8xf32> to vector<8x1xf32>
    %285 = vector.broadcast %284 : vector<8x1xf32> to vector<8x8xf32>
    %286 = arith.subf %282, %285 : vector<8x8xf32>
    %287 = math.exp %286 : vector<8x8xf32>
    %cst_115 = arith.constant dense<0.000000e+00> : vector<8xf32>
    %288 = vector.multi_reduction <add>, %287, %cst_115 [1] : vector<8x8xf32> to vector<8xf32>
    %289 = vector.shape_cast %288 : vector<8xf32> to vector<8x1xf32>
    %290 = tpu.reciprocal %289 : vector<8x1xf32> -> vector<8x1xf32>
    %291 = vector.broadcast %290 : vector<8x1xf32> to vector<8x8xf32>
    %292 = arith.mulf %287, %291 : vector<8x8xf32>
    %293 = arith.truncf %292 : vector<8x8xf32> to vector<8x8xbf16>
    %cst_116 = arith.constant dense<0.000000e+00> : vector<8x8xf32>
    %294 = tpu.matmul %293, %281, %cst_116 {dimension_numbers = #tpu.dot_dimension_numbers<[1], [0], [0], [1], [0, 0, 1, 1], [], []>} : vector<8x8xbf16>, vector<8x8xbf16>, vector<8x8xf32> -> vector<8x8xf32>
    %295 = arith.truncf %294 : vector<8x8xf32> to vector<8x8xbf16>
    %c3_117 = arith.constant 3 : index
    %c0_118 = arith.constant 0 : index
    %c0_119 = arith.constant 0 : index
    %296 = vector.load %arg7[%c3_117, %c0_118, %c0_119] : memref<8x8x64xbf16, #tpu.memory_space<vmem>>, vector<1x8x64xbf16>
    %297 = vector.shape_cast %296 : vector<1x8x64xbf16> to vector<8x64xbf16>
    %cst_120 = arith.constant dense<0.000000e+00> : vector<8x64xf32>
    %298 = tpu.matmul %295, %297, %cst_120 {dimension_numbers = #tpu.dot_dimension_numbers<[1], [0], [0], [1], [0, 0, 1, 1], [], []>} : vector<8x8xbf16>, vector<8x64xbf16>, vector<8x64xf32> -> vector<8x64xf32>
    %299 = arith.addf %278, %298 : vector<8x64xf32>
    %300 = vector.extract_strided_slice %204 {offsets = [0, 32], sizes = [8, 8], strides = [1, 1]} : vector<8x64xbf16> to vector<8x8xbf16>
    %301 = vector.extract_strided_slice %209 {offsets = [0, 32], sizes = [8, 8], strides = [1, 1]} : vector<8x64xbf16> to vector<8x8xbf16>
    %302 = vector.extract_strided_slice %214 {offsets = [0, 32], sizes = [8, 8], strides = [1, 1]} : vector<8x64xbf16> to vector<8x8xbf16>
    %cst_121 = arith.constant dense<0.000000e+00> : vector<8x8xf32>
    %303 = tpu.matmul %300, %301, %cst_121 {dimension_numbers = #tpu.dot_dimension_numbers<[1], [1], [0], [0], [0, 0, 1, 0], [], []>} : vector<8x8xbf16>, vector<8x8xbf16>, vector<8x8xf32> -> vector<8x8xf32>
    %cst_122 = arith.constant dense<0xFF800000> : vector<8xf32>
    %304 = vector.multi_reduction <maximumf>, %303, %cst_122 [1] : vector<8x8xf32> to vector<8xf32>
    %305 = vector.shape_cast %304 : vector<8xf32> to vector<8x1xf32>
    %306 = vector.broadcast %305 : vector<8x1xf32> to vector<8x8xf32>
    %307 = arith.subf %303, %306 : vector<8x8xf32>
    %308 = math.exp %307 : vector<8x8xf32>
    %cst_123 = arith.constant dense<0.000000e+00> : vector<8xf32>
    %309 = vector.multi_reduction <add>, %308, %cst_123 [1] : vector<8x8xf32> to vector<8xf32>
    %310 = vector.shape_cast %309 : vector<8xf32> to vector<8x1xf32>
    %311 = tpu.reciprocal %310 : vector<8x1xf32> -> vector<8x1xf32>
    %312 = vector.broadcast %311 : vector<8x1xf32> to vector<8x8xf32>
    %313 = arith.mulf %308, %312 : vector<8x8xf32>
    %314 = arith.truncf %313 : vector<8x8xf32> to vector<8x8xbf16>
    %cst_124 = arith.constant dense<0.000000e+00> : vector<8x8xf32>
    %315 = tpu.matmul %314, %302, %cst_124 {dimension_numbers = #tpu.dot_dimension_numbers<[1], [0], [0], [1], [0, 0, 1, 1], [], []>} : vector<8x8xbf16>, vector<8x8xbf16>, vector<8x8xf32> -> vector<8x8xf32>
    %316 = arith.truncf %315 : vector<8x8xf32> to vector<8x8xbf16>
    %c4_125 = arith.constant 4 : index
    %c0_126 = arith.constant 0 : index
    %c0_127 = arith.constant 0 : index
    %317 = vector.load %arg7[%c4_125, %c0_126, %c0_127] : memref<8x8x64xbf16, #tpu.memory_space<vmem>>, vector<1x8x64xbf16>
    %318 = vector.shape_cast %317 : vector<1x8x64xbf16> to vector<8x64xbf16>
    %cst_128 = arith.constant dense<0.000000e+00> : vector<8x64xf32>
    %319 = tpu.matmul %316, %318, %cst_128 {dimension_numbers = #tpu.dot_dimension_numbers<[1], [0], [0], [1], [0, 0, 1, 1], [], []>} : vector<8x8xbf16>, vector<8x64xbf16>, vector<8x64xf32> -> vector<8x64xf32>
    %320 = arith.addf %299, %319 : vector<8x64xf32>
    %321 = vector.extract_strided_slice %204 {offsets = [0, 40], sizes = [8, 8], strides = [1, 1]} : vector<8x64xbf16> to vector<8x8xbf16>
    %322 = vector.extract_strided_slice %209 {offsets = [0, 40], sizes = [8, 8], strides = [1, 1]} : vector<8x64xbf16> to vector<8x8xbf16>
    %323 = vector.extract_strided_slice %214 {offsets = [0, 40], sizes = [8, 8], strides = [1, 1]} : vector<8x64xbf16> to vector<8x8xbf16>
    %cst_129 = arith.constant dense<0.000000e+00> : vector<8x8xf32>
    %324 = tpu.matmul %321, %322, %cst_129 {dimension_numbers = #tpu.dot_dimension_numbers<[1], [1], [0], [0], [0, 0, 1, 0], [], []>} : vector<8x8xbf16>, vector<8x8xbf16>, vector<8x8xf32> -> vector<8x8xf32>
    %cst_130 = arith.constant dense<0xFF800000> : vector<8xf32>
    %325 = vector.multi_reduction <maximumf>, %324, %cst_130 [1] : vector<8x8xf32> to vector<8xf32>
    %326 = vector.shape_cast %325 : vector<8xf32> to vector<8x1xf32>
    %327 = vector.broadcast %326 : vector<8x1xf32> to vector<8x8xf32>
    %328 = arith.subf %324, %327 : vector<8x8xf32>
    %329 = math.exp %328 : vector<8x8xf32>
    %cst_131 = arith.constant dense<0.000000e+00> : vector<8xf32>
    %330 = vector.multi_reduction <add>, %329, %cst_131 [1] : vector<8x8xf32> to vector<8xf32>
    %331 = vector.shape_cast %330 : vector<8xf32> to vector<8x1xf32>
    %332 = tpu.reciprocal %331 : vector<8x1xf32> -> vector<8x1xf32>
    %333 = vector.broadcast %332 : vector<8x1xf32> to vector<8x8xf32>
    %334 = arith.mulf %329, %333 : vector<8x8xf32>
    %335 = arith.truncf %334 : vector<8x8xf32> to vector<8x8xbf16>
    %cst_132 = arith.constant dense<0.000000e+00> : vector<8x8xf32>
    %336 = tpu.matmul %335, %323, %cst_132 {dimension_numbers = #tpu.dot_dimension_numbers<[1], [0], [0], [1], [0, 0, 1, 1], [], []>} : vector<8x8xbf16>, vector<8x8xbf16>, vector<8x8xf32> -> vector<8x8xf32>
    %337 = arith.truncf %336 : vector<8x8xf32> to vector<8x8xbf16>
    %c5_133 = arith.constant 5 : index
    %c0_134 = arith.constant 0 : index
    %c0_135 = arith.constant 0 : index
    %338 = vector.load %arg7[%c5_133, %c0_134, %c0_135] : memref<8x8x64xbf16, #tpu.memory_space<vmem>>, vector<1x8x64xbf16>
    %339 = vector.shape_cast %338 : vector<1x8x64xbf16> to vector<8x64xbf16>
    %cst_136 = arith.constant dense<0.000000e+00> : vector<8x64xf32>
    %340 = tpu.matmul %337, %339, %cst_136 {dimension_numbers = #tpu.dot_dimension_numbers<[1], [0], [0], [1], [0, 0, 1, 1], [], []>} : vector<8x8xbf16>, vector<8x64xbf16>, vector<8x64xf32> -> vector<8x64xf32>
    %341 = arith.addf %320, %340 : vector<8x64xf32>
    %342 = vector.extract_strided_slice %204 {offsets = [0, 48], sizes = [8, 8], strides = [1, 1]} : vector<8x64xbf16> to vector<8x8xbf16>
    %343 = vector.extract_strided_slice %209 {offsets = [0, 48], sizes = [8, 8], strides = [1, 1]} : vector<8x64xbf16> to vector<8x8xbf16>
    %344 = vector.extract_strided_slice %214 {offsets = [0, 48], sizes = [8, 8], strides = [1, 1]} : vector<8x64xbf16> to vector<8x8xbf16>
    %cst_137 = arith.constant dense<0.000000e+00> : vector<8x8xf32>
    %345 = tpu.matmul %342, %343, %cst_137 {dimension_numbers = #tpu.dot_dimension_numbers<[1], [1], [0], [0], [0, 0, 1, 0], [], []>} : vector<8x8xbf16>, vector<8x8xbf16>, vector<8x8xf32> -> vector<8x8xf32>
    %cst_138 = arith.constant dense<0xFF800000> : vector<8xf32>
    %346 = vector.multi_reduction <maximumf>, %345, %cst_138 [1] : vector<8x8xf32> to vector<8xf32>
    %347 = vector.shape_cast %346 : vector<8xf32> to vector<8x1xf32>
    %348 = vector.broadcast %347 : vector<8x1xf32> to vector<8x8xf32>
    %349 = arith.subf %345, %348 : vector<8x8xf32>
    %350 = math.exp %349 : vector<8x8xf32>
    %cst_139 = arith.constant dense<0.000000e+00> : vector<8xf32>
    %351 = vector.multi_reduction <add>, %350, %cst_139 [1] : vector<8x8xf32> to vector<8xf32>
    %352 = vector.shape_cast %351 : vector<8xf32> to vector<8x1xf32>
    %353 = tpu.reciprocal %352 : vector<8x1xf32> -> vector<8x1xf32>
    %354 = vector.broadcast %353 : vector<8x1xf32> to vector<8x8xf32>
    %355 = arith.mulf %350, %354 : vector<8x8xf32>
    %356 = arith.truncf %355 : vector<8x8xf32> to vector<8x8xbf16>
    %cst_140 = arith.constant dense<0.000000e+00> : vector<8x8xf32>
    %357 = tpu.matmul %356, %344, %cst_140 {dimension_numbers = #tpu.dot_dimension_numbers<[1], [0], [0], [1], [0, 0, 1, 1], [], []>} : vector<8x8xbf16>, vector<8x8xbf16>, vector<8x8xf32> -> vector<8x8xf32>
    %358 = arith.truncf %357 : vector<8x8xf32> to vector<8x8xbf16>
    %c6_141 = arith.constant 6 : index
    %c0_142 = arith.constant 0 : index
    %c0_143 = arith.constant 0 : index
    %359 = vector.load %arg7[%c6_141, %c0_142, %c0_143] : memref<8x8x64xbf16, #tpu.memory_space<vmem>>, vector<1x8x64xbf16>
    %360 = vector.shape_cast %359 : vector<1x8x64xbf16> to vector<8x64xbf16>
    %cst_144 = arith.constant dense<0.000000e+00> : vector<8x64xf32>
    %361 = tpu.matmul %358, %360, %cst_144 {dimension_numbers = #tpu.dot_dimension_numbers<[1], [0], [0], [1], [0, 0, 1, 1], [], []>} : vector<8x8xbf16>, vector<8x64xbf16>, vector<8x64xf32> -> vector<8x64xf32>
    %362 = arith.addf %341, %361 : vector<8x64xf32>
    %363 = vector.extract_strided_slice %204 {offsets = [0, 56], sizes = [8, 8], strides = [1, 1]} : vector<8x64xbf16> to vector<8x8xbf16>
    %364 = vector.extract_strided_slice %209 {offsets = [0, 56], sizes = [8, 8], strides = [1, 1]} : vector<8x64xbf16> to vector<8x8xbf16>
    %365 = vector.extract_strided_slice %214 {offsets = [0, 56], sizes = [8, 8], strides = [1, 1]} : vector<8x64xbf16> to vector<8x8xbf16>
    %cst_145 = arith.constant dense<0.000000e+00> : vector<8x8xf32>
    %366 = tpu.matmul %363, %364, %cst_145 {dimension_numbers = #tpu.dot_dimension_numbers<[1], [1], [0], [0], [0, 0, 1, 0], [], []>} : vector<8x8xbf16>, vector<8x8xbf16>, vector<8x8xf32> -> vector<8x8xf32>
    %cst_146 = arith.constant dense<0xFF800000> : vector<8xf32>
    %367 = vector.multi_reduction <maximumf>, %366, %cst_146 [1] : vector<8x8xf32> to vector<8xf32>
    %368 = vector.shape_cast %367 : vector<8xf32> to vector<8x1xf32>
    %369 = vector.broadcast %368 : vector<8x1xf32> to vector<8x8xf32>
    %370 = arith.subf %366, %369 : vector<8x8xf32>
    %371 = math.exp %370 : vector<8x8xf32>
    %cst_147 = arith.constant dense<0.000000e+00> : vector<8xf32>
    %372 = vector.multi_reduction <add>, %371, %cst_147 [1] : vector<8x8xf32> to vector<8xf32>
    %373 = vector.shape_cast %372 : vector<8xf32> to vector<8x1xf32>
    %374 = tpu.reciprocal %373 : vector<8x1xf32> -> vector<8x1xf32>
    %375 = vector.broadcast %374 : vector<8x1xf32> to vector<8x8xf32>
    %376 = arith.mulf %371, %375 : vector<8x8xf32>
    %377 = arith.truncf %376 : vector<8x8xf32> to vector<8x8xbf16>
    %cst_148 = arith.constant dense<0.000000e+00> : vector<8x8xf32>
    %378 = tpu.matmul %377, %365, %cst_148 {dimension_numbers = #tpu.dot_dimension_numbers<[1], [0], [0], [1], [0, 0, 1, 1], [], []>} : vector<8x8xbf16>, vector<8x8xbf16>, vector<8x8xf32> -> vector<8x8xf32>
    %379 = arith.truncf %378 : vector<8x8xf32> to vector<8x8xbf16>
    %c7_149 = arith.constant 7 : index
    %c0_150 = arith.constant 0 : index
    %c0_151 = arith.constant 0 : index
    %380 = vector.load %arg7[%c7_149, %c0_150, %c0_151] : memref<8x8x64xbf16, #tpu.memory_space<vmem>>, vector<1x8x64xbf16>
    %381 = vector.shape_cast %380 : vector<1x8x64xbf16> to vector<8x64xbf16>
    %cst_152 = arith.constant dense<0.000000e+00> : vector<8x64xf32>
    %382 = tpu.matmul %379, %381, %cst_152 {dimension_numbers = #tpu.dot_dimension_numbers<[1], [0], [0], [1], [0, 0, 1, 1], [], []>} : vector<8x8xbf16>, vector<8x64xbf16>, vector<8x64xf32> -> vector<8x64xf32>
    %383 = arith.addf %362, %382 : vector<8x64xf32>
    %c0_153 = arith.constant 0 : index
    %c0_154 = arith.constant 0 : index
    %384 = vector.load %arg8[%c0_153, %c0_154] : memref<1x64xf32, #tpu.memory_space<vmem>>, vector<1x64xf32>
    %385 = vector.broadcast %384 : vector<1x64xf32> to vector<8x64xf32>
    %386 = arith.addf %383, %385 : vector<8x64xf32>
    %c0_155 = arith.constant 0 : index
    %c1_156 = arith.constant 1 : index
    %c0_157 = arith.constant 0 : index
    %387 = vector.load %arg9[%c0_155, %c1_156, %c0_157] : memref<8x2x64xf32, #tpu.memory_space<vmem>>, vector<8x1x64xf32>
    %388 = vector.shape_cast %387 : vector<8x1x64xf32> to vector<8x64xf32>
    %389 = vector.shape_cast %386 : vector<8x64xf32> to vector<8x1x64xf32>
    tpu.vector_store %arg9[%c0_155, %c1_156, %c0_157], %389 {strides = array<i32>} : memref<8x2x64xf32, #tpu.memory_space<vmem>>, vector<8x1x64xf32>,
    return
  }
}

</mosaic_0001>

<llo_original>
// kernel: tpu_custom_call.1
$region0: #{tpu_custom_call.1}
  #allocation0 [shape = 'u32[]', space=smem, size = 0x4, offset = 0x4, fixed_abs, tag = 'smem constant byte address 0x4 - core index']
  #allocation1 [shape = 'u32[144,128]{1,0:T(1,128)}', space=vmem, size = 0x12000, scoped, tag = 'internal scratch']
  %s0 = inlined_call_operand.hbm [shape: f32[8,2,64], index: 0, kind: input, shape index: {}]
  %s1 = inlined_call_operand.hbm [shape: bf16[64,64], index: 1, kind: input, shape index: {}]
  %s2 = inlined_call_operand.vmem [shape: f32[1,64], index: 2, kind: input, shape index: {}]
  %s3 = inlined_call_operand.hbm [shape: bf16[64,64], index: 3, kind: input, shape index: {}]
  %s4 = inlined_call_operand.vmem [shape: f32[1,64], index: 4, kind: input, shape index: {}]
  %s5 = inlined_call_operand.hbm [shape: bf16[64,64], index: 5, kind: input, shape index: {}]
  %s6 = inlined_call_operand.vmem [shape: f32[1,64], index: 6, kind: input, shape index: {}]
  %s7 = inlined_call_operand.hbm [shape: bf16[8,8,64], index: 7, kind: input, shape index: {}]
  %s8 = inlined_call_operand.vmem [shape: f32[1,64], index: 8, kind: input, shape index: {}]
  %s9 = inlined_call_operand.hbm [shape: f32[8,2,64], index: 9, kind: output, shape index: {}]
  %s10 = sld [smem:[#allocation0]]
  $region66: #{tpu_custom_call.1} parent=0
    _
  %s12 = ssub.s32 1, %s10
  %s13 = scalar_select 0, %s12, %s10
  $region1: #{tpu_custom_call.1} parent=0
    #allocation2 [shape = 'u8[8192]{0}', space=vmem, size = 0x2000, scoped, tag = 'input window, operand 0, single buffered']
    #allocation3 [shape = 's32[1]{0}', space=sflag, size = 0x4, scoped, tag = 'scoped memory for tpu_custom_call.1']
    #allocation4 [shape = 's32[1]{0}', space=sflag, size = 0x4, scoped, tag = 'scoped memory for tpu_custom_call.1']
    #allocation5 [shape = 'u8[16384]{0}', space=vmem, size = 0x4000, scoped, tag = 'input window, operand 1, single buffered']
    #allocation6 [shape = 's32[1]{0}', space=sflag, size = 0x4, scoped, tag = 'scoped memory for tpu_custom_call.1']
    #allocation7 [shape = 'u8[16384]{0}', space=vmem, size = 0x4000, scoped, tag = 'input window, operand 3, single buffered']
    #allocation8 [shape = 'u8[16384]{0}', space=vmem, size = 0x4000, scoped, tag = 'input window, operand 5, single buffered']
    #allocation9 [shape = 's32[1]{0}', space=sflag, size = 0x4, scoped, tag = 'scoped memory for tpu_custom_call.1']
    #allocation10 [shape = 'u8[16384]{0}', space=vmem, size = 0x4000, scoped, tag = 'input window, operand 7, single buffered']
    #allocation11 [shape = 'u8[8192]{0}', space=vmem, size = 0x2000, scoped, tag = 'output window, operand 0, single buffered']
    %14 = vsyncpa [#allocation3], 0
    %15 = vsyncpa [#allocation6], 0
    %16 = vsyncpa [#allocation9], 0
    %17 = vsyncpa [#allocation4], 0
    // Predicated region
    $region2: #{tpu_custom_call.1} parent=1 // pred_check
      _
    $region3: #{tpu_custom_call.1} parent=1 // pred_check_branch
      %19 = sbr.rel (0) target = $region5
    $region4: #{tpu_custom_call.1} parent=1 // pred_region
      %s21 = ssub.s32 256, 256
      %22 = vsyncadd [#allocation3], %s21
      %s23 = sshll.u32 [#allocation2], 4
      %s24 = int_to_ptr.vmem [resolvable:$true] %s23
      %29 = dma.hbm_to_vmem [thread:$0]  %s0, 256, %s24, [#allocation3], 32, 32, 2
    $region5: #{tpu_custom_call.1} parent=1 // pred_fallthru
      _
    // Predicated region
    $region6: #{tpu_custom_call.1} parent=1 // pred_check
      _
    $region7: #{tpu_custom_call.1} parent=1 // pred_check_branch
      %31 = sbr.rel (0) target = $region9
    $region8: #{tpu_custom_call.1} parent=1 // pred_region
      %s33 = ssub.s32 512, 512
      %34 = vsyncadd [#allocation6], %s33
      %s35 = sshll.u32 [#allocation5], 4
      %s36 = int_to_ptr.vmem [resolvable:$true] %s35
      %41 = dma.hbm_to_vmem [thread:$0]  %s1, 512, %s36, [#allocation6], 64, 64, 4
    $region9: #{tpu_custom_call.1} parent=1 // pred_fallthru
      _
    // Predicated region
    $region10: #{tpu_custom_call.1} parent=1 // pred_check
      _
    $region11: #{tpu_custom_call.1} parent=1 // pred_check_branch
      %43 = sbr.rel (0) target = $region13
    $region12: #{tpu_custom_call.1} parent=1 // pred_region
      _
    $region13: #{tpu_custom_call.1} parent=1 // pred_fallthru
      _
    // Predicated region
    $region14: #{tpu_custom_call.1} parent=1 // pred_check
      _
    $region15: #{tpu_custom_call.1} parent=1 // pred_check_branch
      %45 = sbr.rel (0) target = $region17
    $region16: #{tpu_custom_call.1} parent=1 // pred_region
      %s47 = ssub.s32 512, 512
      %48 = vsyncadd [#allocation6], %s47
      %s49 = sshll.u32 [#allocation7], 4
      %s50 = int_to_ptr.vmem [resolvable:$true] %s49
      %55 = dma.hbm_to_vmem [thread:$0]  %s3, 512, %s50, [#allocation6], 64, 64, 4
    $region17: #{tpu_custom_call.1} parent=1 // pred_fallthru
      _
    // Predicated region
    $region18: #{tpu_custom_call.1} parent=1 // pred_check
      _
    $region19: #{tpu_custom_call.1} parent=1 // pred_check_branch
      %57 = sbr.rel (0) target = $region21
    $region20: #{tpu_custom_call.1} parent=1 // pred_region
      _
    $region21: #{tpu_custom_call.1} parent=1 // pred_fallthru
      _
    // Predicated region
    $region22: #{tpu_custom_call.1} parent=1 // pred_check
      _
    $region23: #{tpu_custom_call.1} parent=1 // pred_check_branch
      %59 = sbr.rel (0) target = $region25
    $region24: #{tpu_custom_call.1} parent=1 // pred_region
      %s61 = ssub.s32 512, 512
      %62 = vsyncadd [#allocation9], %s61
      %s63 = sshll.u32 [#allocation8], 4
      %s64 = int_to_ptr.vmem [resolvable:$true] %s63
      %69 = dma.hbm_to_vmem [thread:$0]  %s5, 512, %s64, [#allocation9], 64, 64, 4
    $region25: #{tpu_custom_call.1} parent=1 // pred_fallthru
      _
    // Predicated region
    $region26: #{tpu_custom_call.1} parent=1 // pred_check
      _
    $region27: #{tpu_custom_call.1} parent=1 // pred_check_branch
      %71 = sbr.rel (0) target = $region29
    $region28: #{tpu_custom_call.1} parent=1 // pred_region
      _
    $region29: #{tpu_custom_call.1} parent=1 // pred_fallthru
      _
    // Predicated region
    $region30: #{tpu_custom_call.1} parent=1 // pred_check
      _
    $region31: #{tpu_custom_call.1} parent=1 // pred_check_branch
      %73 = sbr.rel (0) target = $region33
    $region32: #{tpu_custom_call.1} parent=1 // pred_region
      %s75 = ssub.s32 512, 512
      %76 = vsyncadd [#allocation9], %s75
      %s77 = sshll.u32 [#allocation10], 4
      %s78 = int_to_ptr.vmem [resolvable:$true] %s77
      %83 = dma.hbm_to_vmem [thread:$0]  %s7, 512, %s78, [#allocation9], 64, 64, 4
    $region33: #{tpu_custom_call.1} parent=1 // pred_fallthru
      _
    // Predicated region
    $region34: #{tpu_custom_call.1} parent=1 // pred_check
      _
    $region35: #{tpu_custom_call.1} parent=1 // pred_check_branch
      %85 = sbr.rel (0) target = $region37
    $region36: #{tpu_custom_call.1} parent=1 // pred_region
      _
    $region37: #{tpu_custom_call.1} parent=1 // pred_fallthru
      _
    // Predicated region
    $region38: #{tpu_custom_call.1} parent=1 // pred_check
      _
    $region39: #{tpu_custom_call.1} parent=1 // pred_check_branch
      %87 = sbr.rel (0) target = $region41
    $region40: #{tpu_custom_call.1} parent=1 // pred_region
      %88 = dma.done [#allocation3], 256
    $region41: #{tpu_custom_call.1} parent=1 // pred_fallthru
      _
    // Predicated region
    $region42: #{tpu_custom_call.1} parent=1 // pred_check
      _
    $region43: #{tpu_custom_call.1} parent=1 // pred_check_branch
      %90 = sbr.rel (0) target = $region45
    $region44: #{tpu_custom_call.1} parent=1 // pred_region
      %91 = dma.done [#allocation6], 512
    $region45: #{tpu_custom_call.1} parent=1 // pred_fallthru
      _
    // Predicated region
    $region46: #{tpu_custom_call.1} parent=1 // pred_check
      _
    $region47: #{tpu_custom_call.1} parent=1 // pred_check_branch
      %93 = sbr.rel (0) target = $region49
    $region48: #{tpu_custom_call.1} parent=1 // pred_region
      %94 = dma.done [#allocation6], 512
    $region49: #{tpu_custom_call.1} parent=1 // pred_fallthru
      _
    // Predicated region
    $region50: #{tpu_custom_call.1} parent=1 // pred_check
      _
    $region51: #{tpu_custom_call.1} parent=1 // pred_check_branch
      %96 = sbr.rel (0) target = $region53
    $region52: #{tpu_custom_call.1} parent=1 // pred_region
      %97 = dma.done [#allocation9], 512
    $region53: #{tpu_custom_call.1} parent=1 // pred_fallthru
      _
    // Predicated region
    $region54: #{tpu_custom_call.1} parent=1 // pred_check
      _
    $region55: #{tpu_custom_call.1} parent=1 // pred_check_branch
      %99 = sbr.rel (0) target = $region57
    $region56: #{tpu_custom_call.1} parent=1 // pred_region
      %100 = dma.done [#allocation9], 512
    $region57: #{tpu_custom_call.1} parent=1 // pred_fallthru
      _
    %v102 = vld [vmem:[#allocation2] sm:$0x3]
    %v103 = vld [vmem:[#allocation2 + $0x2] sm:$0x3]
    %v104 = vld [vmem:[#allocation2 + $0x4] sm:$0x3]
    %v105 = vld [vmem:[#allocation2 + $0x6] sm:$0x3]
    %v106 = vld [vmem:[#allocation2 + $0x8] sm:$0x3]
    %v107 = vld [vmem:[#allocation2 + $0xa] sm:$0x3]
    %v108 = vld [vmem:[#allocation2 + $0xc] sm:$0x3]
    %v109 = vld [vmem:[#allocation2 + $0xe] sm:$0x3]
    %v110 = vld [vmem:[#allocation5] sm:$0xf]
    %v111 = vld [vmem:[#allocation5 + $0x4] sm:$0xf]
    %v112 = vld [vmem:[#allocation5 + $0x8] sm:$0xf]
    %v113 = vld [vmem:[#allocation5 + $0xc] sm:$0xf]
    %v114 = vld [vmem:[#allocation5 + $0x10] sm:$0xf]
    %v115 = vld [vmem:[#allocation5 + $0x14] sm:$0xf]
    %v116 = vld [vmem:[#allocation5 + $0x18] sm:$0xf]
    %v117 = vld [vmem:[#allocation5 + $0x1c] sm:$0xf]
    %v118 = vld [vmem:[#allocation7] sm:$0xf]
    %v119 = vld [vmem:[#allocation7 + $0x4] sm:$0xf]
    %v120 = vld [vmem:[#allocation7 + $0x8] sm:$0xf]
    %v121 = vld [vmem:[#allocation7 + $0xc] sm:$0xf]
    %v122 = vld [vmem:[#allocation7 + $0x10] sm:$0xf]
    %v123 = vld [vmem:[#allocation7 + $0x14] sm:$0xf]
    %v124 = vld [vmem:[#allocation7 + $0x18] sm:$0xf]
    %v125 = vld [vmem:[#allocation7 + $0x1c] sm:$0xf]
    %v126 = vld [vmem:[#allocation8] sm:$0xf]
    %v127 = vld [vmem:[#allocation8 + $0x4] sm:$0xf]
    %v128 = vld [vmem:[#allocation8 + $0x8] sm:$0xf]
    %v129 = vld [vmem:[#allocation8 + $0xc] sm:$0xf]
    %v130 = vld [vmem:[#allocation8 + $0x10] sm:$0xf]
    %v131 = vld [vmem:[#allocation8 + $0x14] sm:$0xf]
    %v132 = vld [vmem:[#allocation8 + $0x18] sm:$0xf]
    %v133 = vld [vmem:[#allocation8 + $0x1c] sm:$0xf]
    %v134 = vpack.c.bf16 %v102, %v102
    %v135 = vpack.c.bf16 %v103, %v103
    %v136 = vpack.c.bf16 %v104, %v104
    %v137 = vpack.c.bf16 %v105, %v105
    %v138 = vpack.c.bf16 %v106, %v106
    %v139 = vpack.c.bf16 %v107, %v107
    %v140 = vpack.c.bf16 %v108, %v108
    %v141 = vpack.c.bf16 %v109, %v109
    %v142 = vld [vmem:[%s2] sm:$0x1]
    %v144 = vlaneseq
    %v145 = vshrl.u32 %v144, 7
    %v146 = vsub.s32 0, %v145
    %v147 = vrot.slane %v142, %v146
    %v157 = vunpack.c.l.b16 %v134
    %v158 = vunpack.c.l.b16 %v135
    %v159 = vunpack.c.l.b16 %v136
    %v160 = vunpack.c.l.b16 %v137
    %v161 = vunpack.c.l.b16 %v138
    %v162 = vunpack.c.l.b16 %v139
    %v163 = vunpack.c.l.b16 %v140
    %v164 = vunpack.c.l.b16 %v141
    %v165 = vrot.slane %v158, 7
    %vm166 = vcmask 1041409
    %v167 = vsel %vm166, %v165, %v157
    %v168 = vrot.slane %v159, 6
    %vm169 = vcmask 1042434
    %v170 = vsel %vm169, %v168, %v167
    %v171 = vrot.slane %v160, 5
    %vm172 = vcmask 1043459
    %v173 = vsel %vm172, %v171, %v170
    %v174 = vrot.slane %v161, 4
    %vm175 = vcmask 1044484
    %v176 = vsel %vm175, %v174, %v173
    %v177 = vrot.slane %v162, 3
    %vm178 = vcmask 1045509
    %v179 = vsel %vm178, %v177, %v176
    %v180 = vrot.slane %v163, 2
    %vm181 = vcmask 1046534
    %v182 = vsel %vm181, %v180, %v179
    %v183 = vrot.slane %v164, 1
    %vm184 = vcmask 1047559
    %v185 = vsel %vm184, %v183, %v182
    %v186 = vpack.c.b16 %v185, %v185
    %v195 = vunpack.c.l.b16 %v110
    %v196 = vunpack.c.l.b16 %v111
    %v197 = vunpack.c.l.b16 %v112
    %v198 = vunpack.c.l.b16 %v113
    %v199 = vunpack.c.l.b16 %v114
    %v200 = vunpack.c.l.b16 %v115
    %v201 = vunpack.c.l.b16 %v116
    %v202 = vunpack.c.l.b16 %v117
    %v203 = vpack.c.b16 %v196, %v195
    %v204 = vpack.c.b16 %v198, %v197
    %v205 = vpack.c.b16 %v200, %v199
    %v206 = vpack.c.b16 %v202, %v201
    %vm211 = vcmask 523264
    %v213 = vsel %vm211, %v186, 0
    %215 = vmatprep.subr.bf16.mxu0 0
    %216 = vmatpush1.bf16.msra.mxu0 %v203
    %217 = vmatprep.subr.bf16.mxu0 0
    %218 = vmatpush1.bf16.msra.mxu0 %v204
    %219 = vmatprep.subr.bf16.mxu0 0
    %220 = vmatpush1.bf16.msra.mxu0 %v205
    %221 = vmatprep.subr.bf16.mxu0 0
    %222 = vmatpush1.bf16.msra.mxu0 %v206
    %223 = vmatprep.subr.bf16.mxu0 0
    %224 = vmatpush1.bf16.msra.mxu0 0
    %225 = vmatprep.subr.bf16.mxu0 0
    %226 = vmatpush1.bf16.msra.mxu0 0
    %227 = vmatprep.subr.bf16.mxu0 0
    %228 = vmatpush1.bf16.msra.mxu0 0
    %229 = vmatprep.subr.bf16.mxu0 0
    %230 = vmatpush1.bf16.msra.mxu0 0
    %231 = vmatprep.subr.bf16.mxu0 0
    %232 = vmatpush1.bf16.msra.mxu0 0
    %233 = vmatprep.subr.bf16.mxu0 0
    %234 = vmatpush1.bf16.msra.mxu0 0
    %235 = vmatprep.subr.bf16.mxu0 0
    %236 = vmatpush1.bf16.msra.mxu0 0
    %237 = vmatprep.subr.bf16.mxu0 0
    %238 = vmatpush1.bf16.msra.mxu0 0
    %239 = vmatprep.subr.bf16.mxu0 0
    %240 = vmatpush1.bf16.msra.mxu0 0
    %241 = vmatprep.subr.bf16.mxu0 0
    %242 = vmatpush1.bf16.msra.mxu0 0
    %243 = vmatprep.subr.bf16.mxu0 0
    %244 = vmatpush1.bf16.msra.mxu0 0
    %245 = vmatprep.subr.bf16.mxu0 0
    %246 = vmatpush1.bf16.msra.mxu0 0
    %247 = vmatprep.mubr.bf16.mxu0 0
    %248 = vmatmul.mubr.bf16.gmra.mrb[0].mxu0 %v213
    %v249 = vpop.f32.mrb[0].mxu0
    %v250 = vadd.f32 %v147, %v249
    %v251 = vpop.f32.mrb[0].mxu0
    %v252 = vpop.f32.mrb[0].mxu0
    %v253 = vpop.f32.mrb[0].mxu0
    %254 = vdwg.mxu0
    %v255 = vpack.c.bf16 %v250, %v250
    %v256 = vld [vmem:[%s4] sm:$0x1]
    %v258 = vlaneseq
    %v259 = vshrl.u32 %v258, 7
    %v260 = vsub.s32 0, %v259
    %v261 = vrot.slane %v256, %v260
    %v271 = vunpack.c.l.b16 %v118
    %v272 = vunpack.c.l.b16 %v119
    %v273 = vunpack.c.l.b16 %v120
    %v274 = vunpack.c.l.b16 %v121
    %v275 = vunpack.c.l.b16 %v122
    %v276 = vunpack.c.l.b16 %v123
    %v277 = vunpack.c.l.b16 %v124
    %v278 = vunpack.c.l.b16 %v125
    %v279 = vpack.c.b16 %v272, %v271
    %v280 = vpack.c.b16 %v274, %v273
    %v281 = vpack.c.b16 %v276, %v275
    %v282 = vpack.c.b16 %v278, %v277
    %287 = vmatprep.subr.bf16.mxu0 0
    %288 = vmatpush1.bf16.msra.mxu0 %v279
    %289 = vmatprep.subr.bf16.mxu0 0
    %290 = vmatpush1.bf16.msra.mxu0 %v280
    %291 = vmatprep.subr.bf16.mxu0 0
    %292 = vmatpush1.bf16.msra.mxu0 %v281
    %293 = vmatprep.subr.bf16.mxu0 0
    %294 = vmatpush1.bf16.msra.mxu0 %v282
    %295 = vmatprep.subr.bf16.mxu0 0
    %296 = vmatpush1.bf16.msra.mxu0 0
    %297 = vmatprep.subr.bf16.mxu0 0
    %298 = vmatpush1.bf16.msra.mxu0 0
    %299 = vmatprep.subr.bf16.mxu0 0
    %300 = vmatpush1.bf16.msra.mxu0 0
    %301 = vmatprep.subr.bf16.mxu0 0
    %302 = vmatpush1.bf16.msra.mxu0 0
    %303 = vmatprep.subr.bf16.mxu0 0
    %304 = vmatpush1.bf16.msra.mxu0 0
    %305 = vmatprep.subr.bf16.mxu0 0
    %306 = vmatpush1.bf16.msra.mxu0 0
    %307 = vmatprep.subr.bf16.mxu0 0
    %308 = vmatpush1.bf16.msra.mxu0 0
    %309 = vmatprep.subr.bf16.mxu0 0
    %310 = vmatpush1.bf16.msra.mxu0 0
    %311 = vmatprep.subr.bf16.mxu0 0
    %312 = vmatpush1.bf16.msra.mxu0 0
    %313 = vmatprep.subr.bf16.mxu0 0
    %314 = vmatpush1.bf16.msra.mxu0 0
    %315 = vmatprep.subr.bf16.mxu0 0
    %316 = vmatpush1.bf16.msra.mxu0 0
    %317 = vmatprep.subr.bf16.mxu0 0
    %318 = vmatpush1.bf16.msra.mxu0 0
    %319 = vmatprep.mubr.bf16.mxu0 0
    %320 = vmatmul.mubr.bf16.gmra.mrb[0].mxu0 %v213
    %v321 = vpop.f32.mrb[0].mxu0
    %v322 = vadd.f32 %v261, %v321
    %v323 = vpop.f32.mrb[0].mxu0
    %v324 = vpop.f32.mrb[0].mxu0
    %v325 = vpop.f32.mrb[0].mxu0
    %326 = vdwg.mxu0
    %v327 = vpack.c.bf16 %v322, %v322
    %v328 = vld [vmem:[%s6] sm:$0x1]
    %v330 = vlaneseq
    %v331 = vshrl.u32 %v330, 7
    %v332 = vsub.s32 0, %v331
    %v333 = vrot.slane %v328, %v332
    %v343 = vunpack.c.l.b16 %v126
    %v344 = vunpack.c.l.b16 %v127
    %v345 = vunpack.c.l.b16 %v128
    %v346 = vunpack.c.l.b16 %v129
    %v347 = vunpack.c.l.b16 %v130
    %v348 = vunpack.c.l.b16 %v131
    %v349 = vunpack.c.l.b16 %v132
    %v350 = vunpack.c.l.b16 %v133
    %v351 = vpack.c.b16 %v344, %v343
    %v352 = vpack.c.b16 %v346, %v345
    %v353 = vpack.c.b16 %v348, %v347
    %v354 = vpack.c.b16 %v350, %v349
    %359 = vmatprep.subr.bf16.mxu0 0
    %360 = vmatpush1.bf16.msra.mxu0 %v351
    %361 = vmatprep.subr.bf16.mxu0 0
    %362 = vmatpush1.bf16.msra.mxu0 %v352
    %363 = vmatprep.subr.bf16.mxu0 0
    %364 = vmatpush1.bf16.msra.mxu0 %v353
    %365 = vmatprep.subr.bf16.mxu0 0
    %366 = vmatpush1.bf16.msra.mxu0 %v354
    %367 = vmatprep.subr.bf16.mxu0 0
    %368 = vmatpush1.bf16.msra.mxu0 0
    %369 = vmatprep.subr.bf16.mxu0 0
    %370 = vmatpush1.bf16.msra.mxu0 0
    %371 = vmatprep.subr.bf16.mxu0 0
    %372 = vmatpush1.bf16.msra.mxu0 0
    %373 = vmatprep.subr.bf16.mxu0 0
    %374 = vmatpush1.bf16.msra.mxu0 0
    %375 = vmatprep.subr.bf16.mxu0 0
    %376 = vmatpush1.bf16.msra.mxu0 0
    %377 = vmatprep.subr.bf16.mxu0 0
    %378 = vmatpush1.bf16.msra.mxu0 0
    %379 = vmatprep.subr.bf16.mxu0 0
    %380 = vmatpush1.bf16.msra.mxu0 0
    %381 = vmatprep.subr.bf16.mxu0 0
    %382 = vmatpush1.bf16.msra.mxu0 0
    %383 = vmatprep.subr.bf16.mxu0 0
    %384 = vmatpush1.bf16.msra.mxu0 0
    %385 = vmatprep.subr.bf16.mxu0 0
    %386 = vmatpush1.bf16.msra.mxu0 0
    %387 = vmatprep.subr.bf16.mxu0 0
    %388 = vmatpush1.bf16.msra.mxu0 0
    %389 = vmatprep.subr.bf16.mxu0 0
    %390 = vmatpush1.bf16.msra.mxu0 0
    %391 = vmatprep.mubr.bf16.mxu0 0
    %392 = vmatmul.mubr.bf16.gmra.mrb[0].mxu0 %v213
    %v393 = vpop.f32.mrb[0].mxu0
    %v394 = vadd.f32 %v333, %v393
    %v395 = vpop.f32.mrb[0].mxu0
    %v396 = vpop.f32.mrb[0].mxu0
    %v397 = vpop.f32.mrb[0].mxu0
    %398 = vdwg.mxu0
    %v399 = vpack.c.bf16 %v394, %v394
    %vm400 = vcmask 64512
    %v402 = vsel %vm400, %v255, 0
    %v405 = vsel %vm400, %v327, 0
    %407 = vmatprep.subr.bf16.mxu0 0
    %408 = vmatpush1.bf16.xpose.msra.mxu0 %v405
    %409 = vmatprep.subr.bf16.mxu0 0
    %410 = vmatpush1.bf16.xpose.msra.mxu0 0
    %411 = vmatprep.subr.bf16.mxu0 0
    %412 = vmatpush1.bf16.xpose.msra.mxu0 0
    %413 = vmatprep.subr.bf16.mxu0 0
    %414 = vmatpush1.bf16.xpose.msra.mxu0 0
    %415 = vmatprep.subr.bf16.mxu0 0
    %416 = vmatpush1.bf16.xpose.msra.mxu0 0
    %417 = vmatprep.subr.bf16.mxu0 0
    %418 = vmatpush1.bf16.xpose.msra.mxu0 0
    %419 = vmatprep.subr.bf16.mxu0 0
    %420 = vmatpush1.bf16.xpose.msra.mxu0 0
    %421 = vmatprep.subr.bf16.mxu0 0
    %422 = vmatpush1.bf16.xpose.msra.mxu0 0
    %423 = vmatprep.subr.bf16.mxu0 0
    %424 = vmatpush1.bf16.xpose.msra.mxu0 0
    %425 = vmatprep.subr.bf16.mxu0 0
    %426 = vmatpush1.bf16.xpose.msra.mxu0 0
    %427 = vmatprep.subr.bf16.mxu0 0
    %428 = vmatpush1.bf16.xpose.msra.mxu0 0
    %429 = vmatprep.subr.bf16.mxu0 0
    %430 = vmatpush1.bf16.xpose.msra.mxu0 0
    %431 = vmatprep.subr.bf16.mxu0 0
    %432 = vmatpush1.bf16.xpose.msra.mxu0 0
    %433 = vmatprep.subr.bf16.mxu0 0
    %434 = vmatpush1.bf16.xpose.msra.mxu0 0
    %435 = vmatprep.subr.bf16.mxu0 0
    %436 = vmatpush1.bf16.xpose.msra.mxu0 0
    %437 = vmatprep.subr.bf16.mxu0 0
    %438 = vmatpush1.bf16.xpose.msra.mxu0 0
    %439 = vmatprep.mubr.bf16.mxu0 0
    %440 = vmatmul.mubr.bf16.gmra.mrb[0].mxu0 %v402
    %v441 = vpop.f32.mrb[0].mxu0
    %v442 = vadd.f32 0.0, %v441
    %v443 = vpop.f32.mrb[0].mxu0
    %v444 = vpop.f32.mrb[0].mxu0
    %v445 = vpop.f32.mrb[0].mxu0
    %446 = vdwg.mxu0
    %v447 = vsel %vm400, %v442, -inf
    %448 = vmax.xlane.f32.xlu0 %v447
    %v449 = vpop.xlane.xlu0 %448
    %v450 = vsub.f32 %v442, %v449
    %v451 = vmul.f32 %v450, 1.442695
    %v452 = vpow.pop %v451
    %v453 = vsel %vm400, %v452, 0.0
    %454 = vadd.xlane.f32.xlu0 %v453
    %v455 = vpop.xlane.xlu0 %454
    %v456 = vrcp.pop %v455
    %v457 = vmul.f32 %v452, %v456
    %v458 = vpack.c.bf16 %v457, %v457
    %v460 = vsel %vm400, %v458, 0
    %vm462 = vcmask 1043456
    %v464 = vsel %vm462, %v399, 0
    %466 = vmatprep.subr.bf16.mxu0 0
    %467 = vmatpush1.bf16.msra.mxu0 %v464
    %468 = vmatprep.subr.bf16.mxu0 0
    %469 = vmatpush1.bf16.msra.mxu0 0
    %470 = vmatprep.subr.bf16.mxu0 0
    %471 = vmatpush1.bf16.msra.mxu0 0
    %472 = vmatprep.subr.bf16.mxu0 0
    %473 = vmatpush1.bf16.msra.mxu0 0
    %474 = vmatprep.subr.bf16.mxu0 0
    %475 = vmatpush1.bf16.msra.mxu0 0
    %476 = vmatprep.subr.bf16.mxu0 0
    %477 = vmatpush1.bf16.msra.mxu0 0
    %478 = vmatprep.subr.bf16.mxu0 0
    %479 = vmatpush1.bf16.msra.mxu0 0
    %480 = vmatprep.subr.bf16.mxu0 0
    %481 = vmatpush1.bf16.msra.mxu0 0
    %482 = vmatprep.subr.bf16.mxu0 0
    %483 = vmatpush1.bf16.msra.mxu0 0
    %484 = vmatprep.subr.bf16.mxu0 0
    %485 = vmatpush1.bf16.msra.mxu0 0
    %486 = vmatprep.subr.bf16.mxu0 0
    %487 = vmatpush1.bf16.msra.mxu0 0
    %488 = vmatprep.subr.bf16.mxu0 0
    %489 = vmatpush1.bf16.msra.mxu0 0
    %490 = vmatprep.subr.bf16.mxu0 0
    %491 = vmatpush1.bf16.msra.mxu0 0
    %492 = vmatprep.subr.bf16.mxu0 0
    %493 = vmatpush1.bf16.msra.mxu0 0
    %494 = vmatprep.subr.bf16.mxu0 0
    %495 = vmatpush1.bf16.msra.mxu0 0
    %496 = vmatprep.subr.bf16.mxu0 0
    %497 = vmatpush1.bf16.msra.mxu0 0
    %498 = vmatprep.mubr.bf16.mxu0 0
    %499 = vmatmul.mubr.bf16.gmra.mrb[0].mxu0 %v460
    %v500 = vpop.f32.mrb[0].mxu0
    %v501 = vadd.f32 0.0, %v500
    %v502 = vpop.f32.mrb[0].mxu0
    %v503 = vpop.f32.mrb[0].mxu0
    %v504 = vpop.f32.mrb[0].mxu0
    %505 = vdwg.mxu0
    %v506 = vpack.c.bf16 %v501, %v501
    %v507 = vld [vmem:[#allocation10] sm:$0xf]
    %509 = vrot.lane.b32.xlu0 %v255, 120
    %v510 = vpop.permute.xlu0 %509
    %512 = vrot.lane.b32.xlu0 %v327, 120
    %v513 = vpop.permute.xlu0 %512
    %v515 = vsel %vm400, %v510, 0
    %v518 = vsel %vm400, %v513, 0
    %520 = vmatprep.subr.bf16.mxu0 0
    %521 = vmatpush1.bf16.xpose.msra.mxu0 %v518
    %522 = vmatprep.subr.bf16.mxu0 0
    %523 = vmatpush1.bf16.xpose.msra.mxu0 0
    %524 = vmatprep.subr.bf16.mxu0 0
    %525 = vmatpush1.bf16.xpose.msra.mxu0 0
    %526 = vmatprep.subr.bf16.mxu0 0
    %527 = vmatpush1.bf16.xpose.msra.mxu0 0
    %528 = vmatprep.subr.bf16.mxu0 0
    %529 = vmatpush1.bf16.xpose.msra.mxu0 0
    %530 = vmatprep.subr.bf16.mxu0 0
    %531 = vmatpush1.bf16.xpose.msra.mxu0 0
    %532 = vmatprep.subr.bf16.mxu0 0
    %533 = vmatpush1.bf16.xpose.msra.mxu0 0
    %534 = vmatprep.subr.bf16.mxu0 0
    %535 = vmatpush1.bf16.xpose.msra.mxu0 0
    %536 = vmatprep.subr.bf16.mxu0 0
    %537 = vmatpush1.bf16.xpose.msra.mxu0 0
    %538 = vmatprep.subr.bf16.mxu0 0
    %539 = vmatpush1.bf16.xpose.msra.mxu0 0
    %540 = vmatprep.subr.bf16.mxu0 0
    %541 = vmatpush1.bf16.xpose.msra.mxu0 0
    %542 = vmatprep.subr.bf16.mxu0 0
    %543 = vmatpush1.bf16.xpose.msra.mxu0 0
    %544 = vmatprep.subr.bf16.mxu0 0
    %545 = vmatpush1.bf16.xpose.msra.mxu0 0
    %546 = vmatprep.subr.bf16.mxu0 0
    %547 = vmatpush1.bf16.xpose.msra.mxu0 0
    %548 = vmatprep.subr.bf16.mxu0 0
    %549 = vmatpush1.bf16.xpose.msra.mxu0 0
    %550 = vmatprep.subr.bf16.mxu0 0
    %551 = vmatpush1.bf16.xpose.msra.mxu0 0
    %552 = vmatprep.mubr.bf16.mxu0 0
    %553 = vmatmul.mubr.bf16.gmra.mrb[0].mxu0 %v515
    %v554 = vpop.f32.mrb[0].mxu0
    %v555 = vadd.f32 0.0, %v554
    %v556 = vpop.f32.mrb[0].mxu0
    %v557 = vpop.f32.mrb[0].mxu0
    %v558 = vpop.f32.mrb[0].mxu0
    %559 = vdwg.mxu0
    %v560 = vsel %vm400, %v555, -inf
    %561 = vmax.xlane.f32.xlu0 %v560
    %v562 = vpop.xlane.xlu0 %561
    %v563 = vsub.f32 %v555, %v562
    %v564 = vmul.f32 %v563, 1.442695
    %v565 = vpow.pop %v564
    %v566 = vsel %vm400, %v565, 0.0
    %567 = vadd.xlane.f32.xlu0 %v566
    %v568 = vpop.xlane.xlu0 %567
    %v569 = vrcp.pop %v568
    %v570 = vmul.f32 %v565, %v569
    %v571 = vpack.c.bf16 %v570, %v570
    %573 = vrot.lane.b32.xlu0 %v399, 120
    %v574 = vpop.permute.xlu0 %573
    %v576 = vsel %vm400, %v571, 0
    %v579 = vsel %vm462, %v574, 0
    %581 = vmatprep.subr.bf16.mxu0 0
    %582 = vmatpush1.bf16.msra.mxu0 %v579
    %583 = vmatprep.subr.bf16.mxu0 0
    %584 = vmatpush1.bf16.msra.mxu0 0
    %585 = vmatprep.subr.bf16.mxu0 0
    %586 = vmatpush1.bf16.msra.mxu0 0
    %587 = vmatprep.subr.bf16.mxu0 0
    %588 = vmatpush1.bf16.msra.mxu0 0
    %589 = vmatprep.subr.bf16.mxu0 0
    %590 = vmatpush1.bf16.msra.mxu0 0
    %591 = vmatprep.subr.bf16.mxu0 0
    %592 = vmatpush1.bf16.msra.mxu0 0
    %593 = vmatprep.subr.bf16.mxu0 0
    %594 = vmatpush1.bf16.msra.mxu0 0
    %595 = vmatprep.subr.bf16.mxu0 0
    %596 = vmatpush1.bf16.msra.mxu0 0
    %597 = vmatprep.subr.bf16.mxu0 0
    %598 = vmatpush1.bf16.msra.mxu0 0
    %599 = vmatprep.subr.bf16.mxu0 0
    %600 = vmatpush1.bf16.msra.mxu0 0
    %601 = vmatprep.subr.bf16.mxu0 0
    %602 = vmatpush1.bf16.msra.mxu0 0
    %603 = vmatprep.subr.bf16.mxu0 0
    %604 = vmatpush1.bf16.msra.mxu0 0
    %605 = vmatprep.subr.bf16.mxu0 0
    %606 = vmatpush1.bf16.msra.mxu0 0
    %607 = vmatprep.subr.bf16.mxu0 0
    %608 = vmatpush1.bf16.msra.mxu0 0
    %609 = vmatprep.subr.bf16.mxu0 0
    %610 = vmatpush1.bf16.msra.mxu0 0
    %611 = vmatprep.subr.bf16.mxu0 0
    %612 = vmatpush1.bf16.msra.mxu0 0
    %613 = vmatprep.mubr.bf16.mxu0 0
    %614 = vmatmul.mubr.bf16.gmra.mrb[0].mxu0 %v576
    %v615 = vpop.f32.mrb[0].mxu0
    %v616 = vadd.f32 0.0, %v615
    %v617 = vpop.f32.mrb[0].mxu0
    %v618 = vpop.f32.mrb[0].mxu0
    %v619 = vpop.f32.mrb[0].mxu0
    %620 = vdwg.mxu0
    %v621 = vpack.c.bf16 %v616, %v616
    %s622 = scalar_lea.vmem [#allocation10], 4
    %v623 = vld [vmem:[%s622] sm:$0xf]
    %v625 = vsel %vm400, %v621, 0
    %v628 = vsel %vm462, %v623, 0
    %630 = vmatprep.subr.bf16.mxu0 0
    %631 = vmatpush1.bf16.msra.mxu0 %v628
    %632 = vmatprep.subr.bf16.mxu0 0
    %633 = vmatpush1.bf16.msra.mxu0 0
    %634 = vmatprep.subr.bf16.mxu0 0
    %635 = vmatpush1.bf16.msra.mxu0 0
    %636 = vmatprep.subr.bf16.mxu0 0
    %637 = vmatpush1.bf16.msra.mxu0 0
    %638 = vmatprep.subr.bf16.mxu0 0
    %639 = vmatpush1.bf16.msra.mxu0 0
    %640 = vmatprep.subr.bf16.mxu0 0
    %641 = vmatpush1.bf16.msra.mxu0 0
    %642 = vmatprep.subr.bf16.mxu0 0
    %643 = vmatpush1.bf16.msra.mxu0 0
    %644 = vmatprep.subr.bf16.mxu0 0
    %645 = vmatpush1.bf16.msra.mxu0 0
    %646 = vmatprep.subr.bf16.mxu0 0
    %647 = vmatpush1.bf16.msra.mxu0 0
    %648 = vmatprep.subr.bf16.mxu0 0
    %649 = vmatpush1.bf16.msra.mxu0 0
    %650 = vmatprep.subr.bf16.mxu0 0
    %651 = vmatpush1.bf16.msra.mxu0 0
    %652 = vmatprep.subr.bf16.mxu0 0
    %653 = vmatpush1.bf16.msra.mxu0 0
    %654 = vmatprep.subr.bf16.mxu0 0
    %655 = vmatpush1.bf16.msra.mxu0 0
    %656 = vmatprep.subr.bf16.mxu0 0
    %657 = vmatpush1.bf16.msra.mxu0 0
    %658 = vmatprep.subr.bf16.mxu0 0
    %659 = vmatpush1.bf16.msra.mxu0 0
    %660 = vmatprep.subr.bf16.mxu0 0
    %661 = vmatpush1.bf16.msra.mxu0 0
    %662 = vmatprep.mubr.bf16.mxu0 0
    %663 = vmatmul.mubr.bf16.gmra.mrb[0].mxu0 %v625
    %v664 = vpop.f32.mrb[0].mxu0
    %v665 = vadd.f32 0.0, %v664
    %v666 = vpop.f32.mrb[0].mxu0
    %v667 = vpop.f32.mrb[0].mxu0
    %v668 = vpop.f32.mrb[0].mxu0
    %669 = vdwg.mxu0
    %v671 = vsel %vm400, %v506, 0
    %v674 = vsel %vm462, %v507, 0
    %676 = vmatprep.subr.bf16.mxu0 0
    %677 = vmatpush1.bf16.msra.mxu0 %v674
    %678 = vmatprep.subr.bf16.mxu0 0
    %679 = vmatpush1.bf16.msra.mxu0 0
    %680 = vmatprep.subr.bf16.mxu0 0
    %681 = vmatpush1.bf16.msra.mxu0 0
    %682 = vmatprep.subr.bf16.mxu0 0
    %683 = vmatpush1.bf16.msra.mxu0 0
    %684 = vmatprep.subr.bf16.mxu0 0
    %685 = vmatpush1.bf16.msra.mxu0 0
    %686 = vmatprep.subr.bf16.mxu0 0
    %687 = vmatpush1.bf16.msra.mxu0 0
    %688 = vmatprep.subr.bf16.mxu0 0
    %689 = vmatpush1.bf16.msra.mxu0 0
    %690 = vmatprep.subr.bf16.mxu0 0
    %691 = vmatpush1.bf16.msra.mxu0 0
    %692 = vmatprep.subr.bf16.mxu0 0
    %693 = vmatpush1.bf16.msra.mxu0 0
    %694 = vmatprep.subr.bf16.mxu0 0
    %695 = vmatpush1.bf16.msra.mxu0 0
    %696 = vmatprep.subr.bf16.mxu0 0
    %697 = vmatpush1.bf16.msra.mxu0 0
    %698 = vmatprep.subr.bf16.mxu0 0
    %699 = vmatpush1.bf16.msra.mxu0 0
    %700 = vmatprep.subr.bf16.mxu0 0
    %701 = vmatpush1.bf16.msra.mxu0 0
    %702 = vmatprep.subr.bf16.mxu0 0
    %703 = vmatpush1.bf16.msra.mxu0 0
    %704 = vmatprep.subr.bf16.mxu0 0
    %705 = vmatpush1.bf16.msra.mxu0 0
    %706 = vmatprep.subr.bf16.mxu0 0
    %707 = vmatpush1.bf16.msra.mxu0 0
    %708 = vmatprep.mubr.bf16.mxu0 0
    %709 = vmatmul.mubr.bf16.gmra.mrb[0].mxu0 %v671
    %v710 = vpop.f32.mrb[0].mxu0
    %v711 = vadd.f32 %v665, %v710
    %v712 = vpop.f32.mrb[0].mxu0
    %v713 = vpop.f32.mrb[0].mxu0
    %v714 = vpop.f32.mrb[0].mxu0
    %715 = vdwg.mxu0
    %716 = vrot.lane.b32.xlu0 %v255, 112
    %v717 = vpop.permute.xlu0 %716
    %718 = vrot.lane.b32.xlu0 %v327, 112
    %v719 = vpop.permute.xlu0 %718
    %v721 = vsel %vm400, %v717, 0
    %v724 = vsel %vm400, %v719, 0
    %726 = vmatprep.subr.bf16.mxu0 0
    %727 = vmatpush1.bf16.xpose.msra.mxu0 %v724
    %728 = vmatprep.subr.bf16.mxu0 0
    %729 = vmatpush1.bf16.xpose.msra.mxu0 0
    %730 = vmatprep.subr.bf16.mxu0 0
    %731 = vmatpush1.bf16.xpose.msra.mxu0 0
    %732 = vmatprep.subr.bf16.mxu0 0
    %733 = vmatpush1.bf16.xpose.msra.mxu0 0
    %734 = vmatprep.subr.bf16.mxu0 0
    %735 = vmatpush1.bf16.xpose.msra.mxu0 0
    %736 = vmatprep.subr.bf16.mxu0 0
    %737 = vmatpush1.bf16.xpose.msra.mxu0 0
    %738 = vmatprep.subr.bf16.mxu0 0
    %739 = vmatpush1.bf16.xpose.msra.mxu0 0
    %740 = vmatprep.subr.bf16.mxu0 0
    %741 = vmatpush1.bf16.xpose.msra.mxu0 0
    %742 = vmatprep.subr.bf16.mxu0 0
    %743 = vmatpush1.bf16.xpose.msra.mxu0 0
    %744 = vmatprep.subr.bf16.mxu0 0
    %745 = vmatpush1.bf16.xpose.msra.mxu0 0
    %746 = vmatprep.subr.bf16.mxu0 0
    %747 = vmatpush1.bf16.xpose.msra.mxu0 0
    %748 = vmatprep.subr.bf16.mxu0 0
    %749 = vmatpush1.bf16.xpose.msra.mxu0 0
    %750 = vmatprep.subr.bf16.mxu0 0
    %751 = vmatpush1.bf16.xpose.msra.mxu0 0
    %752 = vmatprep.subr.bf16.mxu0 0
    %753 = vmatpush1.bf16.xpose.msra.mxu0 0
    %754 = vmatprep.subr.bf16.mxu0 0
    %755 = vmatpush1.bf16.xpose.msra.mxu0 0
    %756 = vmatprep.subr.bf16.mxu0 0
    %757 = vmatpush1.bf16.xpose.msra.mxu0 0
    %758 = vmatprep.mubr.bf16.mxu0 0
    %759 = vmatmul.mubr.bf16.gmra.mrb[0].mxu0 %v721
    %v760 = vpop.f32.mrb[0].mxu0
    %v761 = vadd.f32 0.0, %v760
    %v762 = vpop.f32.mrb[0].mxu0
    %v763 = vpop.f32.mrb[0].mxu0
    %v764 = vpop.f32.mrb[0].mxu0
    %765 = vdwg.mxu0
    %v766 = vsel %vm400, %v761, -inf
    %767 = vmax.xlane.f32.xlu0 %v766
    %v768 = vpop.xlane.xlu0 %767
    %v769 = vsub.f32 %v761, %v768
    %v770 = vmul.f32 %v769, 1.442695
    %v771 = vpow.pop %v770
    %v772 = vsel %vm400, %v771, 0.0
    %773 = vadd.xlane.f32.xlu0 %v772
    %v774 = vpop.xlane.xlu0 %773
    %v775 = vrcp.pop %v774
    %v776 = vmul.f32 %v771, %v775
    %v777 = vpack.c.bf16 %v776, %v776
    %778 = vrot.lane.b32.xlu0 %v399, 112
    %v779 = vpop.permute.xlu0 %778
    %v781 = vsel %vm400, %v777, 0
    %v784 = vsel %vm462, %v779, 0
    %786 = vmatprep.subr.bf16.mxu0 0
    %787 = vmatpush1.bf16.msra.mxu0 %v784
    %788 = vmatprep.subr.bf16.mxu0 0
    %789 = vmatpush1.bf16.msra.mxu0 0
    %790 = vmatprep.subr.bf16.mxu0 0
    %791 = vmatpush1.bf16.msra.mxu0 0
    %792 = vmatprep.subr.bf16.mxu0 0
    %793 = vmatpush1.bf16.msra.mxu0 0
    %794 = vmatprep.subr.bf16.mxu0 0
    %795 = vmatpush1.bf16.msra.mxu0 0
    %796 = vmatprep.subr.bf16.mxu0 0
    %797 = vmatpush1.bf16.msra.mxu0 0
    %798 = vmatprep.subr.bf16.mxu0 0
    %799 = vmatpush1.bf16.msra.mxu0 0
    %800 = vmatprep.subr.bf16.mxu0 0
    %801 = vmatpush1.bf16.msra.mxu0 0
    %802 = vmatprep.subr.bf16.mxu0 0
    %803 = vmatpush1.bf16.msra.mxu0 0
    %804 = vmatprep.subr.bf16.mxu0 0
    %805 = vmatpush1.bf16.msra.mxu0 0
    %806 = vmatprep.subr.bf16.mxu0 0
    %807 = vmatpush1.bf16.msra.mxu0 0
    %808 = vmatprep.subr.bf16.mxu0 0
    %809 = vmatpush1.bf16.msra.mxu0 0
    %810 = vmatprep.subr.bf16.mxu0 0
    %811 = vmatpush1.bf16.msra.mxu0 0
    %812 = vmatprep.subr.bf16.mxu0 0
    %813 = vmatpush1.bf16.msra.mxu0 0
    %814 = vmatprep.subr.bf16.mxu0 0
    %815 = vmatpush1.bf16.msra.mxu0 0
    %816 = vmatprep.subr.bf16.mxu0 0
    %817 = vmatpush1.bf16.msra.mxu0 0
    %818 = vmatprep.mubr.bf16.mxu0 0
    %819 = vmatmul.mubr.bf16.gmra.mrb[0].mxu0 %v781
    %v820 = vpop.f32.mrb[0].mxu0
    %v821 = vadd.f32 0.0, %v820
    %v822 = vpop.f32.mrb[0].mxu0
    %v823 = vpop.f32.mrb[0].mxu0
    %v824 = vpop.f32.mrb[0].mxu0
    %825 = vdwg.mxu0
    %v826 = vpack.c.bf16 %v821, %v821
    %s827 = scalar_lea.vmem [#allocation10], 8
    %v828 = vld [vmem:[%s827] sm:$0xf]
    %v830 = vsel %vm400, %v826, 0
    %v833 = vsel %vm462, %v828, 0
    %835 = vmatprep.subr.bf16.mxu0 0
    %836 = vmatpush1.bf16.msra.mxu0 %v833
    %837 = vmatprep.subr.bf16.mxu0 0
    %838 = vmatpush1.bf16.msra.mxu0 0
    %839 = vmatprep.subr.bf16.mxu0 0
    %840 = vmatpush1.bf16.msra.mxu0 0
    %841 = vmatprep.subr.bf16.mxu0 0
    %842 = vmatpush1.bf16.msra.mxu0 0
    %843 = vmatprep.subr.bf16.mxu0 0
    %844 = vmatpush1.bf16.msra.mxu0 0
    %845 = vmatprep.subr.bf16.mxu0 0
    %846 = vmatpush1.bf16.msra.mxu0 0
    %847 = vmatprep.subr.bf16.mxu0 0
    %848 = vmatpush1.bf16.msra.mxu0 0
    %849 = vmatprep.subr.bf16.mxu0 0
    %850 = vmatpush1.bf16.msra.mxu0 0
    %851 = vmatprep.subr.bf16.mxu0 0
    %852 = vmatpush1.bf16.msra.mxu0 0
    %853 = vmatprep.subr.bf16.mxu0 0
    %854 = vmatpush1.bf16.msra.mxu0 0
    %855 = vmatprep.subr.bf16.mxu0 0
    %856 = vmatpush1.bf16.msra.mxu0 0
    %857 = vmatprep.subr.bf16.mxu0 0
    %858 = vmatpush1.bf16.msra.mxu0 0
    %859 = vmatprep.subr.bf16.mxu0 0
    %860 = vmatpush1.bf16.msra.mxu0 0
    %861 = vmatprep.subr.bf16.mxu0 0
    %862 = vmatpush1.bf16.msra.mxu0 0
    %863 = vmatprep.subr.bf16.mxu0 0
    %864 = vmatpush1.bf16.msra.mxu0 0
    %865 = vmatprep.subr.bf16.mxu0 0
    %866 = vmatpush1.bf16.msra.mxu0 0
    %867 = vmatprep.mubr.bf16.mxu0 0
    %868 = vmatmul.mubr.bf16.gmra.mrb[0].mxu0 %v830
    %v869 = vpop.f32.mrb[0].mxu0
    %v870 = vadd.f32 0.0, %v869
    %v871 = vpop.f32.mrb[0].mxu0
    %v872 = vpop.f32.mrb[0].mxu0
    %v873 = vpop.f32.mrb[0].mxu0
    %874 = vdwg.mxu0
    %v875 = vadd.f32 %v711, %v870
    %876 = vrot.lane.b32.xlu0 %v255, 104
    %v877 = vpop.permute.xlu0 %876
    %878 = vrot.lane.b32.xlu0 %v327, 104
    %v879 = vpop.permute.xlu0 %878
    %v881 = vsel %vm400, %v877, 0
    %v884 = vsel %vm400, %v879, 0
    %886 = vmatprep.subr.bf16.mxu0 0
    %887 = vmatpush1.bf16.xpose.msra.mxu0 %v884
    %888 = vmatprep.subr.bf16.mxu0 0
    %889 = vmatpush1.bf16.xpose.msra.mxu0 0
    %890 = vmatprep.subr.bf16.mxu0 0
    %891 = vmatpush1.bf16.xpose.msra.mxu0 0
    %892 = vmatprep.subr.bf16.mxu0 0
    %893 = vmatpush1.bf16.xpose.msra.mxu0 0
    %894 = vmatprep.subr.bf16.mxu0 0
    %895 = vmatpush1.bf16.xpose.msra.mxu0 0
    %896 = vmatprep.subr.bf16.mxu0 0
    %897 = vmatpush1.bf16.xpose.msra.mxu0 0
    %898 = vmatprep.subr.bf16.mxu0 0
    %899 = vmatpush1.bf16.xpose.msra.mxu0 0
    %900 = vmatprep.subr.bf16.mxu0 0
    %901 = vmatpush1.bf16.xpose.msra.mxu0 0
    %902 = vmatprep.subr.bf16.mxu0 0
    %903 = vmatpush1.bf16.xpose.msra.mxu0 0
    %904 = vmatprep.subr.bf16.mxu0 0
    %905 = vmatpush1.bf16.xpose.msra.mxu0 0
    %906 = vmatprep.subr.bf16.mxu0 0
    %907 = vmatpush1.bf16.xpose.msra.mxu0 0
    %908 = vmatprep.subr.bf16.mxu0 0
    %909 = vmatpush1.bf16.xpose.msra.mxu0 0
    %910 = vmatprep.subr.bf16.mxu0 0
    %911 = vmatpush1.bf16.xpose.msra.mxu0 0
    %912 = vmatprep.subr.bf16.mxu0 0
    %913 = vmatpush1.bf16.xpose.msra.mxu0 0
    %914 = vmatprep.subr.bf16.mxu0 0
    %915 = vmatpush1.bf16.xpose.msra.mxu0 0
    %916 = vmatprep.subr.bf16.mxu0 0
    %917 = vmatpush1.bf16.xpose.msra.mxu0 0
    %918 = vmatprep.mubr.bf16.mxu0 0
    %919 = vmatmul.mubr.bf16.gmra.mrb[0].mxu0 %v881
    %v920 = vpop.f32.mrb[0].mxu0
    %v921 = vadd.f32 0.0, %v920
    %v922 = vpop.f32.mrb[0].mxu0
    %v923 = vpop.f32.mrb[0].mxu0
    %v924 = vpop.f32.mrb[0].mxu0
    %925 = vdwg.mxu0
    %v926 = vsel %vm400, %v921, -inf
    %927 = vmax.xlane.f32.xlu0 %v926
    %v928 = vpop.xlane.xlu0 %927
    %v929 = vsub.f32 %v921, %v928
    %v930 = vmul.f32 %v929, 1.442695
    %v931 = vpow.pop %v930
    %v932 = vsel %vm400, %v931, 0.0
    %933 = vadd.xlane.f32.xlu0 %v932
    %v934 = vpop.xlane.xlu0 %933
    %v935 = vrcp.pop %v934
    %v936 = vmul.f32 %v931, %v935
    %v937 = vpack.c.bf16 %v936, %v936
    %938 = vrot.lane.b32.xlu0 %v399, 104
    %v939 = vpop.permute.xlu0 %938
    %v941 = vsel %vm400, %v937, 0
    %v944 = vsel %vm462, %v939, 0
    %946 = vmatprep.subr.bf16.mxu0 0
    %947 = vmatpush1.bf16.msra.mxu0 %v944
    %948 = vmatprep.subr.bf16.mxu0 0
    %949 = vmatpush1.bf16.msra.mxu0 0
    %950 = vmatprep.subr.bf16.mxu0 0
    %951 = vmatpush1.bf16.msra.mxu0 0
    %952 = vmatprep.subr.bf16.mxu0 0
    %953 = vmatpush1.bf16.msra.mxu0 0
    %954 = vmatprep.subr.bf16.mxu0 0
    %955 = vmatpush1.bf16.msra.mxu0 0
    %956 = vmatprep.subr.bf16.mxu0 0
    %957 = vmatpush1.bf16.msra.mxu0 0
    %958 = vmatprep.subr.bf16.mxu0 0
    %959 = vmatpush1.bf16.msra.mxu0 0
    %960 = vmatprep.subr.bf16.mxu0 0
    %961 = vmatpush1.bf16.msra.mxu0 0
    %962 = vmatprep.subr.bf16.mxu0 0
    %963 = vmatpush1.bf16.msra.mxu0 0
    %964 = vmatprep.subr.bf16.mxu0 0
    %965 = vmatpush1.bf16.msra.mxu0 0
    %966 = vmatprep.subr.bf16.mxu0 0
    %967 = vmatpush1.bf16.msra.mxu0 0
    %968 = vmatprep.subr.bf16.mxu0 0
    %969 = vmatpush1.bf16.msra.mxu0 0
    %970 = vmatprep.subr.bf16.mxu0 0
    %971 = vmatpush1.bf16.msra.mxu0 0
    %972 = vmatprep.subr.bf16.mxu0 0
    %973 = vmatpush1.bf16.msra.mxu0 0
    %974 = vmatprep.subr.bf16.mxu0 0
    %975 = vmatpush1.bf16.msra.mxu0 0
    %976 = vmatprep.subr.bf16.mxu0 0
    %977 = vmatpush1.bf16.msra.mxu0 0
    %978 = vmatprep.mubr.bf16.mxu0 0
    %979 = vmatmul.mubr.bf16.gmra.mrb[0].mxu0 %v941
    %v980 = vpop.f32.mrb[0].mxu0
    %v981 = vadd.f32 0.0, %v980
    %v982 = vpop.f32.mrb[0].mxu0
    %v983 = vpop.f32.mrb[0].mxu0
    %v984 = vpop.f32.mrb[0].mxu0
    %985 = vdwg.mxu0
    %v986 = vpack.c.bf16 %v981, %v981
    %s987 = scalar_lea.vmem [#allocation10], 12
    %v988 = vld [vmem:[%s987] sm:$0xf]
    %v990 = vsel %vm400, %v986, 0
    %v993 = vsel %vm462, %v988, 0
    %995 = vmatprep.subr.bf16.mxu0 0
    %996 = vmatpush1.bf16.msra.mxu0 %v993
    %997 = vmatprep.subr.bf16.mxu0 0
    %998 = vmatpush1.bf16.msra.mxu0 0
    %999 = vmatprep.subr.bf16.mxu0 0
    %1000 = vmatpush1.bf16.msra.mxu0 0
    %1001 = vmatprep.subr.bf16.mxu0 0
    %1002 = vmatpush1.bf16.msra.mxu0 0
    %1003 = vmatprep.subr.bf16.mxu0 0
    %1004 = vmatpush1.bf16.msra.mxu0 0
    %1005 = vmatprep.subr.bf16.mxu0 0
    %1006 = vmatpush1.bf16.msra.mxu0 0
    %1007 = vmatprep.subr.bf16.mxu0 0
    %1008 = vmatpush1.bf16.msra.mxu0 0
    %1009 = vmatprep.subr.bf16.mxu0 0
    %1010 = vmatpush1.bf16.msra.mxu0 0
    %1011 = vmatprep.subr.bf16.mxu0 0
    %1012 = vmatpush1.bf16.msra.mxu0 0
    %1013 = vmatprep.subr.bf16.mxu0 0
    %1014 = vmatpush1.bf16.msra.mxu0 0
    %1015 = vmatprep.subr.bf16.mxu0 0
    %1016 = vmatpush1.bf16.msra.mxu0 0
    %1017 = vmatprep.subr.bf16.mxu0 0
    %1018 = vmatpush1.bf16.msra.mxu0 0
    %1019 = vmatprep.subr.bf16.mxu0 0
    %1020 = vmatpush1.bf16.msra.mxu0 0
    %1021 = vmatprep.subr.bf16.mxu0 0
    %1022 = vmatpush1.bf16.msra.mxu0 0
    %1023 = vmatprep.subr.bf16.mxu0 0
    %1024 = vmatpush1.bf16.msra.mxu0 0
    %1025 = vmatprep.subr.bf16.mxu0 0
    %1026 = vmatpush1.bf16.msra.mxu0 0
    %1027 = vmatprep.mubr.bf16.mxu0 0
    %1028 = vmatmul.mubr.bf16.gmra.mrb[0].mxu0 %v990
    %v1029 = vpop.f32.mrb[0].mxu0
    %v1030 = vadd.f32 0.0, %v1029
    %v1031 = vpop.f32.mrb[0].mxu0
    %v1032 = vpop.f32.mrb[0].mxu0
    %v1033 = vpop.f32.mrb[0].mxu0
    %1034 = vdwg.mxu0
    %v1035 = vadd.f32 %v875, %v1030
    %1036 = vrot.lane.b32.xlu0 %v255, 96
    %v1037 = vpop.permute.xlu0 %1036
    %1038 = vrot.lane.b32.xlu0 %v327, 96
    %v1039 = vpop.permute.xlu0 %1038
    %v1041 = vsel %vm400, %v1037, 0
    %v1044 = vsel %vm400, %v1039, 0
    %1046 = vmatprep.subr.bf16.mxu0 0
    %1047 = vmatpush1.bf16.xpose.msra.mxu0 %v1044
    %1048 = vmatprep.subr.bf16.mxu0 0
    %1049 = vmatpush1.bf16.xpose.msra.mxu0 0
    %1050 = vmatprep.subr.bf16.mxu0 0
    %1051 = vmatpush1.bf16.xpose.msra.mxu0 0
    %1052 = vmatprep.subr.bf16.mxu0 0
    %1053 = vmatpush1.bf16.xpose.msra.mxu0 0
    %1054 = vmatprep.subr.bf16.mxu0 0
    %1055 = vmatpush1.bf16.xpose.msra.mxu0 0
    %1056 = vmatprep.subr.bf16.mxu0 0
    %1057 = vmatpush1.bf16.xpose.msra.mxu0 0
    %1058 = vmatprep.subr.bf16.mxu0 0
    %1059 = vmatpush1.bf16.xpose.msra.mxu0 0
    %1060 = vmatprep.subr.bf16.mxu0 0
    %1061 = vmatpush1.bf16.xpose.msra.mxu0 0
    %1062 = vmatprep.subr.bf16.mxu0 0
    %1063 = vmatpush1.bf16.xpose.msra.mxu0 0
    %1064 = vmatprep.subr.bf16.mxu0 0
    %1065 = vmatpush1.bf16.xpose.msra.mxu0 0
    %1066 = vmatprep.subr.bf16.mxu0 0
    %1067 = vmatpush1.bf16.xpose.msra.mxu0 0
    %1068 = vmatprep.subr.bf16.mxu0 0
    %1069 = vmatpush1.bf16.xpose.msra.mxu0 0
    %1070 = vmatprep.subr.bf16.mxu0 0
    %1071 = vmatpush1.bf16.xpose.msra.mxu0 0
    %1072 = vmatprep.subr.bf16.mxu0 0
    %1073 = vmatpush1.bf16.xpose.msra.mxu0 0
    %1074 = vmatprep.subr.bf16.mxu0 0
    %1075 = vmatpush1.bf16.xpose.msra.mxu0 0
    %1076 = vmatprep.subr.bf16.mxu0 0
    %1077 = vmatpush1.bf16.xpose.msra.mxu0 0
    %1078 = vmatprep.mubr.bf16.mxu0 0
    %1079 = vmatmul.mubr.bf16.gmra.mrb[0].mxu0 %v1041
    %v1080 = vpop.f32.mrb[0].mxu0
    %v1081 = vadd.f32 0.0, %v1080
    %v1082 = vpop.f32.mrb[0].mxu0
    %v1083 = vpop.f32.mrb[0].mxu0
    %v1084 = vpop.f32.mrb[0].mxu0
    %1085 = vdwg.mxu0
    %v1086 = vsel %vm400, %v1081, -inf
    %1087 = vmax.xlane.f32.xlu0 %v1086
    %v1088 = vpop.xlane.xlu0 %1087
    %v1089 = vsub.f32 %v1081, %v1088
    %v1090 = vmul.f32 %v1089, 1.442695
    %v1091 = vpow.pop %v1090
    %v1092 = vsel %vm400, %v1091, 0.0
    %1093 = vadd.xlane.f32.xlu0 %v1092
    %v1094 = vpop.xlane.xlu0 %1093
    %v1095 = vrcp.pop %v1094
    %v1096 = vmul.f32 %v1091, %v1095
    %v1097 = vpack.c.bf16 %v1096, %v1096
    %1098 = vrot.lane.b32.xlu0 %v399, 96
    %v1099 = vpop.permute.xlu0 %1098
    %v1101 = vsel %vm400, %v1097, 0
    %v1104 = vsel %vm462, %v1099, 0
    %1106 = vmatprep.subr.bf16.mxu0 0
    %1107 = vmatpush1.bf16.msra.mxu0 %v1104
    %1108 = vmatprep.subr.bf16.mxu0 0
    %1109 = vmatpush1.bf16.msra.mxu0 0
    %1110 = vmatprep.subr.bf16.mxu0 0
    %1111 = vmatpush1.bf16.msra.mxu0 0
    %1112 = vmatprep.subr.bf16.mxu0 0
    %1113 = vmatpush1.bf16.msra.mxu0 0
    %1114 = vmatprep.subr.bf16.mxu0 0
    %1115 = vmatpush1.bf16.msra.mxu0 0
    %1116 = vmatprep.subr.bf16.mxu0 0
    %1117 = vmatpush1.bf16.msra.mxu0 0
    %1118 = vmatprep.subr.bf16.mxu0 0
    %1119 = vmatpush1.bf16.msra.mxu0 0
    %1120 = vmatprep.subr.bf16.mxu0 0
    %1121 = vmatpush1.bf16.msra.mxu0 0
    %1122 = vmatprep.subr.bf16.mxu0 0
    %1123 = vmatpush1.bf16.msra.mxu0 0
    %1124 = vmatprep.subr.bf16.mxu0 0
    %1125 = vmatpush1.bf16.msra.mxu0 0
    %1126 = vmatprep.subr.bf16.mxu0 0
    %1127 = vmatpush1.bf16.msra.mxu0 0
    %1128 = vmatprep.subr.bf16.mxu0 0
    %1129 = vmatpush1.bf16.msra.mxu0 0
    %1130 = vmatprep.subr.bf16.mxu0 0
    %1131 = vmatpush1.bf16.msra.mxu0 0
    %1132 = vmatprep.subr.bf16.mxu0 0
    %1133 = vmatpush1.bf16.msra.mxu0 0
    %1134 = vmatprep.subr.bf16.mxu0 0
    %1135 = vmatpush1.bf16.msra.mxu0 0
    %1136 = vmatprep.subr.bf16.mxu0 0
    %1137 = vmatpush1.bf16.msra.mxu0 0
    %1138 = vmatprep.mubr.bf16.mxu0 0
    %1139 = vmatmul.mubr.bf16.gmra.mrb[0].mxu0 %v1101
    %v1140 = vpop.f32.mrb[0].mxu0
    %v1141 = vadd.f32 0.0, %v1140
    %v1142 = vpop.f32.mrb[0].mxu0
    %v1143 = vpop.f32.mrb[0].mxu0
    %v1144 = vpop.f32.mrb[0].mxu0
    %1145 = vdwg.mxu0
    %v1146 = vpack.c.bf16 %v1141, %v1141
    %s1147 = scalar_lea.vmem [#allocation10], 16
    %v1148 = vld [vmem:[%s1147] sm:$0xf]
    %v1150 = vsel %vm400, %v1146, 0
    %v1153 = vsel %vm462, %v1148, 0
    %1155 = vmatprep.subr.bf16.mxu0 0
    %1156 = vmatpush1.bf16.msra.mxu0 %v1153
    %1157 = vmatprep.subr.bf16.mxu0 0
    %1158 = vmatpush1.bf16.msra.mxu0 0
    %1159 = vmatprep.subr.bf16.mxu0 0
    %1160 = vmatpush1.bf16.msra.mxu0 0
    %1161 = vmatprep.subr.bf16.mxu0 0
    %1162 = vmatpush1.bf16.msra.mxu0 0
    %1163 = vmatprep.subr.bf16.mxu0 0
    %1164 = vmatpush1.bf16.msra.mxu0 0
    %1165 = vmatprep.subr.bf16.mxu0 0
    %1166 = vmatpush1.bf16.msra.mxu0 0
    %1167 = vmatprep.subr.bf16.mxu0 0
    %1168 = vmatpush1.bf16.msra.mxu0 0
    %1169 = vmatprep.subr.bf16.mxu0 0
    %1170 = vmatpush1.bf16.msra.mxu0 0
    %1171 = vmatprep.subr.bf16.mxu0 0
    %1172 = vmatpush1.bf16.msra.mxu0 0
    %1173 = vmatprep.subr.bf16.mxu0 0
    %1174 = vmatpush1.bf16.msra.mxu0 0
    %1175 = vmatprep.subr.bf16.mxu0 0
    %1176 = vmatpush1.bf16.msra.mxu0 0
    %1177 = vmatprep.subr.bf16.mxu0 0
    %1178 = vmatpush1.bf16.msra.mxu0 0
    %1179 = vmatprep.subr.bf16.mxu0 0
    %1180 = vmatpush1.bf16.msra.mxu0 0
    %1181 = vmatprep.subr.bf16.mxu0 0
    %1182 = vmatpush1.bf16.msra.mxu0 0
    %1183 = vmatprep.subr.bf16.mxu0 0
    %1184 = vmatpush1.bf16.msra.mxu0 0
    %1185 = vmatprep.subr.bf16.mxu0 0
    %1186 = vmatpush1.bf16.msra.mxu0 0
    %1187 = vmatprep.mubr.bf16.mxu0 0
    %1188 = vmatmul.mubr.bf16.gmra.mrb[0].mxu0 %v1150
    %v1189 = vpop.f32.mrb[0].mxu0
    %v1190 = vadd.f32 0.0, %v1189
    %v1191 = vpop.f32.mrb[0].mxu0
    %v1192 = vpop.f32.mrb[0].mxu0
    %v1193 = vpop.f32.mrb[0].mxu0
    %1194 = vdwg.mxu0
    %v1195 = vadd.f32 %v1035, %v1190
    %1196 = vrot.lane.b32.xlu0 %v255, 88
    %v1197 = vpop.permute.xlu0 %1196
    %1198 = vrot.lane.b32.xlu0 %v327, 88
    %v1199 = vpop.permute.xlu0 %1198
    %v1201 = vsel %vm400, %v1197, 0
    %v1204 = vsel %vm400, %v1199, 0
    %1206 = vmatprep.subr.bf16.mxu0 0
    %1207 = vmatpush1.bf16.xpose.msra.mxu0 %v1204
    %1208 = vmatprep.subr.bf16.mxu0 0
    %1209 = vmatpush1.bf16.xpose.msra.mxu0 0
    %1210 = vmatprep.subr.bf16.mxu0 0
    %1211 = vmatpush1.bf16.xpose.msra.mxu0 0
    %1212 = vmatprep.subr.bf16.mxu0 0
    %1213 = vmatpush1.bf16.xpose.msra.mxu0 0
    %1214 = vmatprep.subr.bf16.mxu0 0
    %1215 = vmatpush1.bf16.xpose.msra.mxu0 0
    %1216 = vmatprep.subr.bf16.mxu0 0
    %1217 = vmatpush1.bf16.xpose.msra.mxu0 0
    %1218 = vmatprep.subr.bf16.mxu0 0
    %1219 = vmatpush1.bf16.xpose.msra.mxu0 0
    %1220 = vmatprep.subr.bf16.mxu0 0
    %1221 = vmatpush1.bf16.xpose.msra.mxu0 0
    %1222 = vmatprep.subr.bf16.mxu0 0
    %1223 = vmatpush1.bf16.xpose.msra.mxu0 0
    %1224 = vmatprep.subr.bf16.mxu0 0
    %1225 = vmatpush1.bf16.xpose.msra.mxu0 0
    %1226 = vmatprep.subr.bf16.mxu0 0
    %1227 = vmatpush1.bf16.xpose.msra.mxu0 0
    %1228 = vmatprep.subr.bf16.mxu0 0
    %1229 = vmatpush1.bf16.xpose.msra.mxu0 0
    %1230 = vmatprep.subr.bf16.mxu0 0
    %1231 = vmatpush1.bf16.xpose.msra.mxu0 0
    %1232 = vmatprep.subr.bf16.mxu0 0
    %1233 = vmatpush1.bf16.xpose.msra.mxu0 0
    %1234 = vmatprep.subr.bf16.mxu0 0
    %1235 = vmatpush1.bf16.xpose.msra.mxu0 0
    %1236 = vmatprep.subr.bf16.mxu0 0
    %1237 = vmatpush1.bf16.xpose.msra.mxu0 0
    %1238 = vmatprep.mubr.bf16.mxu0 0
    %1239 = vmatmul.mubr.bf16.gmra.mrb[0].mxu0 %v1201
    %v1240 = vpop.f32.mrb[0].mxu0
    %v1241 = vadd.f32 0.0, %v1240
    %v1242 = vpop.f32.mrb[0].mxu0
    %v1243 = vpop.f32.mrb[0].mxu0
    %v1244 = vpop.f32.mrb[0].mxu0
    %1245 = vdwg.mxu0
    %v1246 = vsel %vm400, %v1241, -inf
    %1247 = vmax.xlane.f32.xlu0 %v1246
    %v1248 = vpop.xlane.xlu0 %1247
    %v1249 = vsub.f32 %v1241, %v1248
    %v1250 = vmul.f32 %v1249, 1.442695
    %v1251 = vpow.pop %v1250
    %v1252 = vsel %vm400, %v1251, 0.0
    %1253 = vadd.xlane.f32.xlu0 %v1252
    %v1254 = vpop.xlane.xlu0 %1253
    %v1255 = vrcp.pop %v1254
    %v1256 = vmul.f32 %v1251, %v1255
    %v1257 = vpack.c.bf16 %v1256, %v1256
    %1258 = vrot.lane.b32.xlu0 %v399, 88
    %v1259 = vpop.permute.xlu0 %1258
    %v1261 = vsel %vm400, %v1257, 0
    %v1264 = vsel %vm462, %v1259, 0
    %1266 = vmatprep.subr.bf16.mxu0 0
    %1267 = vmatpush1.bf16.msra.mxu0 %v1264
    %1268 = vmatprep.subr.bf16.mxu0 0
    %1269 = vmatpush1.bf16.msra.mxu0 0
    %1270 = vmatprep.subr.bf16.mxu0 0
    %1271 = vmatpush1.bf16.msra.mxu0 0
    %1272 = vmatprep.subr.bf16.mxu0 0
    %1273 = vmatpush1.bf16.msra.mxu0 0
    %1274 = vmatprep.subr.bf16.mxu0 0
    %1275 = vmatpush1.bf16.msra.mxu0 0
    %1276 = vmatprep.subr.bf16.mxu0 0
    %1277 = vmatpush1.bf16.msra.mxu0 0
    %1278 = vmatprep.subr.bf16.mxu0 0
    %1279 = vmatpush1.bf16.msra.mxu0 0
    %1280 = vmatprep.subr.bf16.mxu0 0
    %1281 = vmatpush1.bf16.msra.mxu0 0
    %1282 = vmatprep.subr.bf16.mxu0 0
    %1283 = vmatpush1.bf16.msra.mxu0 0
    %1284 = vmatprep.subr.bf16.mxu0 0
    %1285 = vmatpush1.bf16.msra.mxu0 0
    %1286 = vmatprep.subr.bf16.mxu0 0
    %1287 = vmatpush1.bf16.msra.mxu0 0
    %1288 = vmatprep.subr.bf16.mxu0 0
    %1289 = vmatpush1.bf16.msra.mxu0 0
    %1290 = vmatprep.subr.bf16.mxu0 0
    %1291 = vmatpush1.bf16.msra.mxu0 0
    %1292 = vmatprep.subr.bf16.mxu0 0
    %1293 = vmatpush1.bf16.msra.mxu0 0
    %1294 = vmatprep.subr.bf16.mxu0 0
    %1295 = vmatpush1.bf16.msra.mxu0 0
    %1296 = vmatprep.subr.bf16.mxu0 0
    %1297 = vmatpush1.bf16.msra.mxu0 0
    %1298 = vmatprep.mubr.bf16.mxu0 0
    %1299 = vmatmul.mubr.bf16.gmra.mrb[0].mxu0 %v1261
    %v1300 = vpop.f32.mrb[0].mxu0
    %v1301 = vadd.f32 0.0, %v1300
    %v1302 = vpop.f32.mrb[0].mxu0
    %v1303 = vpop.f32.mrb[0].mxu0
    %v1304 = vpop.f32.mrb[0].mxu0
    %1305 = vdwg.mxu0
    %v1306 = vpack.c.bf16 %v1301, %v1301
    %s1307 = scalar_lea.vmem [#allocation10], 20
    %v1308 = vld [vmem:[%s1307] sm:$0xf]
    %v1310 = vsel %vm400, %v1306, 0
    %v1313 = vsel %vm462, %v1308, 0
    %1315 = vmatprep.subr.bf16.mxu0 0
    %1316 = vmatpush1.bf16.msra.mxu0 %v1313
    %1317 = vmatprep.subr.bf16.mxu0 0
    %1318 = vmatpush1.bf16.msra.mxu0 0
    %1319 = vmatprep.subr.bf16.mxu0 0
    %1320 = vmatpush1.bf16.msra.mxu0 0
    %1321 = vmatprep.subr.bf16.mxu0 0
    %1322 = vmatpush1.bf16.msra.mxu0 0
    %1323 = vmatprep.subr.bf16.mxu0 0
    %1324 = vmatpush1.bf16.msra.mxu0 0
    %1325 = vmatprep.subr.bf16.mxu0 0
    %1326 = vmatpush1.bf16.msra.mxu0 0
    %1327 = vmatprep.subr.bf16.mxu0 0
    %1328 = vmatpush1.bf16.msra.mxu0 0
    %1329 = vmatprep.subr.bf16.mxu0 0
    %1330 = vmatpush1.bf16.msra.mxu0 0
    %1331 = vmatprep.subr.bf16.mxu0 0
    %1332 = vmatpush1.bf16.msra.mxu0 0
    %1333 = vmatprep.subr.bf16.mxu0 0
    %1334 = vmatpush1.bf16.msra.mxu0 0
    %1335 = vmatprep.subr.bf16.mxu0 0
    %1336 = vmatpush1.bf16.msra.mxu0 0
    %1337 = vmatprep.subr.bf16.mxu0 0
    %1338 = vmatpush1.bf16.msra.mxu0 0
    %1339 = vmatprep.subr.bf16.mxu0 0
    %1340 = vmatpush1.bf16.msra.mxu0 0
    %1341 = vmatprep.subr.bf16.mxu0 0
    %1342 = vmatpush1.bf16.msra.mxu0 0
    %1343 = vmatprep.subr.bf16.mxu0 0
    %1344 = vmatpush1.bf16.msra.mxu0 0
    %1345 = vmatprep.subr.bf16.mxu0 0
    %1346 = vmatpush1.bf16.msra.mxu0 0
    %1347 = vmatprep.mubr.bf16.mxu0 0
    %1348 = vmatmul.mubr.bf16.gmra.mrb[0].mxu0 %v1310
    %v1349 = vpop.f32.mrb[0].mxu0
    %v1350 = vadd.f32 0.0, %v1349
    %v1351 = vpop.f32.mrb[0].mxu0
    %v1352 = vpop.f32.mrb[0].mxu0
    %v1353 = vpop.f32.mrb[0].mxu0
    %1354 = vdwg.mxu0
    %v1355 = vadd.f32 %v1195, %v1350
    %1356 = vrot.lane.b32.xlu0 %v255, 80
    %v1357 = vpop.permute.xlu0 %1356
    %1358 = vrot.lane.b32.xlu0 %v327, 80
    %v1359 = vpop.permute.xlu0 %1358
    %v1361 = vsel %vm400, %v1357, 0
    %v1364 = vsel %vm400, %v1359, 0
    %1366 = vmatprep.subr.bf16.mxu0 0
    %1367 = vmatpush1.bf16.xpose.msra.mxu0 %v1364
    %1368 = vmatprep.subr.bf16.mxu0 0
    %1369 = vmatpush1.bf16.xpose.msra.mxu0 0
    %1370 = vmatprep.subr.bf16.mxu0 0
    %1371 = vmatpush1.bf16.xpose.msra.mxu0 0
    %1372 = vmatprep.subr.bf16.mxu0 0
    %1373 = vmatpush1.bf16.xpose.msra.mxu0 0
    %1374 = vmatprep.subr.bf16.mxu0 0
    %1375 = vmatpush1.bf16.xpose.msra.mxu0 0
    %1376 = vmatprep.subr.bf16.mxu0 0
    %1377 = vmatpush1.bf16.xpose.msra.mxu0 0
    %1378 = vmatprep.subr.bf16.mxu0 0
    %1379 = vmatpush1.bf16.xpose.msra.mxu0 0
    %1380 = vmatprep.subr.bf16.mxu0 0
    %1381 = vmatpush1.bf16.xpose.msra.mxu0 0
    %1382 = vmatprep.subr.bf16.mxu0 0
    %1383 = vmatpush1.bf16.xpose.msra.mxu0 0
    %1384 = vmatprep.subr.bf16.mxu0 0
    %1385 = vmatpush1.bf16.xpose.msra.mxu0 0
    %1386 = vmatprep.subr.bf16.mxu0 0
    %1387 = vmatpush1.bf16.xpose.msra.mxu0 0
    %1388 = vmatprep.subr.bf16.mxu0 0
    %1389 = vmatpush1.bf16.xpose.msra.mxu0 0
    %1390 = vmatprep.subr.bf16.mxu0 0
    %1391 = vmatpush1.bf16.xpose.msra.mxu0 0
    %1392 = vmatprep.subr.bf16.mxu0 0
    %1393 = vmatpush1.bf16.xpose.msra.mxu0 0
    %1394 = vmatprep.subr.bf16.mxu0 0
    %1395 = vmatpush1.bf16.xpose.msra.mxu0 0
    %1396 = vmatprep.subr.bf16.mxu0 0
    %1397 = vmatpush1.bf16.xpose.msra.mxu0 0
    %1398 = vmatprep.mubr.bf16.mxu0 0
    %1399 = vmatmul.mubr.bf16.gmra.mrb[0].mxu0 %v1361
    %v1400 = vpop.f32.mrb[0].mxu0
    %v1401 = vadd.f32 0.0, %v1400
    %v1402 = vpop.f32.mrb[0].mxu0
    %v1403 = vpop.f32.mrb[0].mxu0
    %v1404 = vpop.f32.mrb[0].mxu0
    %1405 = vdwg.mxu0
    %v1406 = vsel %vm400, %v1401, -inf
    %1407 = vmax.xlane.f32.xlu0 %v1406
    %v1408 = vpop.xlane.xlu0 %1407
    %v1409 = vsub.f32 %v1401, %v1408
    %v1410 = vmul.f32 %v1409, 1.442695
    %v1411 = vpow.pop %v1410
    %v1412 = vsel %vm400, %v1411, 0.0
    %1413 = vadd.xlane.f32.xlu0 %v1412
    %v1414 = vpop.xlane.xlu0 %1413
    %v1415 = vrcp.pop %v1414
    %v1416 = vmul.f32 %v1411, %v1415
    %v1417 = vpack.c.bf16 %v1416, %v1416
    %1418 = vrot.lane.b32.xlu0 %v399, 80
    %v1419 = vpop.permute.xlu0 %1418
    %v1421 = vsel %vm400, %v1417, 0
    %v1424 = vsel %vm462, %v1419, 0
    %1426 = vmatprep.subr.bf16.mxu0 0
    %1427 = vmatpush1.bf16.msra.mxu0 %v1424
    %1428 = vmatprep.subr.bf16.mxu0 0
    %1429 = vmatpush1.bf16.msra.mxu0 0
    %1430 = vmatprep.subr.bf16.mxu0 0
    %1431 = vmatpush1.bf16.msra.mxu0 0
    %1432 = vmatprep.subr.bf16.mxu0 0
    %1433 = vmatpush1.bf16.msra.mxu0 0
    %1434 = vmatprep.subr.bf16.mxu0 0
    %1435 = vmatpush1.bf16.msra.mxu0 0
    %1436 = vmatprep.subr.bf16.mxu0 0
    %1437 = vmatpush1.bf16.msra.mxu0 0
    %1438 = vmatprep.subr.bf16.mxu0 0
    %1439 = vmatpush1.bf16.msra.mxu0 0
    %1440 = vmatprep.subr.bf16.mxu0 0
    %1441 = vmatpush1.bf16.msra.mxu0 0
    %1442 = vmatprep.subr.bf16.mxu0 0
    %1443 = vmatpush1.bf16.msra.mxu0 0
    %1444 = vmatprep.subr.bf16.mxu0 0
    %1445 = vmatpush1.bf16.msra.mxu0 0
    %1446 = vmatprep.subr.bf16.mxu0 0
    %1447 = vmatpush1.bf16.msra.mxu0 0
    %1448 = vmatprep.subr.bf16.mxu0 0
    %1449 = vmatpush1.bf16.msra.mxu0 0
    %1450 = vmatprep.subr.bf16.mxu0 0
    %1451 = vmatpush1.bf16.msra.mxu0 0
    %1452 = vmatprep.subr.bf16.mxu0 0
    %1453 = vmatpush1.bf16.msra.mxu0 0
    %1454 = vmatprep.subr.bf16.mxu0 0
    %1455 = vmatpush1.bf16.msra.mxu0 0
    %1456 = vmatprep.subr.bf16.mxu0 0
    %1457 = vmatpush1.bf16.msra.mxu0 0
    %1458 = vmatprep.mubr.bf16.mxu0 0
    %1459 = vmatmul.mubr.bf16.gmra.mrb[0].mxu0 %v1421
    %v1460 = vpop.f32.mrb[0].mxu0
    %v1461 = vadd.f32 0.0, %v1460
    %v1462 = vpop.f32.mrb[0].mxu0
    %v1463 = vpop.f32.mrb[0].mxu0
    %v1464 = vpop.f32.mrb[0].mxu0
    %1465 = vdwg.mxu0
    %v1466 = vpack.c.bf16 %v1461, %v1461
    %s1467 = scalar_lea.vmem [#allocation10], 24
    %v1468 = vld [vmem:[%s1467] sm:$0xf]
    %v1470 = vsel %vm400, %v1466, 0
    %v1473 = vsel %vm462, %v1468, 0
    %1475 = vmatprep.subr.bf16.mxu0 0
    %1476 = vmatpush1.bf16.msra.mxu0 %v1473
    %1477 = vmatprep.subr.bf16.mxu0 0
    %1478 = vmatpush1.bf16.msra.mxu0 0
    %1479 = vmatprep.subr.bf16.mxu0 0
    %1480 = vmatpush1.bf16.msra.mxu0 0
    %1481 = vmatprep.subr.bf16.mxu0 0
    %1482 = vmatpush1.bf16.msra.mxu0 0
    %1483 = vmatprep.subr.bf16.mxu0 0
    %1484 = vmatpush1.bf16.msra.mxu0 0
    %1485 = vmatprep.subr.bf16.mxu0 0
    %1486 = vmatpush1.bf16.msra.mxu0 0
    %1487 = vmatprep.subr.bf16.mxu0 0
    %1488 = vmatpush1.bf16.msra.mxu0 0
    %1489 = vmatprep.subr.bf16.mxu0 0
    %1490 = vmatpush1.bf16.msra.mxu0 0
    %1491 = vmatprep.subr.bf16.mxu0 0
    %1492 = vmatpush1.bf16.msra.mxu0 0
    %1493 = vmatprep.subr.bf16.mxu0 0
    %1494 = vmatpush1.bf16.msra.mxu0 0
    %1495 = vmatprep.subr.bf16.mxu0 0
    %1496 = vmatpush1.bf16.msra.mxu0 0
    %1497 = vmatprep.subr.bf16.mxu0 0
    %1498 = vmatpush1.bf16.msra.mxu0 0
    %1499 = vmatprep.subr.bf16.mxu0 0
    %1500 = vmatpush1.bf16.msra.mxu0 0
    %1501 = vmatprep.subr.bf16.mxu0 0
    %1502 = vmatpush1.bf16.msra.mxu0 0
    %1503 = vmatprep.subr.bf16.mxu0 0
    %1504 = vmatpush1.bf16.msra.mxu0 0
    %1505 = vmatprep.subr.bf16.mxu0 0
    %1506 = vmatpush1.bf16.msra.mxu0 0
    %1507 = vmatprep.mubr.bf16.mxu0 0
    %1508 = vmatmul.mubr.bf16.gmra.mrb[0].mxu0 %v1470
    %v1509 = vpop.f32.mrb[0].mxu0
    %v1510 = vadd.f32 0.0, %v1509
    %v1511 = vpop.f32.mrb[0].mxu0
    %v1512 = vpop.f32.mrb[0].mxu0
    %v1513 = vpop.f32.mrb[0].mxu0
    %1514 = vdwg.mxu0
    %v1515 = vadd.f32 %v1355, %v1510
    %1516 = vrot.lane.b32.xlu0 %v255, 72
    %v1517 = vpop.permute.xlu0 %1516
    %1518 = vrot.lane.b32.xlu0 %v327, 72
    %v1519 = vpop.permute.xlu0 %1518
    %v1521 = vsel %vm400, %v1517, 0
    %v1524 = vsel %vm400, %v1519, 0
    %1526 = vmatprep.subr.bf16.mxu0 0
    %1527 = vmatpush1.bf16.xpose.msra.mxu0 %v1524
    %1528 = vmatprep.subr.bf16.mxu0 0
    %1529 = vmatpush1.bf16.xpose.msra.mxu0 0
    %1530 = vmatprep.subr.bf16.mxu0 0
    %1531 = vmatpush1.bf16.xpose.msra.mxu0 0
    %1532 = vmatprep.subr.bf16.mxu0 0
    %1533 = vmatpush1.bf16.xpose.msra.mxu0 0
    %1534 = vmatprep.subr.bf16.mxu0 0
    %1535 = vmatpush1.bf16.xpose.msra.mxu0 0
    %1536 = vmatprep.subr.bf16.mxu0 0
    %1537 = vmatpush1.bf16.xpose.msra.mxu0 0
    %1538 = vmatprep.subr.bf16.mxu0 0
    %1539 = vmatpush1.bf16.xpose.msra.mxu0 0
    %1540 = vmatprep.subr.bf16.mxu0 0
    %1541 = vmatpush1.bf16.xpose.msra.mxu0 0
    %1542 = vmatprep.subr.bf16.mxu0 0
    %1543 = vmatpush1.bf16.xpose.msra.mxu0 0
    %1544 = vmatprep.subr.bf16.mxu0 0
    %1545 = vmatpush1.bf16.xpose.msra.mxu0 0
    %1546 = vmatprep.subr.bf16.mxu0 0
    %1547 = vmatpush1.bf16.xpose.msra.mxu0 0
    %1548 = vmatprep.subr.bf16.mxu0 0
    %1549 = vmatpush1.bf16.xpose.msra.mxu0 0
    %1550 = vmatprep.subr.bf16.mxu0 0
    %1551 = vmatpush1.bf16.xpose.msra.mxu0 0
    %1552 = vmatprep.subr.bf16.mxu0 0
    %1553 = vmatpush1.bf16.xpose.msra.mxu0 0
    %1554 = vmatprep.subr.bf16.mxu0 0
    %1555 = vmatpush1.bf16.xpose.msra.mxu0 0
    %1556 = vmatprep.subr.bf16.mxu0 0
    %1557 = vmatpush1.bf16.xpose.msra.mxu0 0
    %1558 = vmatprep.mubr.bf16.mxu0 0
    %1559 = vmatmul.mubr.bf16.gmra.mrb[0].mxu0 %v1521
    %v1560 = vpop.f32.mrb[0].mxu0
    %v1561 = vadd.f32 0.0, %v1560
    %v1562 = vpop.f32.mrb[0].mxu0
    %v1563 = vpop.f32.mrb[0].mxu0
    %v1564 = vpop.f32.mrb[0].mxu0
    %1565 = vdwg.mxu0
    %v1566 = vsel %vm400, %v1561, -inf
    %1567 = vmax.xlane.f32.xlu0 %v1566
    %v1568 = vpop.xlane.xlu0 %1567
    %v1569 = vsub.f32 %v1561, %v1568
    %v1570 = vmul.f32 %v1569, 1.442695
    %v1571 = vpow.pop %v1570
    %v1572 = vsel %vm400, %v1571, 0.0
    %1573 = vadd.xlane.f32.xlu0 %v1572
    %v1574 = vpop.xlane.xlu0 %1573
    %v1575 = vrcp.pop %v1574
    %v1576 = vmul.f32 %v1571, %v1575
    %v1577 = vpack.c.bf16 %v1576, %v1576
    %1578 = vrot.lane.b32.xlu0 %v399, 72
    %v1579 = vpop.permute.xlu0 %1578
    %v1581 = vsel %vm400, %v1577, 0
    %v1584 = vsel %vm462, %v1579, 0
    %1586 = vmatprep.subr.bf16.mxu0 0
    %1587 = vmatpush1.bf16.msra.mxu0 %v1584
    %1588 = vmatprep.subr.bf16.mxu0 0
    %1589 = vmatpush1.bf16.msra.mxu0 0
    %1590 = vmatprep.subr.bf16.mxu0 0
    %1591 = vmatpush1.bf16.msra.mxu0 0
    %1592 = vmatprep.subr.bf16.mxu0 0
    %1593 = vmatpush1.bf16.msra.mxu0 0
    %1594 = vmatprep.subr.bf16.mxu0 0
    %1595 = vmatpush1.bf16.msra.mxu0 0
    %1596 = vmatprep.subr.bf16.mxu0 0
    %1597 = vmatpush1.bf16.msra.mxu0 0
    %1598 = vmatprep.subr.bf16.mxu0 0
    %1599 = vmatpush1.bf16.msra.mxu0 0
    %1600 = vmatprep.subr.bf16.mxu0 0
    %1601 = vmatpush1.bf16.msra.mxu0 0
    %1602 = vmatprep.subr.bf16.mxu0 0
    %1603 = vmatpush1.bf16.msra.mxu0 0
    %1604 = vmatprep.subr.bf16.mxu0 0
    %1605 = vmatpush1.bf16.msra.mxu0 0
    %1606 = vmatprep.subr.bf16.mxu0 0
    %1607 = vmatpush1.bf16.msra.mxu0 0
    %1608 = vmatprep.subr.bf16.mxu0 0
    %1609 = vmatpush1.bf16.msra.mxu0 0
    %1610 = vmatprep.subr.bf16.mxu0 0
    %1611 = vmatpush1.bf16.msra.mxu0 0
    %1612 = vmatprep.subr.bf16.mxu0 0
    %1613 = vmatpush1.bf16.msra.mxu0 0
    %1614 = vmatprep.subr.bf16.mxu0 0
    %1615 = vmatpush1.bf16.msra.mxu0 0
    %1616 = vmatprep.subr.bf16.mxu0 0
    %1617 = vmatpush1.bf16.msra.mxu0 0
    %1618 = vmatprep.mubr.bf16.mxu0 0
    %1619 = vmatmul.mubr.bf16.gmra.mrb[0].mxu0 %v1581
    %v1620 = vpop.f32.mrb[0].mxu0
    %v1621 = vadd.f32 0.0, %v1620
    %v1622 = vpop.f32.mrb[0].mxu0
    %v1623 = vpop.f32.mrb[0].mxu0
    %v1624 = vpop.f32.mrb[0].mxu0
    %1625 = vdwg.mxu0
    %v1626 = vpack.c.bf16 %v1621, %v1621
    %s1627 = scalar_lea.vmem [#allocation10], 28
    %v1628 = vld [vmem:[%s1627] sm:$0xf]
    %v1630 = vsel %vm400, %v1626, 0
    %v1633 = vsel %vm462, %v1628, 0
    %1635 = vmatprep.subr.bf16.mxu0 0
    %1636 = vmatpush1.bf16.msra.mxu0 %v1633
    %1637 = vmatprep.subr.bf16.mxu0 0
    %1638 = vmatpush1.bf16.msra.mxu0 0
    %1639 = vmatprep.subr.bf16.mxu0 0
    %1640 = vmatpush1.bf16.msra.mxu0 0
    %1641 = vmatprep.subr.bf16.mxu0 0
    %1642 = vmatpush1.bf16.msra.mxu0 0
    %1643 = vmatprep.subr.bf16.mxu0 0
    %1644 = vmatpush1.bf16.msra.mxu0 0
    %1645 = vmatprep.subr.bf16.mxu0 0
    %1646 = vmatpush1.bf16.msra.mxu0 0
    %1647 = vmatprep.subr.bf16.mxu0 0
    %1648 = vmatpush1.bf16.msra.mxu0 0
    %1649 = vmatprep.subr.bf16.mxu0 0
    %1650 = vmatpush1.bf16.msra.mxu0 0
    %1651 = vmatprep.subr.bf16.mxu0 0
    %1652 = vmatpush1.bf16.msra.mxu0 0
    %1653 = vmatprep.subr.bf16.mxu0 0
    %1654 = vmatpush1.bf16.msra.mxu0 0
    %1655 = vmatprep.subr.bf16.mxu0 0
    %1656 = vmatpush1.bf16.msra.mxu0 0
    %1657 = vmatprep.subr.bf16.mxu0 0
    %1658 = vmatpush1.bf16.msra.mxu0 0
    %1659 = vmatprep.subr.bf16.mxu0 0
    %1660 = vmatpush1.bf16.msra.mxu0 0
    %1661 = vmatprep.subr.bf16.mxu0 0
    %1662 = vmatpush1.bf16.msra.mxu0 0
    %1663 = vmatprep.subr.bf16.mxu0 0
    %1664 = vmatpush1.bf16.msra.mxu0 0
    %1665 = vmatprep.subr.bf16.mxu0 0
    %1666 = vmatpush1.bf16.msra.mxu0 0
    %1667 = vmatprep.mubr.bf16.mxu0 0
    %1668 = vmatmul.mubr.bf16.gmra.mrb[0].mxu0 %v1630
    %v1669 = vpop.f32.mrb[0].mxu0
    %v1670 = vadd.f32 0.0, %v1669
    %v1671 = vpop.f32.mrb[0].mxu0
    %v1672 = vpop.f32.mrb[0].mxu0
    %v1673 = vpop.f32.mrb[0].mxu0
    %1674 = vdwg.mxu0
    %v1675 = vadd.f32 %v1515, %v1670
    %v1676 = vld [vmem:[%s8] sm:$0x1]
    %v1678 = vlaneseq
    %v1679 = vshrl.u32 %v1678, 7
    %v1680 = vsub.s32 0, %v1679
    %v1681 = vrot.slane %v1676, %v1680
    %v1683 = vadd.f32 %v1675, %v1681
    %v1685 = vcombine.high %v1683, %v1683
    %v1687 = vunpack.c.l.s4 1966171168
    %v1688 = vunpack.c.0.s8 %v1687
    %v1689 = vlaneseq
    %v1690 = vshrl.u32 %v1689, 7
    %v1691 = vsub.s32 %v1688, %v1690
    %v1692 = vrot.slane %v1683, %v1691
    %v1694 = vunpack.c.l.s4 1966171168
    %v1695 = vunpack.c.0.s8 %v1694
    %v1696 = vlaneseq
    %v1697 = vshrl.u32 %v1696, 7
    %v1698 = vsub.s32 %v1695, %v1697
    %v1699 = vrot.slane %v1685, %v1698
    %v1700 = vcombine.high %v1692, %v1692
    %v1701 = vcombine.high %v1699, %v1699
    %v1703 = vunpack.c.l.s4 1966171168
    %v1704 = vunpack.c.0.s8 %v1703
    %v1705 = vlaneseq
    %v1706 = vshrl.u32 %v1705, 7
    %v1707 = vsub.s32 %v1704, %v1706
    %v1708 = vrot.slane %v1692, %v1707
    %v1710 = vunpack.c.l.s4 1966171168
    %v1711 = vunpack.c.0.s8 %v1710
    %v1712 = vlaneseq
    %v1713 = vshrl.u32 %v1712, 7
    %v1714 = vsub.s32 %v1711, %v1713
    %v1715 = vrot.slane %v1699, %v1714
    %v1717 = vunpack.c.l.s4 1966171168
    %v1718 = vunpack.c.0.s8 %v1717
    %v1719 = vlaneseq
    %v1720 = vshrl.u32 %v1719, 7
    %v1721 = vsub.s32 %v1718, %v1720
    %v1722 = vrot.slane %v1700, %v1721
    %v1724 = vunpack.c.l.s4 1966171168
    %v1725 = vunpack.c.0.s8 %v1724
    %v1726 = vlaneseq
    %v1727 = vshrl.u32 %v1726, 7
    %v1728 = vsub.s32 %v1725, %v1727
    %v1729 = vrot.slane %v1701, %v1728
    %v1730 = vcombine.high %v1708, %v1708
    %v1731 = vcombine.high %v1715, %v1715
    %v1732 = vcombine.high %v1722, %v1722
    %v1733 = vcombine.high %v1729, %v1729
    %vm1742 = vcmask 516096
    %1743 = vst.msk [vmem:[#allocation11] sm:$0x1] %vm1742, %v1708
    %1744 = vst.msk [vmem:[#allocation11 + $0x2] sm:$0x1] %vm1742, %v1722
    %1745 = vst.msk [vmem:[#allocation11 + $0x4] sm:$0x1] %vm1742, %v1730
    %1746 = vst.msk [vmem:[#allocation11 + $0x6] sm:$0x1] %vm1742, %v1732
    %1747 = vst.msk [vmem:[#allocation11 + $0x8] sm:$0x1] %vm1742, %v1715
    %1748 = vst.msk [vmem:[#allocation11 + $0xa] sm:$0x1] %vm1742, %v1729
    %1749 = vst.msk [vmem:[#allocation11 + $0xc] sm:$0x1] %vm1742, %v1731
    %1750 = vst.msk [vmem:[#allocation11 + $0xe] sm:$0x1] %vm1742, %v1733
    %v1751 = vld [vmem:[%s2] sm:$0x1]
    %v1753 = vlaneseq
    %v1754 = vshrl.u32 %v1753, 7
    %v1755 = vsub.s32 0, %v1754
    %v1756 = vrot.slane %v1751, %v1755
    %v1758 = vrot.slane %v157, 1
    %v1759 = vsel %vm166, %v158, %v1758
    %v1760 = vrot.slane %v159, 7
    %v1761 = vsel %vm169, %v1760, %v1759
    %v1762 = vrot.slane %v160, 6
    %v1763 = vsel %vm172, %v1762, %v1761
    %v1764 = vrot.slane %v161, 5
    %v1765 = vsel %vm175, %v1764, %v1763
    %v1766 = vrot.slane %v162, 4
    %v1767 = vsel %vm178, %v1766, %v1765
    %v1768 = vrot.slane %v163, 3
    %v1769 = vsel %vm181, %v1768, %v1767
    %v1770 = vrot.slane %v164, 2
    %v1771 = vsel %vm184, %v1770, %v1769
    %v1772 = vpack.c.b16 %v1771, %v1771
    %v1774 = vsel %vm211, %v1772, 0
    %1776 = vmatprep.subr.bf16.mxu0 0
    %1777 = vmatpush1.bf16.msra.mxu0 %v203
    %1778 = vmatprep.subr.bf16.mxu0 0
    %1779 = vmatpush1.bf16.msra.mxu0 %v204
    %1780 = vmatprep.subr.bf16.mxu0 0
    %1781 = vmatpush1.bf16.msra.mxu0 %v205
    %1782 = vmatprep.subr.bf16.mxu0 0
    %1783 = vmatpush1.bf16.msra.mxu0 %v206
    %1784 = vmatprep.subr.bf16.mxu0 0
    %1785 = vmatpush1.bf16.msra.mxu0 0
    %1786 = vmatprep.subr.bf16.mxu0 0
    %1787 = vmatpush1.bf16.msra.mxu0 0
    %1788 = vmatprep.subr.bf16.mxu0 0
    %1789 = vmatpush1.bf16.msra.mxu0 0
    %1790 = vmatprep.subr.bf16.mxu0 0
    %1791 = vmatpush1.bf16.msra.mxu0 0
    %1792 = vmatprep.subr.bf16.mxu0 0
    %1793 = vmatpush1.bf16.msra.mxu0 0
    %1794 = vmatprep.subr.bf16.mxu0 0
    %1795 = vmatpush1.bf16.msra.mxu0 0
    %1796 = vmatprep.subr.bf16.mxu0 0
    %1797 = vmatpush1.bf16.msra.mxu0 0
    %1798 = vmatprep.subr.bf16.mxu0 0
    %1799 = vmatpush1.bf16.msra.mxu0 0
    %1800 = vmatprep.subr.bf16.mxu0 0
    %1801 = vmatpush1.bf16.msra.mxu0 0
    %1802 = vmatprep.subr.bf16.mxu0 0
    %1803 = vmatpush1.bf16.msra.mxu0 0
    %1804 = vmatprep.subr.bf16.mxu0 0
    %1805 = vmatpush1.bf16.msra.mxu0 0
    %1806 = vmatprep.subr.bf16.mxu0 0
    %1807 = vmatpush1.bf16.msra.mxu0 0
    %1808 = vmatprep.mubr.bf16.mxu0 0
    %1809 = vmatmul.mubr.bf16.gmra.mrb[0].mxu0 %v1774
    %v1810 = vpop.f32.mrb[0].mxu0
    %v1811 = vadd.f32 %v1756, %v1810
    %v1812 = vpop.f32.mrb[0].mxu0
    %v1813 = vpop.f32.mrb[0].mxu0
    %v1814 = vpop.f32.mrb[0].mxu0
    %1815 = vdwg.mxu0
    %v1816 = vpack.c.bf16 %v1811, %v1811
    %v1817 = vld [vmem:[%s4] sm:$0x1]
    %v1819 = vlaneseq
    %v1820 = vshrl.u32 %v1819, 7
    %v1821 = vsub.s32 0, %v1820
    %v1822 = vrot.slane %v1817, %v1821
    %1824 = vmatprep.subr.bf16.mxu0 0
    %1825 = vmatpush1.bf16.msra.mxu0 %v279
    %1826 = vmatprep.subr.bf16.mxu0 0
    %1827 = vmatpush1.bf16.msra.mxu0 %v280
    %1828 = vmatprep.subr.bf16.mxu0 0
    %1829 = vmatpush1.bf16.msra.mxu0 %v281
    %1830 = vmatprep.subr.bf16.mxu0 0
    %1831 = vmatpush1.bf16.msra.mxu0 %v282
    %1832 = vmatprep.subr.bf16.mxu0 0
    %1833 = vmatpush1.bf16.msra.mxu0 0
    %1834 = vmatprep.subr.bf16.mxu0 0
    %1835 = vmatpush1.bf16.msra.mxu0 0
    %1836 = vmatprep.subr.bf16.mxu0 0
    %1837 = vmatpush1.bf16.msra.mxu0 0
    %1838 = vmatprep.subr.bf16.mxu0 0
    %1839 = vmatpush1.bf16.msra.mxu0 0
    %1840 = vmatprep.subr.bf16.mxu0 0
    %1841 = vmatpush1.bf16.msra.mxu0 0
    %1842 = vmatprep.subr.bf16.mxu0 0
    %1843 = vmatpush1.bf16.msra.mxu0 0
    %1844 = vmatprep.subr.bf16.mxu0 0
    %1845 = vmatpush1.bf16.msra.mxu0 0
    %1846 = vmatprep.subr.bf16.mxu0 0
    %1847 = vmatpush1.bf16.msra.mxu0 0
    %1848 = vmatprep.subr.bf16.mxu0 0
    %1849 = vmatpush1.bf16.msra.mxu0 0
    %1850 = vmatprep.subr.bf16.mxu0 0
    %1851 = vmatpush1.bf16.msra.mxu0 0
    %1852 = vmatprep.subr.bf16.mxu0 0
    %1853 = vmatpush1.bf16.msra.mxu0 0
    %1854 = vmatprep.subr.bf16.mxu0 0
    %1855 = vmatpush1.bf16.msra.mxu0 0
    %1856 = vmatprep.mubr.bf16.mxu0 0
    %1857 = vmatmul.mubr.bf16.gmra.mrb[0].mxu0 %v1774
    %v1858 = vpop.f32.mrb[0].mxu0
    %v1859 = vadd.f32 %v1822, %v1858
    %v1860 = vpop.f32.mrb[0].mxu0
    %v1861 = vpop.f32.mrb[0].mxu0
    %v1862 = vpop.f32.mrb[0].mxu0
    %1863 = vdwg.mxu0
    %v1864 = vpack.c.bf16 %v1859, %v1859
    %v1865 = vld [vmem:[%s6] sm:$0x1]
    %v1867 = vlaneseq
    %v1868 = vshrl.u32 %v1867, 7
    %v1869 = vsub.s32 0, %v1868
    %v1870 = vrot.slane %v1865, %v1869
    %1872 = vmatprep.subr.bf16.mxu0 0
    %1873 = vmatpush1.bf16.msra.mxu0 %v351
    %1874 = vmatprep.subr.bf16.mxu0 0
    %1875 = vmatpush1.bf16.msra.mxu0 %v352
    %1876 = vmatprep.subr.bf16.mxu0 0
    %1877 = vmatpush1.bf16.msra.mxu0 %v353
    %1878 = vmatprep.subr.bf16.mxu0 0
    %1879 = vmatpush1.bf16.msra.mxu0 %v354
    %1880 = vmatprep.subr.bf16.mxu0 0
    %1881 = vmatpush1.bf16.msra.mxu0 0
    %1882 = vmatprep.subr.bf16.mxu0 0
    %1883 = vmatpush1.bf16.msra.mxu0 0
    %1884 = vmatprep.subr.bf16.mxu0 0
    %1885 = vmatpush1.bf16.msra.mxu0 0
    %1886 = vmatprep.subr.bf16.mxu0 0
    %1887 = vmatpush1.bf16.msra.mxu0 0
    %1888 = vmatprep.subr.bf16.mxu0 0
    %1889 = vmatpush1.bf16.msra.mxu0 0
    %1890 = vmatprep.subr.bf16.mxu0 0
    %1891 = vmatpush1.bf16.msra.mxu0 0
    %1892 = vmatprep.subr.bf16.mxu0 0
    %1893 = vmatpush1.bf16.msra.mxu0 0
    %1894 = vmatprep.subr.bf16.mxu0 0
    %1895 = vmatpush1.bf16.msra.mxu0 0
    %1896 = vmatprep.subr.bf16.mxu0 0
    %1897 = vmatpush1.bf16.msra.mxu0 0
    %1898 = vmatprep.subr.bf16.mxu0 0
    %1899 = vmatpush1.bf16.msra.mxu0 0
    %1900 = vmatprep.subr.bf16.mxu0 0
    %1901 = vmatpush1.bf16.msra.mxu0 0
    %1902 = vmatprep.subr.bf16.mxu0 0
    %1903 = vmatpush1.bf16.msra.mxu0 0
    %1904 = vmatprep.mubr.bf16.mxu0 0
    %1905 = vmatmul.mubr.bf16.gmra.mrb[0].mxu0 %v1774
    %v1906 = vpop.f32.mrb[0].mxu0
    %v1907 = vadd.f32 %v1870, %v1906
    %v1908 = vpop.f32.mrb[0].mxu0
    %v1909 = vpop.f32.mrb[0].mxu0
    %v1910 = vpop.f32.mrb[0].mxu0
    %1911 = vdwg.mxu0
    %v1912 = vpack.c.bf16 %v1907, %v1907
    %v1914 = vsel %vm400, %v1816, 0
    %v1917 = vsel %vm400, %v1864, 0
    %1919 = vmatprep.subr.bf16.mxu0 0
    %1920 = vmatpush1.bf16.xpose.msra.mxu0 %v1917
    %1921 = vmatprep.subr.bf16.mxu0 0
    %1922 = vmatpush1.bf16.xpose.msra.mxu0 0
    %1923 = vmatprep.subr.bf16.mxu0 0
    %1924 = vmatpush1.bf16.xpose.msra.mxu0 0
    %1925 = vmatprep.subr.bf16.mxu0 0
    %1926 = vmatpush1.bf16.xpose.msra.mxu0 0
    %1927 = vmatprep.subr.bf16.mxu0 0
    %1928 = vmatpush1.bf16.xpose.msra.mxu0 0
    %1929 = vmatprep.subr.bf16.mxu0 0
    %1930 = vmatpush1.bf16.xpose.msra.mxu0 0
    %1931 = vmatprep.subr.bf16.mxu0 0
    %1932 = vmatpush1.bf16.xpose.msra.mxu0 0
    %1933 = vmatprep.subr.bf16.mxu0 0
    %1934 = vmatpush1.bf16.xpose.msra.mxu0 0
    %1935 = vmatprep.subr.bf16.mxu0 0
    %1936 = vmatpush1.bf16.xpose.msra.mxu0 0
    %1937 = vmatprep.subr.bf16.mxu0 0
    %1938 = vmatpush1.bf16.xpose.msra.mxu0 0
    %1939 = vmatprep.subr.bf16.mxu0 0
    %1940 = vmatpush1.bf16.xpose.msra.mxu0 0
    %1941 = vmatprep.subr.bf16.mxu0 0
    %1942 = vmatpush1.bf16.xpose.msra.mxu0 0
    %1943 = vmatprep.subr.bf16.mxu0 0
    %1944 = vmatpush1.bf16.xpose.msra.mxu0 0
    %1945 = vmatprep.subr.bf16.mxu0 0
    %1946 = vmatpush1.bf16.xpose.msra.mxu0 0
    %1947 = vmatprep.subr.bf16.mxu0 0
    %1948 = vmatpush1.bf16.xpose.msra.mxu0 0
    %1949 = vmatprep.subr.bf16.mxu0 0
    %1950 = vmatpush1.bf16.xpose.msra.mxu0 0
    %1951 = vmatprep.mubr.bf16.mxu0 0
    %1952 = vmatmul.mubr.bf16.gmra.mrb[0].mxu0 %v1914
    %v1953 = vpop.f32.mrb[0].mxu0
    %v1954 = vadd.f32 0.0, %v1953
    %v1955 = vpop.f32.mrb[0].mxu0
    %v1956 = vpop.f32.mrb[0].mxu0
    %v1957 = vpop.f32.mrb[0].mxu0
    %1958 = vdwg.mxu0
    %v1959 = vsel %vm400, %v1954, -inf
    %1960 = vmax.xlane.f32.xlu0 %v1959
    %v1961 = vpop.xlane.xlu0 %1960
    %v1962 = vsub.f32 %v1954, %v1961
    %v1963 = vmul.f32 %v1962, 1.442695
    %v1964 = vpow.pop %v1963
    %v1965 = vsel %vm400, %v1964, 0.0
    %1966 = vadd.xlane.f32.xlu0 %v1965
    %v1967 = vpop.xlane.xlu0 %1966
    %v1968 = vrcp.pop %v1967
    %v1969 = vmul.f32 %v1964, %v1968
    %v1970 = vpack.c.bf16 %v1969, %v1969
    %v1972 = vsel %vm400, %v1970, 0
    %v1975 = vsel %vm462, %v1912, 0
    %1977 = vmatprep.subr.bf16.mxu0 0
    %1978 = vmatpush1.bf16.msra.mxu0 %v1975
    %1979 = vmatprep.subr.bf16.mxu0 0
    %1980 = vmatpush1.bf16.msra.mxu0 0
    %1981 = vmatprep.subr.bf16.mxu0 0
    %1982 = vmatpush1.bf16.msra.mxu0 0
    %1983 = vmatprep.subr.bf16.mxu0 0
    %1984 = vmatpush1.bf16.msra.mxu0 0
    %1985 = vmatprep.subr.bf16.mxu0 0
    %1986 = vmatpush1.bf16.msra.mxu0 0
    %1987 = vmatprep.subr.bf16.mxu0 0
    %1988 = vmatpush1.bf16.msra.mxu0 0
    %1989 = vmatprep.subr.bf16.mxu0 0
    %1990 = vmatpush1.bf16.msra.mxu0 0
    %1991 = vmatprep.subr.bf16.mxu0 0
    %1992 = vmatpush1.bf16.msra.mxu0 0
    %1993 = vmatprep.subr.bf16.mxu0 0
    %1994 = vmatpush1.bf16.msra.mxu0 0
    %1995 = vmatprep.subr.bf16.mxu0 0
    %1996 = vmatpush1.bf16.msra.mxu0 0
    %1997 = vmatprep.subr.bf16.mxu0 0
    %1998 = vmatpush1.bf16.msra.mxu0 0
    %1999 = vmatprep.subr.bf16.mxu0 0
    %2000 = vmatpush1.bf16.msra.mxu0 0
    %2001 = vmatprep.subr.bf16.mxu0 0
    %2002 = vmatpush1.bf16.msra.mxu0 0
    %2003 = vmatprep.subr.bf16.mxu0 0
    %2004 = vmatpush1.bf16.msra.mxu0 0
    %2005 = vmatprep.subr.bf16.mxu0 0
    %2006 = vmatpush1.bf16.msra.mxu0 0
    %2007 = vmatprep.subr.bf16.mxu0 0
    %2008 = vmatpush1.bf16.msra.mxu0 0
    %2009 = vmatprep.mubr.bf16.mxu0 0
    %2010 = vmatmul.mubr.bf16.gmra.mrb[0].mxu0 %v1972
    %v2011 = vpop.f32.mrb[0].mxu0
    %v2012 = vadd.f32 0.0, %v2011
    %v2013 = vpop.f32.mrb[0].mxu0
    %v2014 = vpop.f32.mrb[0].mxu0
    %v2015 = vpop.f32.mrb[0].mxu0
    %2016 = vdwg.mxu0
    %v2017 = vpack.c.bf16 %v2012, %v2012
    %v2018 = vld [vmem:[#allocation10] sm:$0xf]
    %2020 = vrot.lane.b32.xlu0 %v1816, 120
    %v2021 = vpop.permute.xlu0 %2020
    %2023 = vrot.lane.b32.xlu0 %v1864, 120
    %v2024 = vpop.permute.xlu0 %2023
    %v2026 = vsel %vm400, %v2021, 0
    %v2029 = vsel %vm400, %v2024, 0
    %2031 = vmatprep.subr.bf16.mxu0 0
    %2032 = vmatpush1.bf16.xpose.msra.mxu0 %v2029
    %2033 = vmatprep.subr.bf16.mxu0 0
    %2034 = vmatpush1.bf16.xpose.msra.mxu0 0
    %2035 = vmatprep.subr.bf16.mxu0 0
    %2036 = vmatpush1.bf16.xpose.msra.mxu0 0
    %2037 = vmatprep.subr.bf16.mxu0 0
    %2038 = vmatpush1.bf16.xpose.msra.mxu0 0
    %2039 = vmatprep.subr.bf16.mxu0 0
    %2040 = vmatpush1.bf16.xpose.msra.mxu0 0
    %2041 = vmatprep.subr.bf16.mxu0 0
    %2042 = vmatpush1.bf16.xpose.msra.mxu0 0
    %2043 = vmatprep.subr.bf16.mxu0 0
    %2044 = vmatpush1.bf16.xpose.msra.mxu0 0
    %2045 = vmatprep.subr.bf16.mxu0 0
    %2046 = vmatpush1.bf16.xpose.msra.mxu0 0
    %2047 = vmatprep.subr.bf16.mxu0 0
    %2048 = vmatpush1.bf16.xpose.msra.mxu0 0
    %2049 = vmatprep.subr.bf16.mxu0 0
    %2050 = vmatpush1.bf16.xpose.msra.mxu0 0
    %2051 = vmatprep.subr.bf16.mxu0 0
    %2052 = vmatpush1.bf16.xpose.msra.mxu0 0
    %2053 = vmatprep.subr.bf16.mxu0 0
    %2054 = vmatpush1.bf16.xpose.msra.mxu0 0
    %2055 = vmatprep.subr.bf16.mxu0 0
    %2056 = vmatpush1.bf16.xpose.msra.mxu0 0
    %2057 = vmatprep.subr.bf16.mxu0 0
    %2058 = vmatpush1.bf16.xpose.msra.mxu0 0
    %2059 = vmatprep.subr.bf16.mxu0 0
    %2060 = vmatpush1.bf16.xpose.msra.mxu0 0
    %2061 = vmatprep.subr.bf16.mxu0 0
    %2062 = vmatpush1.bf16.xpose.msra.mxu0 0
    %2063 = vmatprep.mubr.bf16.mxu0 0
    %2064 = vmatmul.mubr.bf16.gmra.mrb[0].mxu0 %v2026
    %v2065 = vpop.f32.mrb[0].mxu0
    %v2066 = vadd.f32 0.0, %v2065
    %v2067 = vpop.f32.mrb[0].mxu0
    %v2068 = vpop.f32.mrb[0].mxu0
    %v2069 = vpop.f32.mrb[0].mxu0
    %2070 = vdwg.mxu0
    %v2071 = vsel %vm400, %v2066, -inf
    %2072 = vmax.xlane.f32.xlu0 %v2071
    %v2073 = vpop.xlane.xlu0 %2072
    %v2074 = vsub.f32 %v2066, %v2073
    %v2075 = vmul.f32 %v2074, 1.442695
    %v2076 = vpow.pop %v2075
    %v2077 = vsel %vm400, %v2076, 0.0
    %2078 = vadd.xlane.f32.xlu0 %v2077
    %v2079 = vpop.xlane.xlu0 %2078
    %v2080 = vrcp.pop %v2079
    %v2081 = vmul.f32 %v2076, %v2080
    %v2082 = vpack.c.bf16 %v2081, %v2081
    %2084 = vrot.lane.b32.xlu0 %v1912, 120
    %v2085 = vpop.permute.xlu0 %2084
    %v2087 = vsel %vm400, %v2082, 0
    %v2090 = vsel %vm462, %v2085, 0
    %2092 = vmatprep.subr.bf16.mxu0 0
    %2093 = vmatpush1.bf16.msra.mxu0 %v2090
    %2094 = vmatprep.subr.bf16.mxu0 0
    %2095 = vmatpush1.bf16.msra.mxu0 0
    %2096 = vmatprep.subr.bf16.mxu0 0
    %2097 = vmatpush1.bf16.msra.mxu0 0
    %2098 = vmatprep.subr.bf16.mxu0 0
    %2099 = vmatpush1.bf16.msra.mxu0 0
    %2100 = vmatprep.subr.bf16.mxu0 0
    %2101 = vmatpush1.bf16.msra.mxu0 0
    %2102 = vmatprep.subr.bf16.mxu0 0
    %2103 = vmatpush1.bf16.msra.mxu0 0
    %2104 = vmatprep.subr.bf16.mxu0 0
    %2105 = vmatpush1.bf16.msra.mxu0 0
    %2106 = vmatprep.subr.bf16.mxu0 0
    %2107 = vmatpush1.bf16.msra.mxu0 0
    %2108 = vmatprep.subr.bf16.mxu0 0
    %2109 = vmatpush1.bf16.msra.mxu0 0
    %2110 = vmatprep.subr.bf16.mxu0 0
    %2111 = vmatpush1.bf16.msra.mxu0 0
    %2112 = vmatprep.subr.bf16.mxu0 0
    %2113 = vmatpush1.bf16.msra.mxu0 0
    %2114 = vmatprep.subr.bf16.mxu0 0
    %2115 = vmatpush1.bf16.msra.mxu0 0
    %2116 = vmatprep.subr.bf16.mxu0 0
    %2117 = vmatpush1.bf16.msra.mxu0 0
    %2118 = vmatprep.subr.bf16.mxu0 0
    %2119 = vmatpush1.bf16.msra.mxu0 0
    %2120 = vmatprep.subr.bf16.mxu0 0
    %2121 = vmatpush1.bf16.msra.mxu0 0
    %2122 = vmatprep.subr.bf16.mxu0 0
    %2123 = vmatpush1.bf16.msra.mxu0 0
    %2124 = vmatprep.mubr.bf16.mxu0 0
    %2125 = vmatmul.mubr.bf16.gmra.mrb[0].mxu0 %v2087
    %v2126 = vpop.f32.mrb[0].mxu0
    %v2127 = vadd.f32 0.0, %v2126
    %v2128 = vpop.f32.mrb[0].mxu0
    %v2129 = vpop.f32.mrb[0].mxu0
    %v2130 = vpop.f32.mrb[0].mxu0
    %2131 = vdwg.mxu0
    %v2132 = vpack.c.bf16 %v2127, %v2127
    %v2133 = vld [vmem:[%s622] sm:$0xf]
    %v2135 = vsel %vm400, %v2132, 0
    %v2138 = vsel %vm462, %v2133, 0
    %2140 = vmatprep.subr.bf16.mxu0 0
    %2141 = vmatpush1.bf16.msra.mxu0 %v2138
    %2142 = vmatprep.subr.bf16.mxu0 0
    %2143 = vmatpush1.bf16.msra.mxu0 0
    %2144 = vmatprep.subr.bf16.mxu0 0
    %2145 = vmatpush1.bf16.msra.mxu0 0
    %2146 = vmatprep.subr.bf16.mxu0 0
    %2147 = vmatpush1.bf16.msra.mxu0 0
    %2148 = vmatprep.subr.bf16.mxu0 0
    %2149 = vmatpush1.bf16.msra.mxu0 0
    %2150 = vmatprep.subr.bf16.mxu0 0
    %2151 = vmatpush1.bf16.msra.mxu0 0
    %2152 = vmatprep.subr.bf16.mxu0 0
    %2153 = vmatpush1.bf16.msra.mxu0 0
    %2154 = vmatprep.subr.bf16.mxu0 0
    %2155 = vmatpush1.bf16.msra.mxu0 0
    %2156 = vmatprep.subr.bf16.mxu0 0
    %2157 = vmatpush1.bf16.msra.mxu0 0
    %2158 = vmatprep.subr.bf16.mxu0 0
    %2159 = vmatpush1.bf16.msra.mxu0 0
    %2160 = vmatprep.subr.bf16.mxu0 0
    %2161 = vmatpush1.bf16.msra.mxu0 0
    %2162 = vmatprep.subr.bf16.mxu0 0
    %2163 = vmatpush1.bf16.msra.mxu0 0
    %2164 = vmatprep.subr.bf16.mxu0 0
    %2165 = vmatpush1.bf16.msra.mxu0 0
    %2166 = vmatprep.subr.bf16.mxu0 0
    %2167 = vmatpush1.bf16.msra.mxu0 0
    %2168 = vmatprep.subr.bf16.mxu0 0
    %2169 = vmatpush1.bf16.msra.mxu0 0
    %2170 = vmatprep.subr.bf16.mxu0 0
    %2171 = vmatpush1.bf16.msra.mxu0 0
    %2172 = vmatprep.mubr.bf16.mxu0 0
    %2173 = vmatmul.mubr.bf16.gmra.mrb[0].mxu0 %v2135
    %v2174 = vpop.f32.mrb[0].mxu0
    %v2175 = vadd.f32 0.0, %v2174
    %v2176 = vpop.f32.mrb[0].mxu0
    %v2177 = vpop.f32.mrb[0].mxu0
    %v2178 = vpop.f32.mrb[0].mxu0
    %2179 = vdwg.mxu0
    %v2181 = vsel %vm400, %v2017, 0
    %v2184 = vsel %vm462, %v2018, 0
    %2186 = vmatprep.subr.bf16.mxu0 0
    %2187 = vmatpush1.bf16.msra.mxu0 %v2184
    %2188 = vmatprep.subr.bf16.mxu0 0
    %2189 = vmatpush1.bf16.msra.mxu0 0
    %2190 = vmatprep.subr.bf16.mxu0 0
    %2191 = vmatpush1.bf16.msra.mxu0 0
    %2192 = vmatprep.subr.bf16.mxu0 0
    %2193 = vmatpush1.bf16.msra.mxu0 0
    %2194 = vmatprep.subr.bf16.mxu0 0
    %2195 = vmatpush1.bf16.msra.mxu0 0
    %2196 = vmatprep.subr.bf16.mxu0 0
    %2197 = vmatpush1.bf16.msra.mxu0 0
    %2198 = vmatprep.subr.bf16.mxu0 0
    %2199 = vmatpush1.bf16.msra.mxu0 0
    %2200 = vmatprep.subr.bf16.mxu0 0
    %2201 = vmatpush1.bf16.msra.mxu0 0
    %2202 = vmatprep.subr.bf16.mxu0 0
    %2203 = vmatpush1.bf16.msra.mxu0 0
    %2204 = vmatprep.subr.bf16.mxu0 0
    %2205 = vmatpush1.bf16.msra.mxu0 0
    %2206 = vmatprep.subr.bf16.mxu0 0
    %2207 = vmatpush1.bf16.msra.mxu0 0
    %2208 = vmatprep.subr.bf16.mxu0 0
    %2209 = vmatpush1.bf16.msra.mxu0 0
    %2210 = vmatprep.subr.bf16.mxu0 0
    %2211 = vmatpush1.bf16.msra.mxu0 0
    %2212 = vmatprep.subr.bf16.mxu0 0
    %2213 = vmatpush1.bf16.msra.mxu0 0
    %2214 = vmatprep.subr.bf16.mxu0 0
    %2215 = vmatpush1.bf16.msra.mxu0 0
    %2216 = vmatprep.subr.bf16.mxu0 0
    %2217 = vmatpush1.bf16.msra.mxu0 0
    %2218 = vmatprep.mubr.bf16.mxu0 0
    %2219 = vmatmul.mubr.bf16.gmra.mrb[0].mxu0 %v2181
    %v2220 = vpop.f32.mrb[0].mxu0
    %v2221 = vadd.f32 %v2175, %v2220
    %v2222 = vpop.f32.mrb[0].mxu0
    %v2223 = vpop.f32.mrb[0].mxu0
    %v2224 = vpop.f32.mrb[0].mxu0
    %2225 = vdwg.mxu0
    %2226 = vrot.lane.b32.xlu0 %v1816, 112
    %v2227 = vpop.permute.xlu0 %2226
    %2228 = vrot.lane.b32.xlu0 %v1864, 112
    %v2229 = vpop.permute.xlu0 %2228
    %v2231 = vsel %vm400, %v2227, 0
    %v2234 = vsel %vm400, %v2229, 0
    %2236 = vmatprep.subr.bf16.mxu0 0
    %2237 = vmatpush1.bf16.xpose.msra.mxu0 %v2234
    %2238 = vmatprep.subr.bf16.mxu0 0
    %2239 = vmatpush1.bf16.xpose.msra.mxu0 0
    %2240 = vmatprep.subr.bf16.mxu0 0
    %2241 = vmatpush1.bf16.xpose.msra.mxu0 0
    %2242 = vmatprep.subr.bf16.mxu0 0
    %2243 = vmatpush1.bf16.xpose.msra.mxu0 0
    %2244 = vmatprep.subr.bf16.mxu0 0
    %2245 = vmatpush1.bf16.xpose.msra.mxu0 0
    %2246 = vmatprep.subr.bf16.mxu0 0
    %2247 = vmatpush1.bf16.xpose.msra.mxu0 0
    %2248 = vmatprep.subr.bf16.mxu0 0
    %2249 = vmatpush1.bf16.xpose.msra.mxu0 0
    %2250 = vmatprep.subr.bf16.mxu0 0
    %2251 = vmatpush1.bf16.xpose.msra.mxu0 0
    %2252 = vmatprep.subr.bf16.mxu0 0
    %2253 = vmatpush1.bf16.xpose.msra.mxu0 0
    %2254 = vmatprep.subr.bf16.mxu0 0
    %2255 = vmatpush1.bf16.xpose.msra.mxu0 0
    %2256 = vmatprep.subr.bf16.mxu0 0
    %2257 = vmatpush1.bf16.xpose.msra.mxu0 0
    %2258 = vmatprep.subr.bf16.mxu0 0
    %2259 = vmatpush1.bf16.xpose.msra.mxu0 0
    %2260 = vmatprep.subr.bf16.mxu0 0
    %2261 = vmatpush1.bf16.xpose.msra.mxu0 0
    %2262 = vmatprep.subr.bf16.mxu0 0
    %2263 = vmatpush1.bf16.xpose.msra.mxu0 0
    %2264 = vmatprep.subr.bf16.mxu0 0
    %2265 = vmatpush1.bf16.xpose.msra.mxu0 0
    %2266 = vmatprep.subr.bf16.mxu0 0
    %2267 = vmatpush1.bf16.xpose.msra.mxu0 0
    %2268 = vmatprep.mubr.bf16.mxu0 0
    %2269 = vmatmul.mubr.bf16.gmra.mrb[0].mxu0 %v2231
    %v2270 = vpop.f32.mrb[0].mxu0
    %v2271 = vadd.f32 0.0, %v2270
    %v2272 = vpop.f32.mrb[0].mxu0
    %v2273 = vpop.f32.mrb[0].mxu0
    %v2274 = vpop.f32.mrb[0].mxu0
    %2275 = vdwg.mxu0
    %v2276 = vsel %vm400, %v2271, -inf
    %2277 = vmax.xlane.f32.xlu0 %v2276
    %v2278 = vpop.xlane.xlu0 %2277
    %v2279 = vsub.f32 %v2271, %v2278
    %v2280 = vmul.f32 %v2279, 1.442695
    %v2281 = vpow.pop %v2280
    %v2282 = vsel %vm400, %v2281, 0.0
    %2283 = vadd.xlane.f32.xlu0 %v2282
    %v2284 = vpop.xlane.xlu0 %2283
    %v2285 = vrcp.pop %v2284
    %v2286 = vmul.f32 %v2281, %v2285
    %v2287 = vpack.c.bf16 %v2286, %v2286
    %2288 = vrot.lane.b32.xlu0 %v1912, 112
    %v2289 = vpop.permute.xlu0 %2288
    %v2291 = vsel %vm400, %v2287, 0
    %v2294 = vsel %vm462, %v2289, 0
    %2296 = vmatprep.subr.bf16.mxu0 0
    %2297 = vmatpush1.bf16.msra.mxu0 %v2294
    %2298 = vmatprep.subr.bf16.mxu0 0
    %2299 = vmatpush1.bf16.msra.mxu0 0
    %2300 = vmatprep.subr.bf16.mxu0 0
    %2301 = vmatpush1.bf16.msra.mxu0 0
    %2302 = vmatprep.subr.bf16.mxu0 0
    %2303 = vmatpush1.bf16.msra.mxu0 0
    %2304 = vmatprep.subr.bf16.mxu0 0
    %2305 = vmatpush1.bf16.msra.mxu0 0
    %2306 = vmatprep.subr.bf16.mxu0 0
    %2307 = vmatpush1.bf16.msra.mxu0 0
    %2308 = vmatprep.subr.bf16.mxu0 0
    %2309 = vmatpush1.bf16.msra.mxu0 0
    %2310 = vmatprep.subr.bf16.mxu0 0
    %2311 = vmatpush1.bf16.msra.mxu0 0
    %2312 = vmatprep.subr.bf16.mxu0 0
    %2313 = vmatpush1.bf16.msra.mxu0 0
    %2314 = vmatprep.subr.bf16.mxu0 0
    %2315 = vmatpush1.bf16.msra.mxu0 0
    %2316 = vmatprep.subr.bf16.mxu0 0
    %2317 = vmatpush1.bf16.msra.mxu0 0
    %2318 = vmatprep.subr.bf16.mxu0 0
    %2319 = vmatpush1.bf16.msra.mxu0 0
    %2320 = vmatprep.subr.bf16.mxu0 0
    %2321 = vmatpush1.bf16.msra.mxu0 0
    %2322 = vmatprep.subr.bf16.mxu0 0
    %2323 = vmatpush1.bf16.msra.mxu0 0
    %2324 = vmatprep.subr.bf16.mxu0 0
    %2325 = vmatpush1.bf16.msra.mxu0 0
    %2326 = vmatprep.subr.bf16.mxu0 0
    %2327 = vmatpush1.bf16.msra.mxu0 0
    %2328 = vmatprep.mubr.bf16.mxu0 0
    %2329 = vmatmul.mubr.bf16.gmra.mrb[0].mxu0 %v2291
    %v2330 = vpop.f32.mrb[0].mxu0
    %v2331 = vadd.f32 0.0, %v2330
    %v2332 = vpop.f32.mrb[0].mxu0
    %v2333 = vpop.f32.mrb[0].mxu0
    %v2334 = vpop.f32.mrb[0].mxu0
    %2335 = vdwg.mxu0
    %v2336 = vpack.c.bf16 %v2331, %v2331
    %v2337 = vld [vmem:[%s827] sm:$0xf]
    %v2339 = vsel %vm400, %v2336, 0
    %v2342 = vsel %vm462, %v2337, 0
    %2344 = vmatprep.subr.bf16.mxu0 0
    %2345 = vmatpush1.bf16.msra.mxu0 %v2342
    %2346 = vmatprep.subr.bf16.mxu0 0
    %2347 = vmatpush1.bf16.msra.mxu0 0
    %2348 = vmatprep.subr.bf16.mxu0 0
    %2349 = vmatpush1.bf16.msra.mxu0 0
    %2350 = vmatprep.subr.bf16.mxu0 0
    %2351 = vmatpush1.bf16.msra.mxu0 0
    %2352 = vmatprep.subr.bf16.mxu0 0
    %2353 = vmatpush1.bf16.msra.mxu0 0
    %2354 = vmatprep.subr.bf16.mxu0 0
    %2355 = vmatpush1.bf16.msra.mxu0 0
    %2356 = vmatprep.subr.bf16.mxu0 0
    %2357 = vmatpush1.bf16.msra.mxu0 0
    %2358 = vmatprep.subr.bf16.mxu0 0
    %2359 = vmatpush1.bf16.msra.mxu0 0
    %2360 = vmatprep.subr.bf16.mxu0 0
    %2361 = vmatpush1.bf16.msra.mxu0 0
    %2362 = vmatprep.subr.bf16.mxu0 0
    %2363 = vmatpush1.bf16.msra.mxu0 0
    %2364 = vmatprep.subr.bf16.mxu0 0
    %2365 = vmatpush1.bf16.msra.mxu0 0
    %2366 = vmatprep.subr.bf16.mxu0 0
    %2367 = vmatpush1.bf16.msra.mxu0 0
    %2368 = vmatprep.subr.bf16.mxu0 0
    %2369 = vmatpush1.bf16.msra.mxu0 0
    %2370 = vmatprep.subr.bf16.mxu0 0
    %2371 = vmatpush1.bf16.msra.mxu0 0
    %2372 = vmatprep.subr.bf16.mxu0 0
    %2373 = vmatpush1.bf16.msra.mxu0 0
    %2374 = vmatprep.subr.bf16.mxu0 0
    %2375 = vmatpush1.bf16.msra.mxu0 0
    %2376 = vmatprep.mubr.bf16.mxu0 0
    %2377 = vmatmul.mubr.bf16.gmra.mrb[0].mxu0 %v2339
    %v2378 = vpop.f32.mrb[0].mxu0
    %v2379 = vadd.f32 0.0, %v2378
    %v2380 = vpop.f32.mrb[0].mxu0
    %v2381 = vpop.f32.mrb[0].mxu0
    %v2382 = vpop.f32.mrb[0].mxu0
    %2383 = vdwg.mxu0
    %v2384 = vadd.f32 %v2221, %v2379
    %2385 = vrot.lane.b32.xlu0 %v1816, 104
    %v2386 = vpop.permute.xlu0 %2385
    %2387 = vrot.lane.b32.xlu0 %v1864, 104
    %v2388 = vpop.permute.xlu0 %2387
    %v2390 = vsel %vm400, %v2386, 0
    %v2393 = vsel %vm400, %v2388, 0
    %2395 = vmatprep.subr.bf16.mxu0 0
    %2396 = vmatpush1.bf16.xpose.msra.mxu0 %v2393
    %2397 = vmatprep.subr.bf16.mxu0 0
    %2398 = vmatpush1.bf16.xpose.msra.mxu0 0
    %2399 = vmatprep.subr.bf16.mxu0 0
    %2400 = vmatpush1.bf16.xpose.msra.mxu0 0
    %2401 = vmatprep.subr.bf16.mxu0 0
    %2402 = vmatpush1.bf16.xpose.msra.mxu0 0
    %2403 = vmatprep.subr.bf16.mxu0 0
    %2404 = vmatpush1.bf16.xpose.msra.mxu0 0
    %2405 = vmatprep.subr.bf16.mxu0 0
    %2406 = vmatpush1.bf16.xpose.msra.mxu0 0
    %2407 = vmatprep.subr.bf16.mxu0 0
    %2408 = vmatpush1.bf16.xpose.msra.mxu0 0
    %2409 = vmatprep.subr.bf16.mxu0 0
    %2410 = vmatpush1.bf16.xpose.msra.mxu0 0
    %2411 = vmatprep.subr.bf16.mxu0 0
    %2412 = vmatpush1.bf16.xpose.msra.mxu0 0
    %2413 = vmatprep.subr.bf16.mxu0 0
    %2414 = vmatpush1.bf16.xpose.msra.mxu0 0
    %2415 = vmatprep.subr.bf16.mxu0 0
    %2416 = vmatpush1.bf16.xpose.msra.mxu0 0
    %2417 = vmatprep.subr.bf16.mxu0 0
    %2418 = vmatpush1.bf16.xpose.msra.mxu0 0
    %2419 = vmatprep.subr.bf16.mxu0 0
    %2420 = vmatpush1.bf16.xpose.msra.mxu0 0
    %2421 = vmatprep.subr.bf16.mxu0 0
    %2422 = vmatpush1.bf16.xpose.msra.mxu0 0
    %2423 = vmatprep.subr.bf16.mxu0 0
    %2424 = vmatpush1.bf16.xpose.msra.mxu0 0
    %2425 = vmatprep.subr.bf16.mxu0 0
    %2426 = vmatpush1.bf16.xpose.msra.mxu0 0
    %2427 = vmatprep.mubr.bf16.mxu0 0
    %2428 = vmatmul.mubr.bf16.gmra.mrb[0].mxu0 %v2390
    %v2429 = vpop.f32.mrb[0].mxu0
    %v2430 = vadd.f32 0.0, %v2429
    %v2431 = vpop.f32.mrb[0].mxu0
    %v2432 = vpop.f32.mrb[0].mxu0
    %v2433 = vpop.f32.mrb[0].mxu0
    %2434 = vdwg.mxu0
    %v2435 = vsel %vm400, %v2430, -inf
    %2436 = vmax.xlane.f32.xlu0 %v2435
    %v2437 = vpop.xlane.xlu0 %2436
    %v2438 = vsub.f32 %v2430, %v2437
    %v2439 = vmul.f32 %v2438, 1.442695
    %v2440 = vpow.pop %v2439
    %v2441 = vsel %vm400, %v2440, 0.0
    %2442 = vadd.xlane.f32.xlu0 %v2441
    %v2443 = vpop.xlane.xlu0 %2442
    %v2444 = vrcp.pop %v2443
    %v2445 = vmul.f32 %v2440, %v2444
    %v2446 = vpack.c.bf16 %v2445, %v2445
    %2447 = vrot.lane.b32.xlu0 %v1912, 104
    %v2448 = vpop.permute.xlu0 %2447
    %v2450 = vsel %vm400, %v2446, 0
    %v2453 = vsel %vm462, %v2448, 0
    %2455 = vmatprep.subr.bf16.mxu0 0
    %2456 = vmatpush1.bf16.msra.mxu0 %v2453
    %2457 = vmatprep.subr.bf16.mxu0 0
    %2458 = vmatpush1.bf16.msra.mxu0 0
    %2459 = vmatprep.subr.bf16.mxu0 0
    %2460 = vmatpush1.bf16.msra.mxu0 0
    %2461 = vmatprep.subr.bf16.mxu0 0
    %2462 = vmatpush1.bf16.msra.mxu0 0
    %2463 = vmatprep.subr.bf16.mxu0 0
    %2464 = vmatpush1.bf16.msra.mxu0 0
    %2465 = vmatprep.subr.bf16.mxu0 0
    %2466 = vmatpush1.bf16.msra.mxu0 0
    %2467 = vmatprep.subr.bf16.mxu0 0
    %2468 = vmatpush1.bf16.msra.mxu0 0
    %2469 = vmatprep.subr.bf16.mxu0 0
    %2470 = vmatpush1.bf16.msra.mxu0 0
    %2471 = vmatprep.subr.bf16.mxu0 0
    %2472 = vmatpush1.bf16.msra.mxu0 0
    %2473 = vmatprep.subr.bf16.mxu0 0
    %2474 = vmatpush1.bf16.msra.mxu0 0
    %2475 = vmatprep.subr.bf16.mxu0 0
    %2476 = vmatpush1.bf16.msra.mxu0 0
    %2477 = vmatprep.subr.bf16.mxu0 0
    %2478 = vmatpush1.bf16.msra.mxu0 0
    %2479 = vmatprep.subr.bf16.mxu0 0
    %2480 = vmatpush1.bf16.msra.mxu0 0
    %2481 = vmatprep.subr.bf16.mxu0 0
    %2482 = vmatpush1.bf16.msra.mxu0 0
    %2483 = vmatprep.subr.bf16.mxu0 0
    %2484 = vmatpush1.bf16.msra.mxu0 0
    %2485 = vmatprep.subr.bf16.mxu0 0
    %2486 = vmatpush1.bf16.msra.mxu0 0
    %2487 = vmatprep.mubr.bf16.mxu0 0
    %2488 = vmatmul.mubr.bf16.gmra.mrb[0].mxu0 %v2450
    %v2489 = vpop.f32.mrb[0].mxu0
    %v2490 = vadd.f32 0.0, %v2489
    %v2491 = vpop.f32.mrb[0].mxu0
    %v2492 = vpop.f32.mrb[0].mxu0
    %v2493 = vpop.f32.mrb[0].mxu0
    %2494 = vdwg.mxu0
    %v2495 = vpack.c.bf16 %v2490, %v2490
    %v2496 = vld [vmem:[%s987] sm:$0xf]
    %v2498 = vsel %vm400, %v2495, 0
    %v2501 = vsel %vm462, %v2496, 0
    %2503 = vmatprep.subr.bf16.mxu0 0
    %2504 = vmatpush1.bf16.msra.mxu0 %v2501
    %2505 = vmatprep.subr.bf16.mxu0 0
    %2506 = vmatpush1.bf16.msra.mxu0 0
    %2507 = vmatprep.subr.bf16.mxu0 0
    %2508 = vmatpush1.bf16.msra.mxu0 0
    %2509 = vmatprep.subr.bf16.mxu0 0
    %2510 = vmatpush1.bf16.msra.mxu0 0
    %2511 = vmatprep.subr.bf16.mxu0 0
    %2512 = vmatpush1.bf16.msra.mxu0 0
    %2513 = vmatprep.subr.bf16.mxu0 0
    %2514 = vmatpush1.bf16.msra.mxu0 0
    %2515 = vmatprep.subr.bf16.mxu0 0
    %2516 = vmatpush1.bf16.msra.mxu0 0
    %2517 = vmatprep.subr.bf16.mxu0 0
    %2518 = vmatpush1.bf16.msra.mxu0 0
    %2519 = vmatprep.subr.bf16.mxu0 0
    %2520 = vmatpush1.bf16.msra.mxu0 0
    %2521 = vmatprep.subr.bf16.mxu0 0
    %2522 = vmatpush1.bf16.msra.mxu0 0
    %2523 = vmatprep.subr.bf16.mxu0 0
    %2524 = vmatpush1.bf16.msra.mxu0 0
    %2525 = vmatprep.subr.bf16.mxu0 0
    %2526 = vmatpush1.bf16.msra.mxu0 0
    %2527 = vmatprep.subr.bf16.mxu0 0
    %2528 = vmatpush1.bf16.msra.mxu0 0
    %2529 = vmatprep.subr.bf16.mxu0 0
    %2530 = vmatpush1.bf16.msra.mxu0 0
    %2531 = vmatprep.subr.bf16.mxu0 0
    %2532 = vmatpush1.bf16.msra.mxu0 0
    %2533 = vmatprep.subr.bf16.mxu0 0
    %2534 = vmatpush1.bf16.msra.mxu0 0
    %2535 = vmatprep.mubr.bf16.mxu0 0
    %2536 = vmatmul.mubr.bf16.gmra.mrb[0].mxu0 %v2498
    %v2537 = vpop.f32.mrb[0].mxu0
    %v2538 = vadd.f32 0.0, %v2537
    %v2539 = vpop.f32.mrb[0].mxu0
    %v2540 = vpop.f32.mrb[0].mxu0
    %v2541 = vpop.f32.mrb[0].mxu0
    %2542 = vdwg.mxu0
    %v2543 = vadd.f32 %v2384, %v2538
    %2544 = vrot.lane.b32.xlu0 %v1816, 96
    %v2545 = vpop.permute.xlu0 %2544
    %2546 = vrot.lane.b32.xlu0 %v1864, 96
    %v2547 = vpop.permute.xlu0 %2546
    %v2549 = vsel %vm400, %v2545, 0
    %v2552 = vsel %vm400, %v2547, 0
    %2554 = vmatprep.subr.bf16.mxu0 0
    %2555 = vmatpush1.bf16.xpose.msra.mxu0 %v2552
    %2556 = vmatprep.subr.bf16.mxu0 0
    %2557 = vmatpush1.bf16.xpose.msra.mxu0 0
    %2558 = vmatprep.subr.bf16.mxu0 0
    %2559 = vmatpush1.bf16.xpose.msra.mxu0 0
    %2560 = vmatprep.subr.bf16.mxu0 0
    %2561 = vmatpush1.bf16.xpose.msra.mxu0 0
    %2562 = vmatprep.subr.bf16.mxu0 0
    %2563 = vmatpush1.bf16.xpose.msra.mxu0 0
    %2564 = vmatprep.subr.bf16.mxu0 0
    %2565 = vmatpush1.bf16.xpose.msra.mxu0 0
    %2566 = vmatprep.subr.bf16.mxu0 0
    %2567 = vmatpush1.bf16.xpose.msra.mxu0 0
    %2568 = vmatprep.subr.bf16.mxu0 0
    %2569 = vmatpush1.bf16.xpose.msra.mxu0 0
    %2570 = vmatprep.subr.bf16.mxu0 0
    %2571 = vmatpush1.bf16.xpose.msra.mxu0 0
    %2572 = vmatprep.subr.bf16.mxu0 0
    %2573 = vmatpush1.bf16.xpose.msra.mxu0 0
    %2574 = vmatprep.subr.bf16.mxu0 0
    %2575 = vmatpush1.bf16.xpose.msra.mxu0 0
    %2576 = vmatprep.subr.bf16.mxu0 0
    %2577 = vmatpush1.bf16.xpose.msra.mxu0 0
    %2578 = vmatprep.subr.bf16.mxu0 0
    %2579 = vmatpush1.bf16.xpose.msra.mxu0 0
    %2580 = vmatprep.subr.bf16.mxu0 0
    %2581 = vmatpush1.bf16.xpose.msra.mxu0 0
    %2582 = vmatprep.subr.bf16.mxu0 0
    %2583 = vmatpush1.bf16.xpose.msra.mxu0 0
    %2584 = vmatprep.subr.bf16.mxu0 0
    %2585 = vmatpush1.bf16.xpose.msra.mxu0 0
    %2586 = vmatprep.mubr.bf16.mxu0 0
    %2587 = vmatmul.mubr.bf16.gmra.mrb[0].mxu0 %v2549
    %v2588 = vpop.f32.mrb[0].mxu0
    %v2589 = vadd.f32 0.0, %v2588
    %v2590 = vpop.f32.mrb[0].mxu0
    %v2591 = vpop.f32.mrb[0].mxu0
    %v2592 = vpop.f32.mrb[0].mxu0
    %2593 = vdwg.mxu0
    %v2594 = vsel %vm400, %v2589, -inf
    %2595 = vmax.xlane.f32.xlu0 %v2594
    %v2596 = vpop.xlane.xlu0 %2595
    %v2597 = vsub.f32 %v2589, %v2596
    %v2598 = vmul.f32 %v2597, 1.442695
    %v2599 = vpow.pop %v2598
    %v2600 = vsel %vm400, %v2599, 0.0
    %2601 = vadd.xlane.f32.xlu0 %v2600
    %v2602 = vpop.xlane.xlu0 %2601
    %v2603 = vrcp.pop %v2602
    %v2604 = vmul.f32 %v2599, %v2603
    %v2605 = vpack.c.bf16 %v2604, %v2604
    %2606 = vrot.lane.b32.xlu0 %v1912, 96
    %v2607 = vpop.permute.xlu0 %2606
    %v2609 = vsel %vm400, %v2605, 0
    %v2612 = vsel %vm462, %v2607, 0
    %2614 = vmatprep.subr.bf16.mxu0 0
    %2615 = vmatpush1.bf16.msra.mxu0 %v2612
    %2616 = vmatprep.subr.bf16.mxu0 0
    %2617 = vmatpush1.bf16.msra.mxu0 0
    %2618 = vmatprep.subr.bf16.mxu0 0
    %2619 = vmatpush1.bf16.msra.mxu0 0
    %2620 = vmatprep.subr.bf16.mxu0 0
    %2621 = vmatpush1.bf16.msra.mxu0 0
    %2622 = vmatprep.subr.bf16.mxu0 0
    %2623 = vmatpush1.bf16.msra.mxu0 0
    %2624 = vmatprep.subr.bf16.mxu0 0
    %2625 = vmatpush1.bf16.msra.mxu0 0
    %2626 = vmatprep.subr.bf16.mxu0 0
    %2627 = vmatpush1.bf16.msra.mxu0 0
    %2628 = vmatprep.subr.bf16.mxu0 0
    %2629 = vmatpush1.bf16.msra.mxu0 0
    %2630 = vmatprep.subr.bf16.mxu0 0
    %2631 = vmatpush1.bf16.msra.mxu0 0
    %2632 = vmatprep.subr.bf16.mxu0 0
    %2633 = vmatpush1.bf16.msra.mxu0 0
    %2634 = vmatprep.subr.bf16.mxu0 0
    %2635 = vmatpush1.bf16.msra.mxu0 0
    %2636 = vmatprep.subr.bf16.mxu0 0
    %2637 = vmatpush1.bf16.msra.mxu0 0
    %2638 = vmatprep.subr.bf16.mxu0 0
    %2639 = vmatpush1.bf16.msra.mxu0 0
    %2640 = vmatprep.subr.bf16.mxu0 0
    %2641 = vmatpush1.bf16.msra.mxu0 0
    %2642 = vmatprep.subr.bf16.mxu0 0
    %2643 = vmatpush1.bf16.msra.mxu0 0
    %2644 = vmatprep.subr.bf16.mxu0 0
    %2645 = vmatpush1.bf16.msra.mxu0 0
    %2646 = vmatprep.mubr.bf16.mxu0 0
    %2647 = vmatmul.mubr.bf16.gmra.mrb[0].mxu0 %v2609
    %v2648 = vpop.f32.mrb[0].mxu0
    %v2649 = vadd.f32 0.0, %v2648
    %v2650 = vpop.f32.mrb[0].mxu0
    %v2651 = vpop.f32.mrb[0].mxu0
    %v2652 = vpop.f32.mrb[0].mxu0
    %2653 = vdwg.mxu0
    %v2654 = vpack.c.bf16 %v2649, %v2649
    %v2655 = vld [vmem:[%s1147] sm:$0xf]
    %v2657 = vsel %vm400, %v2654, 0
    %v2660 = vsel %vm462, %v2655, 0
    %2662 = vmatprep.subr.bf16.mxu0 0
    %2663 = vmatpush1.bf16.msra.mxu0 %v2660
    %2664 = vmatprep.subr.bf16.mxu0 0
    %2665 = vmatpush1.bf16.msra.mxu0 0
    %2666 = vmatprep.subr.bf16.mxu0 0
    %2667 = vmatpush1.bf16.msra.mxu0 0
    %2668 = vmatprep.subr.bf16.mxu0 0
    %2669 = vmatpush1.bf16.msra.mxu0 0
    %2670 = vmatprep.subr.bf16.mxu0 0
    %2671 = vmatpush1.bf16.msra.mxu0 0
    %2672 = vmatprep.subr.bf16.mxu0 0
    %2673 = vmatpush1.bf16.msra.mxu0 0
    %2674 = vmatprep.subr.bf16.mxu0 0
    %2675 = vmatpush1.bf16.msra.mxu0 0
    %2676 = vmatprep.subr.bf16.mxu0 0
    %2677 = vmatpush1.bf16.msra.mxu0 0
    %2678 = vmatprep.subr.bf16.mxu0 0
    %2679 = vmatpush1.bf16.msra.mxu0 0
    %2680 = vmatprep.subr.bf16.mxu0 0
    %2681 = vmatpush1.bf16.msra.mxu0 0
    %2682 = vmatprep.subr.bf16.mxu0 0
    %2683 = vmatpush1.bf16.msra.mxu0 0
    %2684 = vmatprep.subr.bf16.mxu0 0
    %2685 = vmatpush1.bf16.msra.mxu0 0
    %2686 = vmatprep.subr.bf16.mxu0 0
    %2687 = vmatpush1.bf16.msra.mxu0 0
    %2688 = vmatprep.subr.bf16.mxu0 0
    %2689 = vmatpush1.bf16.msra.mxu0 0
    %2690 = vmatprep.subr.bf16.mxu0 0
    %2691 = vmatpush1.bf16.msra.mxu0 0
    %2692 = vmatprep.subr.bf16.mxu0 0
    %2693 = vmatpush1.bf16.msra.mxu0 0
    %2694 = vmatprep.mubr.bf16.mxu0 0
    %2695 = vmatmul.mubr.bf16.gmra.mrb[0].mxu0 %v2657
    %v2696 = vpop.f32.mrb[0].mxu0
    %v2697 = vadd.f32 0.0, %v2696
    %v2698 = vpop.f32.mrb[0].mxu0
    %v2699 = vpop.f32.mrb[0].mxu0
    %v2700 = vpop.f32.mrb[0].mxu0
    %2701 = vdwg.mxu0
    %v2702 = vadd.f32 %v2543, %v2697
    %2703 = vrot.lane.b32.xlu0 %v1816, 88
    %v2704 = vpop.permute.xlu0 %2703
    %2705 = vrot.lane.b32.xlu0 %v1864, 88
    %v2706 = vpop.permute.xlu0 %2705
    %v2708 = vsel %vm400, %v2704, 0
    %v2711 = vsel %vm400, %v2706, 0
    %2713 = vmatprep.subr.bf16.mxu0 0
    %2714 = vmatpush1.bf16.xpose.msra.mxu0 %v2711
    %2715 = vmatprep.subr.bf16.mxu0 0
    %2716 = vmatpush1.bf16.xpose.msra.mxu0 0
    %2717 = vmatprep.subr.bf16.mxu0 0
    %2718 = vmatpush1.bf16.xpose.msra.mxu0 0
    %2719 = vmatprep.subr.bf16.mxu0 0
    %2720 = vmatpush1.bf16.xpose.msra.mxu0 0
    %2721 = vmatprep.subr.bf16.mxu0 0
    %2722 = vmatpush1.bf16.xpose.msra.mxu0 0
    %2723 = vmatprep.subr.bf16.mxu0 0
    %2724 = vmatpush1.bf16.xpose.msra.mxu0 0
    %2725 = vmatprep.subr.bf16.mxu0 0
    %2726 = vmatpush1.bf16.xpose.msra.mxu0 0
    %2727 = vmatprep.subr.bf16.mxu0 0
    %2728 = vmatpush1.bf16.xpose.msra.mxu0 0
    %2729 = vmatprep.subr.bf16.mxu0 0
    %2730 = vmatpush1.bf16.xpose.msra.mxu0 0
    %2731 = vmatprep.subr.bf16.mxu0 0
    %2732 = vmatpush1.bf16.xpose.msra.mxu0 0
    %2733 = vmatprep.subr.bf16.mxu0 0
    %2734 = vmatpush1.bf16.xpose.msra.mxu0 0
    %2735 = vmatprep.subr.bf16.mxu0 0
    %2736 = vmatpush1.bf16.xpose.msra.mxu0 0
    %2737 = vmatprep.subr.bf16.mxu0 0
    %2738 = vmatpush1.bf16.xpose.msra.mxu0 0
    %2739 = vmatprep.subr.bf16.mxu0 0
    %2740 = vmatpush1.bf16.xpose.msra.mxu0 0
    %2741 = vmatprep.subr.bf16.mxu0 0
    %2742 = vmatpush1.bf16.xpose.msra.mxu0 0
    %2743 = vmatprep.subr.bf16.mxu0 0
    %2744 = vmatpush1.bf16.xpose.msra.mxu0 0
    %2745 = vmatprep.mubr.bf16.mxu0 0
    %2746 = vmatmul.mubr.bf16.gmra.mrb[0].mxu0 %v2708
    %v2747 = vpop.f32.mrb[0].mxu0
    %v2748 = vadd.f32 0.0, %v2747
    %v2749 = vpop.f32.mrb[0].mxu0
    %v2750 = vpop.f32.mrb[0].mxu0
    %v2751 = vpop.f32.mrb[0].mxu0
    %2752 = vdwg.mxu0
    %v2753 = vsel %vm400, %v2748, -inf
    %2754 = vmax.xlane.f32.xlu0 %v2753
    %v2755 = vpop.xlane.xlu0 %2754
    %v2756 = vsub.f32 %v2748, %v2755
    %v2757 = vmul.f32 %v2756, 1.442695
    %v2758 = vpow.pop %v2757
    %v2759 = vsel %vm400, %v2758, 0.0
    %2760 = vadd.xlane.f32.xlu0 %v2759
    %v2761 = vpop.xlane.xlu0 %2760
    %v2762 = vrcp.pop %v2761
    %v2763 = vmul.f32 %v2758, %v2762
    %v2764 = vpack.c.bf16 %v2763, %v2763
    %2765 = vrot.lane.b32.xlu0 %v1912, 88
    %v2766 = vpop.permute.xlu0 %2765
    %v2768 = vsel %vm400, %v2764, 0
    %v2771 = vsel %vm462, %v2766, 0
    %2773 = vmatprep.subr.bf16.mxu0 0
    %2774 = vmatpush1.bf16.msra.mxu0 %v2771
    %2775 = vmatprep.subr.bf16.mxu0 0
    %2776 = vmatpush1.bf16.msra.mxu0 0
    %2777 = vmatprep.subr.bf16.mxu0 0
    %2778 = vmatpush1.bf16.msra.mxu0 0
    %2779 = vmatprep.subr.bf16.mxu0 0
    %2780 = vmatpush1.bf16.msra.mxu0 0
    %2781 = vmatprep.subr.bf16.mxu0 0
    %2782 = vmatpush1.bf16.msra.mxu0 0
    %2783 = vmatprep.subr.bf16.mxu0 0
    %2784 = vmatpush1.bf16.msra.mxu0 0
    %2785 = vmatprep.subr.bf16.mxu0 0
    %2786 = vmatpush1.bf16.msra.mxu0 0
    %2787 = vmatprep.subr.bf16.mxu0 0
    %2788 = vmatpush1.bf16.msra.mxu0 0
    %2789 = vmatprep.subr.bf16.mxu0 0
    %2790 = vmatpush1.bf16.msra.mxu0 0
    %2791 = vmatprep.subr.bf16.mxu0 0
    %2792 = vmatpush1.bf16.msra.mxu0 0
    %2793 = vmatprep.subr.bf16.mxu0 0
    %2794 = vmatpush1.bf16.msra.mxu0 0
    %2795 = vmatprep.subr.bf16.mxu0 0
    %2796 = vmatpush1.bf16.msra.mxu0 0
    %2797 = vmatprep.subr.bf16.mxu0 0
    %2798 = vmatpush1.bf16.msra.mxu0 0
    %2799 = vmatprep.subr.bf16.mxu0 0
    %2800 = vmatpush1.bf16.msra.mxu0 0
    %2801 = vmatprep.subr.bf16.mxu0 0
    %2802 = vmatpush1.bf16.msra.mxu0 0
    %2803 = vmatprep.subr.bf16.mxu0 0
    %2804 = vmatpush1.bf16.msra.mxu0 0
    %2805 = vmatprep.mubr.bf16.mxu0 0
    %2806 = vmatmul.mubr.bf16.gmra.mrb[0].mxu0 %v2768
    %v2807 = vpop.f32.mrb[0].mxu0
    %v2808 = vadd.f32 0.0, %v2807
    %v2809 = vpop.f32.mrb[0].mxu0
    %v2810 = vpop.f32.mrb[0].mxu0
    %v2811 = vpop.f32.mrb[0].mxu0
    %2812 = vdwg.mxu0
    %v2813 = vpack.c.bf16 %v2808, %v2808
    %v2814 = vld [vmem:[%s1307] sm:$0xf]
    %v2816 = vsel %vm400, %v2813, 0
    %v2819 = vsel %vm462, %v2814, 0
    %2821 = vmatprep.subr.bf16.mxu0 0
    %2822 = vmatpush1.bf16.msra.mxu0 %v2819
    %2823 = vmatprep.subr.bf16.mxu0 0
    %2824 = vmatpush1.bf16.msra.mxu0 0
    %2825 = vmatprep.subr.bf16.mxu0 0
    %2826 = vmatpush1.bf16.msra.mxu0 0
    %2827 = vmatprep.subr.bf16.mxu0 0
    %2828 = vmatpush1.bf16.msra.mxu0 0
    %2829 = vmatprep.subr.bf16.mxu0 0
    %2830 = vmatpush1.bf16.msra.mxu0 0
    %2831 = vmatprep.subr.bf16.mxu0 0
    %2832 = vmatpush1.bf16.msra.mxu0 0
    %2833 = vmatprep.subr.bf16.mxu0 0
    %2834 = vmatpush1.bf16.msra.mxu0 0
    %2835 = vmatprep.subr.bf16.mxu0 0
    %2836 = vmatpush1.bf16.msra.mxu0 0
    %2837 = vmatprep.subr.bf16.mxu0 0
    %2838 = vmatpush1.bf16.msra.mxu0 0
    %2839 = vmatprep.subr.bf16.mxu0 0
    %2840 = vmatpush1.bf16.msra.mxu0 0
    %2841 = vmatprep.subr.bf16.mxu0 0
    %2842 = vmatpush1.bf16.msra.mxu0 0
    %2843 = vmatprep.subr.bf16.mxu0 0
    %2844 = vmatpush1.bf16.msra.mxu0 0
    %2845 = vmatprep.subr.bf16.mxu0 0
    %2846 = vmatpush1.bf16.msra.mxu0 0
    %2847 = vmatprep.subr.bf16.mxu0 0
    %2848 = vmatpush1.bf16.msra.mxu0 0
    %2849 = vmatprep.subr.bf16.mxu0 0
    %2850 = vmatpush1.bf16.msra.mxu0 0
    %2851 = vmatprep.subr.bf16.mxu0 0
    %2852 = vmatpush1.bf16.msra.mxu0 0
    %2853 = vmatprep.mubr.bf16.mxu0 0
    %2854 = vmatmul.mubr.bf16.gmra.mrb[0].mxu0 %v2816
    %v2855 = vpop.f32.mrb[0].mxu0
    %v2856 = vadd.f32 0.0, %v2855
    %v2857 = vpop.f32.mrb[0].mxu0
    %v2858 = vpop.f32.mrb[0].mxu0
    %v2859 = vpop.f32.mrb[0].mxu0
    %2860 = vdwg.mxu0
    %v2861 = vadd.f32 %v2702, %v2856
    %2862 = vrot.lane.b32.xlu0 %v1816, 80
    %v2863 = vpop.permute.xlu0 %2862
    %2864 = vrot.lane.b32.xlu0 %v1864, 80
    %v2865 = vpop.permute.xlu0 %2864
    %v2867 = vsel %vm400, %v2863, 0
    %v2870 = vsel %vm400, %v2865, 0
    %2872 = vmatprep.subr.bf16.mxu0 0
    %2873 = vmatpush1.bf16.xpose.msra.mxu0 %v2870
    %2874 = vmatprep.subr.bf16.mxu0 0
    %2875 = vmatpush1.bf16.xpose.msra.mxu0 0
    %2876 = vmatprep.subr.bf16.mxu0 0
    %2877 = vmatpush1.bf16.xpose.msra.mxu0 0
    %2878 = vmatprep.subr.bf16.mxu0 0
    %2879 = vmatpush1.bf16.xpose.msra.mxu0 0
    %2880 = vmatprep.subr.bf16.mxu0 0
    %2881 = vmatpush1.bf16.xpose.msra.mxu0 0
    %2882 = vmatprep.subr.bf16.mxu0 0
    %2883 = vmatpush1.bf16.xpose.msra.mxu0 0
    %2884 = vmatprep.subr.bf16.mxu0 0
    %2885 = vmatpush1.bf16.xpose.msra.mxu0 0
    %2886 = vmatprep.subr.bf16.mxu0 0
    %2887 = vmatpush1.bf16.xpose.msra.mxu0 0
    %2888 = vmatprep.subr.bf16.mxu0 0
    %2889 = vmatpush1.bf16.xpose.msra.mxu0 0
    %2890 = vmatprep.subr.bf16.mxu0 0
    %2891 = vmatpush1.bf16.xpose.msra.mxu0 0
    %2892 = vmatprep.subr.bf16.mxu0 0
    %2893 = vmatpush1.bf16.xpose.msra.mxu0 0
    %2894 = vmatprep.subr.bf16.mxu0 0
    %2895 = vmatpush1.bf16.xpose.msra.mxu0 0
    %2896 = vmatprep.subr.bf16.mxu0 0
    %2897 = vmatpush1.bf16.xpose.msra.mxu0 0
    %2898 = vmatprep.subr.bf16.mxu0 0
    %2899 = vmatpush1.bf16.xpose.msra.mxu0 0
    %2900 = vmatprep.subr.bf16.mxu0 0
    %2901 = vmatpush1.bf16.xpose.msra.mxu0 0
    %2902 = vmatprep.subr.bf16.mxu0 0
    %2903 = vmatpush1.bf16.xpose.msra.mxu0 0
    %2904 = vmatprep.mubr.bf16.mxu0 0
    %2905 = vmatmul.mubr.bf16.gmra.mrb[0].mxu0 %v2867
    %v2906 = vpop.f32.mrb[0].mxu0
    %v2907 = vadd.f32 0.0, %v2906
    %v2908 = vpop.f32.mrb[0].mxu0
    %v2909 = vpop.f32.mrb[0].mxu0
    %v2910 = vpop.f32.mrb[0].mxu0
    %2911 = vdwg.mxu0
    %v2912 = vsel %vm400, %v2907, -inf
    %2913 = vmax.xlane.f32.xlu0 %v2912
    %v2914 = vpop.xlane.xlu0 %2913
    %v2915 = vsub.f32 %v2907, %v2914
    %v2916 = vmul.f32 %v2915, 1.442695
    %v2917 = vpow.pop %v2916
    %v2918 = vsel %vm400, %v2917, 0.0
    %2919 = vadd.xlane.f32.xlu0 %v2918
    %v2920 = vpop.xlane.xlu0 %2919
    %v2921 = vrcp.pop %v2920
    %v2922 = vmul.f32 %v2917, %v2921
    %v2923 = vpack.c.bf16 %v2922, %v2922
    %2924 = vrot.lane.b32.xlu0 %v1912, 80
    %v2925 = vpop.permute.xlu0 %2924
    %v2927 = vsel %vm400, %v2923, 0
    %v2930 = vsel %vm462, %v2925, 0
    %2932 = vmatprep.subr.bf16.mxu0 0
    %2933 = vmatpush1.bf16.msra.mxu0 %v2930
    %2934 = vmatprep.subr.bf16.mxu0 0
    %2935 = vmatpush1.bf16.msra.mxu0 0
    %2936 = vmatprep.subr.bf16.mxu0 0
    %2937 = vmatpush1.bf16.msra.mxu0 0
    %2938 = vmatprep.subr.bf16.mxu0 0
    %2939 = vmatpush1.bf16.msra.mxu0 0
    %2940 = vmatprep.subr.bf16.mxu0 0
    %2941 = vmatpush1.bf16.msra.mxu0 0
    %2942 = vmatprep.subr.bf16.mxu0 0
    %2943 = vmatpush1.bf16.msra.mxu0 0
    %2944 = vmatprep.subr.bf16.mxu0 0
    %2945 = vmatpush1.bf16.msra.mxu0 0
    %2946 = vmatprep.subr.bf16.mxu0 0
    %2947 = vmatpush1.bf16.msra.mxu0 0
    %2948 = vmatprep.subr.bf16.mxu0 0
    %2949 = vmatpush1.bf16.msra.mxu0 0
    %2950 = vmatprep.subr.bf16.mxu0 0
    %2951 = vmatpush1.bf16.msra.mxu0 0
    %2952 = vmatprep.subr.bf16.mxu0 0
    %2953 = vmatpush1.bf16.msra.mxu0 0
    %2954 = vmatprep.subr.bf16.mxu0 0
    %2955 = vmatpush1.bf16.msra.mxu0 0
    %2956 = vmatprep.subr.bf16.mxu0 0
    %2957 = vmatpush1.bf16.msra.mxu0 0
    %2958 = vmatprep.subr.bf16.mxu0 0
    %2959 = vmatpush1.bf16.msra.mxu0 0
    %2960 = vmatprep.subr.bf16.mxu0 0
    %2961 = vmatpush1.bf16.msra.mxu0 0
    %2962 = vmatprep.subr.bf16.mxu0 0
    %2963 = vmatpush1.bf16.msra.mxu0 0
    %2964 = vmatprep.mubr.bf16.mxu0 0
    %2965 = vmatmul.mubr.bf16.gmra.mrb[0].mxu0 %v2927
    %v2966 = vpop.f32.mrb[0].mxu0
    %v2967 = vadd.f32 0.0, %v2966
    %v2968 = vpop.f32.mrb[0].mxu0
    %v2969 = vpop.f32.mrb[0].mxu0
    %v2970 = vpop.f32.mrb[0].mxu0
    %2971 = vdwg.mxu0
    %v2972 = vpack.c.bf16 %v2967, %v2967
    %v2973 = vld [vmem:[%s1467] sm:$0xf]
    %v2975 = vsel %vm400, %v2972, 0
    %v2978 = vsel %vm462, %v2973, 0
    %2980 = vmatprep.subr.bf16.mxu0 0
    %2981 = vmatpush1.bf16.msra.mxu0 %v2978
    %2982 = vmatprep.subr.bf16.mxu0 0
    %2983 = vmatpush1.bf16.msra.mxu0 0
    %2984 = vmatprep.subr.bf16.mxu0 0
    %2985 = vmatpush1.bf16.msra.mxu0 0
    %2986 = vmatprep.subr.bf16.mxu0 0
    %2987 = vmatpush1.bf16.msra.mxu0 0
    %2988 = vmatprep.subr.bf16.mxu0 0
    %2989 = vmatpush1.bf16.msra.mxu0 0
    %2990 = vmatprep.subr.bf16.mxu0 0
    %2991 = vmatpush1.bf16.msra.mxu0 0
    %2992 = vmatprep.subr.bf16.mxu0 0
    %2993 = vmatpush1.bf16.msra.mxu0 0
    %2994 = vmatprep.subr.bf16.mxu0 0
    %2995 = vmatpush1.bf16.msra.mxu0 0
    %2996 = vmatprep.subr.bf16.mxu0 0
    %2997 = vmatpush1.bf16.msra.mxu0 0
    %2998 = vmatprep.subr.bf16.mxu0 0
    %2999 = vmatpush1.bf16.msra.mxu0 0
    %3000 = vmatprep.subr.bf16.mxu0 0
    %3001 = vmatpush1.bf16.msra.mxu0 0
    %3002 = vmatprep.subr.bf16.mxu0 0
    %3003 = vmatpush1.bf16.msra.mxu0 0
    %3004 = vmatprep.subr.bf16.mxu0 0
    %3005 = vmatpush1.bf16.msra.mxu0 0
    %3006 = vmatprep.subr.bf16.mxu0 0
    %3007 = vmatpush1.bf16.msra.mxu0 0
    %3008 = vmatprep.subr.bf16.mxu0 0
    %3009 = vmatpush1.bf16.msra.mxu0 0
    %3010 = vmatprep.subr.bf16.mxu0 0
    %3011 = vmatpush1.bf16.msra.mxu0 0
    %3012 = vmatprep.mubr.bf16.mxu0 0
    %3013 = vmatmul.mubr.bf16.gmra.mrb[0].mxu0 %v2975
    %v3014 = vpop.f32.mrb[0].mxu0
    %v3015 = vadd.f32 0.0, %v3014
    %v3016 = vpop.f32.mrb[0].mxu0
    %v3017 = vpop.f32.mrb[0].mxu0
    %v3018 = vpop.f32.mrb[0].mxu0
    %3019 = vdwg.mxu0
    %v3020 = vadd.f32 %v2861, %v3015
    %3021 = vrot.lane.b32.xlu0 %v1816, 72
    %v3022 = vpop.permute.xlu0 %3021
    %3023 = vrot.lane.b32.xlu0 %v1864, 72
    %v3024 = vpop.permute.xlu0 %3023
    %v3026 = vsel %vm400, %v3022, 0
    %v3029 = vsel %vm400, %v3024, 0
    %3031 = vmatprep.subr.bf16.mxu0 0
    %3032 = vmatpush1.bf16.xpose.msra.mxu0 %v3029
    %3033 = vmatprep.subr.bf16.mxu0 0
    %3034 = vmatpush1.bf16.xpose.msra.mxu0 0
    %3035 = vmatprep.subr.bf16.mxu0 0
    %3036 = vmatpush1.bf16.xpose.msra.mxu0 0
    %3037 = vmatprep.subr.bf16.mxu0 0
    %3038 = vmatpush1.bf16.xpose.msra.mxu0 0
    %3039 = vmatprep.subr.bf16.mxu0 0
    %3040 = vmatpush1.bf16.xpose.msra.mxu0 0
    %3041 = vmatprep.subr.bf16.mxu0 0
    %3042 = vmatpush1.bf16.xpose.msra.mxu0 0
    %3043 = vmatprep.subr.bf16.mxu0 0
    %3044 = vmatpush1.bf16.xpose.msra.mxu0 0
    %3045 = vmatprep.subr.bf16.mxu0 0
    %3046 = vmatpush1.bf16.xpose.msra.mxu0 0
    %3047 = vmatprep.subr.bf16.mxu0 0
    %3048 = vmatpush1.bf16.xpose.msra.mxu0 0
    %3049 = vmatprep.subr.bf16.mxu0 0
    %3050 = vmatpush1.bf16.xpose.msra.mxu0 0
    %3051 = vmatprep.subr.bf16.mxu0 0
    %3052 = vmatpush1.bf16.xpose.msra.mxu0 0
    %3053 = vmatprep.subr.bf16.mxu0 0
    %3054 = vmatpush1.bf16.xpose.msra.mxu0 0
    %3055 = vmatprep.subr.bf16.mxu0 0
    %3056 = vmatpush1.bf16.xpose.msra.mxu0 0
    %3057 = vmatprep.subr.bf16.mxu0 0
    %3058 = vmatpush1.bf16.xpose.msra.mxu0 0
    %3059 = vmatprep.subr.bf16.mxu0 0
    %3060 = vmatpush1.bf16.xpose.msra.mxu0 0
    %3061 = vmatprep.subr.bf16.mxu0 0
    %3062 = vmatpush1.bf16.xpose.msra.mxu0 0
    %3063 = vmatprep.mubr.bf16.mxu0 0
    %3064 = vmatmul.mubr.bf16.gmra.mrb[0].mxu0 %v3026
    %v3065 = vpop.f32.mrb[0].mxu0
    %v3066 = vadd.f32 0.0, %v3065
    %v3067 = vpop.f32.mrb[0].mxu0
    %v3068 = vpop.f32.mrb[0].mxu0
    %v3069 = vpop.f32.mrb[0].mxu0
    %3070 = vdwg.mxu0
    %v3071 = vsel %vm400, %v3066, -inf
    %3072 = vmax.xlane.f32.xlu0 %v3071
    %v3073 = vpop.xlane.xlu0 %3072
    %v3074 = vsub.f32 %v3066, %v3073
    %v3075 = vmul.f32 %v3074, 1.442695
    %v3076 = vpow.pop %v3075
    %v3077 = vsel %vm400, %v3076, 0.0
    %3078 = vadd.xlane.f32.xlu0 %v3077
    %v3079 = vpop.xlane.xlu0 %3078
    %v3080 = vrcp.pop %v3079
    %v3081 = vmul.f32 %v3076, %v3080
    %v3082 = vpack.c.bf16 %v3081, %v3081
    %3083 = vrot.lane.b32.xlu0 %v1912, 72
    %v3084 = vpop.permute.xlu0 %3083
    %v3086 = vsel %vm400, %v3082, 0
    %v3089 = vsel %vm462, %v3084, 0
    %3091 = vmatprep.subr.bf16.mxu0 0
    %3092 = vmatpush1.bf16.msra.mxu0 %v3089
    %3093 = vmatprep.subr.bf16.mxu0 0
    %3094 = vmatpush1.bf16.msra.mxu0 0
    %3095 = vmatprep.subr.bf16.mxu0 0
    %3096 = vmatpush1.bf16.msra.mxu0 0
    %3097 = vmatprep.subr.bf16.mxu0 0
    %3098 = vmatpush1.bf16.msra.mxu0 0
    %3099 = vmatprep.subr.bf16.mxu0 0
    %3100 = vmatpush1.bf16.msra.mxu0 0
    %3101 = vmatprep.subr.bf16.mxu0 0
    %3102 = vmatpush1.bf16.msra.mxu0 0
    %3103 = vmatprep.subr.bf16.mxu0 0
    %3104 = vmatpush1.bf16.msra.mxu0 0
    %3105 = vmatprep.subr.bf16.mxu0 0
    %3106 = vmatpush1.bf16.msra.mxu0 0
    %3107 = vmatprep.subr.bf16.mxu0 0
    %3108 = vmatpush1.bf16.msra.mxu0 0
    %3109 = vmatprep.subr.bf16.mxu0 0
    %3110 = vmatpush1.bf16.msra.mxu0 0
    %3111 = vmatprep.subr.bf16.mxu0 0
    %3112 = vmatpush1.bf16.msra.mxu0 0
    %3113 = vmatprep.subr.bf16.mxu0 0
    %3114 = vmatpush1.bf16.msra.mxu0 0
    %3115 = vmatprep.subr.bf16.mxu0 0
    %3116 = vmatpush1.bf16.msra.mxu0 0
    %3117 = vmatprep.subr.bf16.mxu0 0
    %3118 = vmatpush1.bf16.msra.mxu0 0
    %3119 = vmatprep.subr.bf16.mxu0 0
    %3120 = vmatpush1.bf16.msra.mxu0 0
    %3121 = vmatprep.subr.bf16.mxu0 0
    %3122 = vmatpush1.bf16.msra.mxu0 0
    %3123 = vmatprep.mubr.bf16.mxu0 0
    %3124 = vmatmul.mubr.bf16.gmra.mrb[0].mxu0 %v3086
    %v3125 = vpop.f32.mrb[0].mxu0
    %v3126 = vadd.f32 0.0, %v3125
    %v3127 = vpop.f32.mrb[0].mxu0
    %v3128 = vpop.f32.mrb[0].mxu0
    %v3129 = vpop.f32.mrb[0].mxu0
    %3130 = vdwg.mxu0
    %v3131 = vpack.c.bf16 %v3126, %v3126
    %v3132 = vld [vmem:[%s1627] sm:$0xf]
    %v3134 = vsel %vm400, %v3131, 0
    %v3137 = vsel %vm462, %v3132, 0
    %3139 = vmatprep.subr.bf16.mxu0 0
    %3140 = vmatpush1.bf16.msra.mxu0 %v3137
    %3141 = vmatprep.subr.bf16.mxu0 0
    %3142 = vmatpush1.bf16.msra.mxu0 0
    %3143 = vmatprep.subr.bf16.mxu0 0
    %3144 = vmatpush1.bf16.msra.mxu0 0
    %3145 = vmatprep.subr.bf16.mxu0 0
    %3146 = vmatpush1.bf16.msra.mxu0 0
    %3147 = vmatprep.subr.bf16.mxu0 0
    %3148 = vmatpush1.bf16.msra.mxu0 0
    %3149 = vmatprep.subr.bf16.mxu0 0
    %3150 = vmatpush1.bf16.msra.mxu0 0
    %3151 = vmatprep.subr.bf16.mxu0 0
    %3152 = vmatpush1.bf16.msra.mxu0 0
    %3153 = vmatprep.subr.bf16.mxu0 0
    %3154 = vmatpush1.bf16.msra.mxu0 0
    %3155 = vmatprep.subr.bf16.mxu0 0
    %3156 = vmatpush1.bf16.msra.mxu0 0
    %3157 = vmatprep.subr.bf16.mxu0 0
    %3158 = vmatpush1.bf16.msra.mxu0 0
    %3159 = vmatprep.subr.bf16.mxu0 0
    %3160 = vmatpush1.bf16.msra.mxu0 0
    %3161 = vmatprep.subr.bf16.mxu0 0
    %3162 = vmatpush1.bf16.msra.mxu0 0
    %3163 = vmatprep.subr.bf16.mxu0 0
    %3164 = vmatpush1.bf16.msra.mxu0 0
    %3165 = vmatprep.subr.bf16.mxu0 0
    %3166 = vmatpush1.bf16.msra.mxu0 0
    %3167 = vmatprep.subr.bf16.mxu0 0
    %3168 = vmatpush1.bf16.msra.mxu0 0
    %3169 = vmatprep.subr.bf16.mxu0 0
    %3170 = vmatpush1.bf16.msra.mxu0 0
    %3171 = vmatprep.mubr.bf16.mxu0 0
    %3172 = vmatmul.mubr.bf16.gmra.mrb[0].mxu0 %v3134
    %v3173 = vpop.f32.mrb[0].mxu0
    %v3174 = vadd.f32 0.0, %v3173
    %v3175 = vpop.f32.mrb[0].mxu0
    %v3176 = vpop.f32.mrb[0].mxu0
    %v3177 = vpop.f32.mrb[0].mxu0
    %3178 = vdwg.mxu0
    %v3179 = vadd.f32 %v3020, %v3174
    %v3180 = vld [vmem:[%s8] sm:$0x1]
    %v3182 = vlaneseq
    %v3183 = vshrl.u32 %v3182, 7
    %v3184 = vsub.s32 0, %v3183
    %v3185 = vrot.slane %v3180, %v3184
    %v3187 = vadd.f32 %v3179, %v3185
    %v3189 = vcombine.high %v3187, %v3187
    %v3191 = vunpack.c.l.s4 1966171168
    %v3192 = vunpack.c.0.s8 %v3191
    %v3193 = vlaneseq
    %v3194 = vshrl.u32 %v3193, 7
    %v3195 = vsub.s32 %v3192, %v3194
    %v3196 = vrot.slane %v3187, %v3195
    %v3198 = vunpack.c.l.s4 1966171168
    %v3199 = vunpack.c.0.s8 %v3198
    %v3200 = vlaneseq
    %v3201 = vshrl.u32 %v3200, 7
    %v3202 = vsub.s32 %v3199, %v3201
    %v3203 = vrot.slane %v3189, %v3202
    %v3204 = vcombine.high %v3196, %v3196
    %v3205 = vcombine.high %v3203, %v3203
    %v3207 = vunpack.c.l.s4 1966171168
    %v3208 = vunpack.c.0.s8 %v3207
    %v3209 = vlaneseq
    %v3210 = vshrl.u32 %v3209, 7
    %v3211 = vsub.s32 %v3208, %v3210
    %v3212 = vrot.slane %v3196, %v3211
    %v3214 = vunpack.c.l.s4 1966171168
    %v3215 = vunpack.c.0.s8 %v3214
    %v3216 = vlaneseq
    %v3217 = vshrl.u32 %v3216, 7
    %v3218 = vsub.s32 %v3215, %v3217
    %v3219 = vrot.slane %v3203, %v3218
    %v3221 = vunpack.c.l.s4 1966171168
    %v3222 = vunpack.c.0.s8 %v3221
    %v3223 = vlaneseq
    %v3224 = vshrl.u32 %v3223, 7
    %v3225 = vsub.s32 %v3222, %v3224
    %v3226 = vrot.slane %v3204, %v3225
    %v3228 = vunpack.c.l.s4 1966171168
    %v3229 = vunpack.c.0.s8 %v3228
    %v3230 = vlaneseq
    %v3231 = vshrl.u32 %v3230, 7
    %v3232 = vsub.s32 %v3229, %v3231
    %v3233 = vrot.slane %v3205, %v3232
    %v3234 = vcombine.high %v3212, %v3212
    %v3235 = vcombine.high %v3219, %v3219
    %v3236 = vcombine.high %v3226, %v3226
    %v3237 = vcombine.high %v3233, %v3233
    %3246 = vst.msk [vmem:[#allocation11 + $0x1] sm:$0x1] %vm1742, %v3212
    %3247 = vst.msk [vmem:[#allocation11 + $0x3] sm:$0x1] %vm1742, %v3226
    %3248 = vst.msk [vmem:[#allocation11 + $0x5] sm:$0x1] %vm1742, %v3234
    %3249 = vst.msk [vmem:[#allocation11 + $0x7] sm:$0x1] %vm1742, %v3236
    %3250 = vst.msk [vmem:[#allocation11 + $0x9] sm:$0x1] %vm1742, %v3219
    %3251 = vst.msk [vmem:[#allocation11 + $0xb] sm:$0x1] %vm1742, %v3233
    %3252 = vst.msk [vmem:[#allocation11 + $0xd] sm:$0x1] %vm1742, %v3235
    %3253 = vst.msk [vmem:[#allocation11 + $0xf] sm:$0x1] %vm1742, %v3237
    // Predicated region
    $region58: #{tpu_custom_call.1} parent=1 // pred_check
      _
    $region59: #{tpu_custom_call.1} parent=1 // pred_check_branch
      %3255 = sbr.rel (0) target = $region61
    $region60: #{tpu_custom_call.1} parent=1 // pred_region
      %s3257 = ssub.s32 256, 256
      %3258 = vsyncadd [#allocation4], %s3257
      %s3259 = sshll.u32 [#allocation11], 4
      %s3260 = int_to_ptr.vmem [resolvable:$true] %s3259
      %3265 = dma.vmem_to_hbm [thread:$0]  %s3260, 256, %s9, [#allocation4], 32, 32, 2
    $region61: #{tpu_custom_call.1} parent=1 // pred_fallthru
      _
    // Predicated region
    $region62: #{tpu_custom_call.1} parent=1 // pred_check
      _
    $region63: #{tpu_custom_call.1} parent=1 // pred_check_branch
      %3267 = sbr.rel (0) target = $region65
    $region64: #{tpu_custom_call.1} parent=1 // pred_region
      %3268 = dma.done [#allocation4], 256
    $region65: #{tpu_custom_call.1} parent=1 // pred_fallthru
      _
    %3269 = vsyncpa [#allocation3], 1
    %3270 = vsyncpa [#allocation6], 1
    %3271 = vsyncpa [#allocation9], 1
    %3272 = vsyncpa [#allocation4], 1

</llo_original>
